<compile_context>
chip_gen: v7x
topology: tpu7x:2x2x1
jax: 0.10.0
libtpu: 0.0.40
codegen_flags: <defaults>
</compile_context>

<pallas_src>
import jax
import jax.numpy as jnp
from jax import lax
from jax.experimental import pallas as pl
from jax.experimental.pallas import tpu as pltpu


def xpath_encoder_kernel(embeds_ref,   # (T*Bp, Ep)     f32
                         w_ih_ref,     # (Ep, 4*Hp)     f32
                         w_hh_ref,     # (Hp, 4*Hp)     f32
                         b_ref,        # (1, 4*Hp)      f32  (bias_ih + bias_hh)
                         w_u_ref,      # (Hp, Hp)       f32
                         b_u_ref,      # (1, Hp)        f32
                         q_ref,        # (Hp, 1)        f32  attention query
                         bsel_ref,     # (T*Bp, 1)      f32  1.0 for real batch rows
                         smat_ref,     # (T, T*Bp)      f32  0/1 timestep selector
                         out_ref,      # (T, Hp)        f32
                         xg_scr,       # VMEM (T*Bp, 4*Hp) f32
                         h_all_scr):   # VMEM (T*Bp, Hp)   f32
    TB = xg_scr.shape[0]
    Hp = h_all_scr.shape[1]
    T = out_ref.shape[0]
    Bp = TB // T

    # ---- Stage 1: input projection for all timesteps (one MXU matmul) ----
    xg_scr[...] = (
        jnp.dot(embeds_ref[...], w_ih_ref[...],
                preferred_element_type=jnp.float32)
        + b_ref[...])

    # ---- Stage 2: LSTM recurrence (only h @ W_hh stays on the serial path) ----
    def step(t, carry):
        h_prev, c_prev = carry
        r0 = pl.multiple_of(t * Bp, 8)
        # w_hh is loaded at the use site on purpose: a hoisted (128, 512) f32
        # value would occupy the whole 64-vreg register file; VMEM re-loads
        # right next to the matmul are cheap and spill-free.
        gates = xg_scr[pl.ds(r0, Bp), :] + jnp.dot(
            h_prev, w_hh_ref[...], preferred_element_type=jnp.float32)
        # PyTorch gate order i, f, g, o; each slab is a full 128-lane tile.
        i_g = jax.nn.sigmoid(gates[:, 0 * Hp:1 * Hp])
        f_g = jax.nn.sigmoid(gates[:, 1 * Hp:2 * Hp])
        g_g = jnp.tanh(gates[:, 2 * Hp:3 * Hp])
        o_g = jax.nn.sigmoid(gates[:, 3 * Hp:4 * Hp])
        c_new = f_g * c_prev + i_g * g_g
        h_new = o_g * jnp.tanh(c_new)
        h_all_scr[pl.ds(r0, Bp), :] = h_new       # aligned (Bp, 128) store
        return h_new, c_new

    zeros = jnp.zeros((Bp, Hp), jnp.float32)      # PyTorch default zero state
    lax.fori_loop(0, T, step, (zeros, zeros), unroll=True)

    # ---- Stage 3: compute_u + attention + weighted sum (batched, lane-dense) ----
    h_all = h_all_scr[...]                                              # (TB, Hp)
    u = jnp.tanh(
        jnp.dot(h_all, w_u_ref[...], preferred_element_type=jnp.float32)
        + b_u_ref[...])                                                 # (TB, Hp)
    s = jnp.dot(u, q_ref[...], preferred_element_type=jnp.float32)     # (TB, 1)
    s = s * bsel_ref[...]                     # zero out padded batch rows
    smat = smat_ref[...]                      # (T, TB) picks rows of timestep t
    nrm2 = jnp.dot(smat, s * s, preferred_element_type=jnp.float32)    # (T, 1)
    wsum = jnp.dot(smat, s * h_all, preferred_element_type=jnp.float32)  # (T, Hp)
    # F.normalize(dim=-1): x / max(||x||, 1e-12) == x * rsqrt(max(||x||^2, 1e-24))
    out_ref[...] = wsum * lax.rsqrt(jnp.maximum(nrm2, 1e-24))


def _round_up(x, m):
    return ((x + m - 1) // m) * m


def xpath_encoder_forward(seq, params):
    """seq: (T, B) int32 token ids (time-major). Returns (T, H) float32."""
    emb_table = params["embedding"]                      # (V, E)
    T, B = seq.shape
    E = emb_table.shape[1]
    H = params["w_hh_T"].shape[0]

    Bp = _round_up(max(B, 8), 8)
    Ep = _round_up(max(E, 128), 128)
    Hp = _round_up(max(H, 128), 128)
    TB = T * Bp

    # Embedding gather (glue, plain JAX), then pad batch & feature dims.
    embeds = emb_table[seq].astype(jnp.float32)                      # (T, B, E)
    embeds = jnp.pad(embeds, ((0, 0), (0, Bp - B), (0, Ep - E)))
    embeds2d = embeds.reshape(TB, Ep)

    # Pad LSTM weights so every gate block is Hp lanes wide (gate order i,f,g,o).
    def pad_gate_cols(w):
        lead = w.shape[:-1]
        w4 = w.reshape(lead + (4, H))
        w4 = jnp.pad(w4, [(0, 0)] * len(lead) + [(0, 0), (0, Hp - H)])
        return w4.reshape(lead + (4 * Hp,))

    w_ih_p = jnp.pad(pad_gate_cols(params["w_ih_T"]), ((0, Ep - E), (0, 0)))
    w_hh_p = jnp.pad(pad_gate_cols(params["w_hh_T"]), ((0, Hp - H), (0, 0)))
    b_p = pad_gate_cols(params["b_lstm"])                            # (1, 4*Hp)

    w_u_p = jnp.pad(params["w_u_T"], ((0, Hp - H), (0, Hp - H)))     # (Hp, Hp)
    b_u_p = jnp.pad(params["b_u"], ((0, 0), (0, Hp - H)))            # (1, Hp)
    q_col = jnp.pad(params["query"].reshape(H, 1), ((0, Hp - H), (0, 0)))

    # Precomputed constant selectors (avoids in-kernel int div / relayouts).
    r = jnp.arange(TB)
    bsel = (r % Bp < B).astype(jnp.float32).reshape(TB, 1)           # (TB, 1)
    smat = (r[None, :] // Bp == jnp.arange(T)[:, None]).astype(jnp.float32)  # (T, TB)

    # TODO(synk): for long sequences on v7x (64 MiB VMEM) tile the time axis
    # with a grid ("arbitrary") carrying h/c in persistent scratch.
    vmem = pl.BlockSpec(memory_space=pltpu.MemorySpace.VMEM)
    out_p = pl.pallas_call(
        xpath_encoder_kernel,
        out_shape=jax.ShapeDtypeStruct((T, Hp), jnp.float32),
        in_specs=[vmem] * 9,
        out_specs=vmem,
        scratch_shapes=[
            pltpu.VMEM((TB, 4 * Hp), jnp.float32),   # xg: hoisted input projection
            pltpu.VMEM((TB, Hp), jnp.float32),       # all hidden states h_t
        ],
    )(embeds2d, w_ih_p, w_hh_p, b_p, w_u_p, b_u_p, q_col, bsel, smat)
    return out_p[:, :H]


def init_params(key, vocab_size, embedding_dim, hidden_dim):
    ks = jax.random.split(key, 8)
    E, H = embedding_dim, hidden_dim
    k = 1.0 / float(H) ** 0.5
    return {
        # nn.Embedding: N(0, 1)
        "embedding": jax.random.normal(ks[0], (vocab_size, E), jnp.float32),
        # nn.LSTM weights (stored pre-transposed for x @ W^T, gate order i,f,g,o)
        "w_ih_T": jax.random.uniform(ks[1], (E, 4 * H), jnp.float32, -k, k),
        "w_hh_T": jax.random.uniform(ks[2], (H, 4 * H), jnp.float32, -k, k),
        # bias_ih + bias_hh (sum of two independent U(-k, k) draws)
        "b_lstm": (jax.random.uniform(ks[3], (1, 4 * H), jnp.float32, -k, k)
                   + jax.random.uniform(ks[4], (1, 4 * H), jnp.float32, -k, k)),
        # compute_u Linear (stored pre-transposed)
        "w_u_T": jax.random.uniform(ks[5], (H, H), jnp.float32, -k, k),
        "b_u": jax.random.uniform(ks[6], (1, H), jnp.float32, -k, k),
        # Attention query: uniform_() in [0, 1)
        "query": jax.random.uniform(ks[7], (H,), jnp.float32, 0.0, 1.0),
    }


def xpath_encoder_reference(seq, params):
    """Pure-JAX reference matching the PyTorch module (correctness check)."""
    emb = params["embedding"][seq].astype(jnp.float32)               # (T, B, E)
    H = params["w_hh_T"].shape[0]
    B = seq.shape[1]
    w_ih, w_hh, b = params["w_ih_T"], params["w_hh_T"], params["b_lstm"]

    def step(carry, x_t):
        h, c = carry
        g = x_t @ w_ih + h @ w_hh + b
        i = jax.nn.sigmoid(g[:, 0 * H:1 * H])
        f = jax.nn.sigmoid(g[:, 1 * H:2 * H])
        gg = jnp.tanh(g[:, 2 * H:3 * H])
        o = jax.nn.sigmoid(g[:, 3 * H:4 * H])
        c = f * c + i * gg
        h = o * jnp.tanh(c)
        return (h, c), h

    init = (jnp.zeros((B, H), jnp.float32), jnp.zeros((B, H), jnp.float32))
    _, hs = lax.scan(step, init, emb)                                # (T, B, H)
    u = jnp.tanh(hs @ params["w_u_T"] + params["b_u"])               # (T, B, H)
    s = jnp.einsum("tbh,h->tb", u, params["query"])                  # (T, B)
    nrm = jnp.sqrt(jnp.sum(s * s, axis=-1, keepdims=True))
    a = s / jnp.maximum(nrm, 1e-12)                                  # F.normalize
    return jnp.einsum("tbh,tb->th", hs, a)                           # (T, H)


if __name__ == "__main__":
    # vocab=50, embedding_dim=16, hidden_dim_lstm=32, seq_len T=8, batch B=2.
    VOCAB, E, H = 50, 16, 32
    T, B = 8, 2

    key = jax.random.PRNGKey(0)
    pkey, skey = jax.random.split(key)
    params = init_params(pkey, VOCAB, E, H)
    seq = jax.random.randint(skey, (T, B), 0, VOCAB, dtype=jnp.int32)

    out = jax.block_until_ready(xpath_encoder_forward(seq, params))
    assert out.shape == (T, H), out.shape
    assert out.dtype == jnp.float32

    with jax.default_matmul_precision("float32"):
        ref = jax.block_until_ready(xpath_encoder_reference(seq, params))
    max_diff = float(jnp.max(jnp.abs(out - ref)))
    assert jnp.allclose(out, ref, rtol=2e-2, atol=2e-2), max_diff

    print("KERNEL_OK")
</pallas_src>

<mosaic_0001>
module attributes {stable_mosaic.version = 11 : i64} {
  func.func @xpath_encoder_kernel(%arg0: memref<64x128xf32, #tpu.memory_space<vmem>>, %arg1: memref<128x512xf32, #tpu.memory_space<vmem>>, %arg2: memref<128x512xf32, #tpu.memory_space<vmem>>, %arg3: memref<1x512xf32, #tpu.memory_space<vmem>>, %arg4: memref<128x128xf32, #tpu.memory_space<vmem>>, %arg5: memref<1x128xf32, #tpu.memory_space<vmem>>, %arg6: memref<128x1xf32, #tpu.memory_space<vmem>>, %arg7: memref<64x1xf32, #tpu.memory_space<vmem>>, %arg8: memref<8x64xf32, #tpu.memory_space<vmem>>, %arg9: memref<8x128xf32, #tpu.memory_space<vmem>>, %arg10: memref<64x512xf32, #tpu.memory_space<vmem>>, %arg11: memref<64x128xf32, #tpu.memory_space<vmem>>) attributes {dimension_semantics = [], scalar_prefetch = 0 : i64, scratch_operands = 2 : i64, tpu.core_type = #tpu.core_type<tc>} {
    %c0 = arith.constant 0 : index
    %c0_0 = arith.constant 0 : index
    %0 = vector.load %arg0[%c0, %c0_0] : memref<64x128xf32, #tpu.memory_space<vmem>>, vector<64x128xf32>
    %c0_1 = arith.constant 0 : index
    %c0_2 = arith.constant 0 : index
    %1 = vector.load %arg1[%c0_1, %c0_2] : memref<128x512xf32, #tpu.memory_space<vmem>>, vector<128x512xf32>
    %cst = arith.constant dense<0.000000e+00> : vector<64x512xf32>
    %2 = tpu.matmul %0, %1, %cst {dimension_numbers = #tpu.dot_dimension_numbers<[1], [0], [0], [1], [0, 0, 1, 1], [], []>} : vector<64x128xf32>, vector<128x512xf32>, vector<64x512xf32> -> vector<64x512xf32>
    %c0_3 = arith.constant 0 : index
    %c0_4 = arith.constant 0 : index
    %3 = vector.load %arg3[%c0_3, %c0_4] : memref<1x512xf32, #tpu.memory_space<vmem>>, vector<1x512xf32>
    %4 = vector.broadcast %3 : vector<1x512xf32> to vector<64x512xf32>
    %5 = arith.addf %2, %4 : vector<64x512xf32>
    %c0_5 = arith.constant 0 : index
    %c0_6 = arith.constant 0 : index
    %6 = vector.load %arg10[%c0_5, %c0_6] : memref<64x512xf32, #tpu.memory_space<vmem>>, vector<64x512xf32>
    tpu.vector_store %arg10[%c0_5, %c0_6], %5 {strides = array<i32>} : memref<64x512xf32, #tpu.memory_space<vmem>>, vector<64x512xf32>,
    %cst_7 = arith.constant 0.000000e+00 : f32
    %7 = vector.broadcast %cst_7 : f32 to vector<8x128xf32>
    %c0_i32 = arith.constant 0 : i32
    %c8_i32 = arith.constant 8 : i32
    %8 = arith.muli %c0_i32, %c8_i32 : i32
    %9 = tpu.assume_multiple %8, 8 : i32
    %10 = arith.index_cast %9 : i32 to index
    %c0_8 = arith.constant 0 : index
    %11 = vector.load %arg10[%10, %c0_8] : memref<64x512xf32, #tpu.memory_space<vmem>>, vector<8x512xf32>
    %c0_9 = arith.constant 0 : index
    %c0_10 = arith.constant 0 : index
    %12 = vector.load %arg2[%c0_9, %c0_10] : memref<128x512xf32, #tpu.memory_space<vmem>>, vector<128x512xf32>
    %cst_11 = arith.constant dense<0.000000e+00> : vector<8x512xf32>
    %13 = tpu.matmul %7, %12, %cst_11 {dimension_numbers = #tpu.dot_dimension_numbers<[1], [0], [0], [1], [0, 0, 1, 1], [], []>} : vector<8x128xf32>, vector<128x512xf32>, vector<8x512xf32> -> vector<8x512xf32>
    %14 = arith.addf %11, %13 : vector<8x512xf32>
    %15 = vector.extract_strided_slice %14 {offsets = [0, 0], sizes = [8, 128], strides = [1, 1]} : vector<8x512xf32> to vector<8x128xf32>
    %16 = arith.negf %15 : vector<8x128xf32>
    %17 = math.exp %16 : vector<8x128xf32>
    %cst_12 = arith.constant 1.000000e+00 : f32
    %18 = vector.broadcast %cst_12 : f32 to vector<8x128xf32>
    %19 = arith.addf %18, %17 : vector<8x128xf32>
    %20 = arith.divf %18, %19 : vector<8x128xf32>
    %21 = vector.extract_strided_slice %14 {offsets = [0, 128], sizes = [8, 128], strides = [1, 1]} : vector<8x512xf32> to vector<8x128xf32>
    %22 = arith.negf %21 : vector<8x128xf32>
    %23 = math.exp %22 : vector<8x128xf32>
    %cst_13 = arith.constant 1.000000e+00 : f32
    %24 = vector.broadcast %cst_13 : f32 to vector<8x128xf32>
    %25 = arith.addf %24, %23 : vector<8x128xf32>
    %26 = arith.divf %24, %25 : vector<8x128xf32>
    %27 = vector.extract_strided_slice %14 {offsets = [0, 256], sizes = [8, 128], strides = [1, 1]} : vector<8x512xf32> to vector<8x128xf32>
    %28 = math.tanh %27 : vector<8x128xf32>
    %29 = vector.extract_strided_slice %14 {offsets = [0, 384], sizes = [8, 128], strides = [1, 1]} : vector<8x512xf32> to vector<8x128xf32>
    %30 = arith.negf %29 : vector<8x128xf32>
    %31 = math.exp %30 : vector<8x128xf32>
    %cst_14 = arith.constant 1.000000e+00 : f32
    %32 = vector.broadcast %cst_14 : f32 to vector<8x128xf32>
    %33 = arith.addf %32, %31 : vector<8x128xf32>
    %34 = arith.divf %32, %33 : vector<8x128xf32>
    %35 = arith.mulf %26, %7 : vector<8x128xf32>
    %36 = arith.mulf %20, %28 : vector<8x128xf32>
    %37 = arith.addf %35, %36 : vector<8x128xf32>
    %38 = math.tanh %37 : vector<8x128xf32>
    %39 = arith.mulf %34, %38 : vector<8x128xf32>
    %40 = arith.index_cast %9 : i32 to index
    %c0_15 = arith.constant 0 : index
    %41 = vector.load %arg11[%40, %c0_15] : memref<64x128xf32, #tpu.memory_space<vmem>>, vector<8x128xf32>
    tpu.vector_store %arg11[%40, %c0_15], %39 {strides = array<i32>} : memref<64x128xf32, #tpu.memory_space<vmem>>, vector<8x128xf32>,
    %c1_i32 = arith.constant 1 : i32
    %c8_i32_16 = arith.constant 8 : i32
    %42 = arith.muli %c1_i32, %c8_i32_16 : i32
    %43 = tpu.assume_multiple %42, 8 : i32
    %44 = arith.index_cast %43 : i32 to index
    %c0_17 = arith.constant 0 : index
    %45 = vector.load %arg10[%44, %c0_17] : memref<64x512xf32, #tpu.memory_space<vmem>>, vector<8x512xf32>
    %c0_18 = arith.constant 0 : index
    %c0_19 = arith.constant 0 : index
    %46 = vector.load %arg2[%c0_18, %c0_19] : memref<128x512xf32, #tpu.memory_space<vmem>>, vector<128x512xf32>
    %cst_20 = arith.constant dense<0.000000e+00> : vector<8x512xf32>
    %47 = tpu.matmul %39, %46, %cst_20 {dimension_numbers = #tpu.dot_dimension_numbers<[1], [0], [0], [1], [0, 0, 1, 1], [], []>} : vector<8x128xf32>, vector<128x512xf32>, vector<8x512xf32> -> vector<8x512xf32>
    %48 = arith.addf %45, %47 : vector<8x512xf32>
    %49 = vector.extract_strided_slice %48 {offsets = [0, 0], sizes = [8, 128], strides = [1, 1]} : vector<8x512xf32> to vector<8x128xf32>
    %50 = arith.negf %49 : vector<8x128xf32>
    %51 = math.exp %50 : vector<8x128xf32>
    %cst_21 = arith.constant 1.000000e+00 : f32
    %52 = vector.broadcast %cst_21 : f32 to vector<8x128xf32>
    %53 = arith.addf %52, %51 : vector<8x128xf32>
    %54 = arith.divf %52, %53 : vector<8x128xf32>
    %55 = vector.extract_strided_slice %48 {offsets = [0, 128], sizes = [8, 128], strides = [1, 1]} : vector<8x512xf32> to vector<8x128xf32>
    %56 = arith.negf %55 : vector<8x128xf32>
    %57 = math.exp %56 : vector<8x128xf32>
    %cst_22 = arith.constant 1.000000e+00 : f32
    %58 = vector.broadcast %cst_22 : f32 to vector<8x128xf32>
    %59 = arith.addf %58, %57 : vector<8x128xf32>
    %60 = arith.divf %58, %59 : vector<8x128xf32>
    %61 = vector.extract_strided_slice %48 {offsets = [0, 256], sizes = [8, 128], strides = [1, 1]} : vector<8x512xf32> to vector<8x128xf32>
    %62 = math.tanh %61 : vector<8x128xf32>
    %63 = vector.extract_strided_slice %48 {offsets = [0, 384], sizes = [8, 128], strides = [1, 1]} : vector<8x512xf32> to vector<8x128xf32>
    %64 = arith.negf %63 : vector<8x128xf32>
    %65 = math.exp %64 : vector<8x128xf32>
    %cst_23 = arith.constant 1.000000e+00 : f32
    %66 = vector.broadcast %cst_23 : f32 to vector<8x128xf32>
    %67 = arith.addf %66, %65 : vector<8x128xf32>
    %68 = arith.divf %66, %67 : vector<8x128xf32>
    %69 = arith.mulf %60, %37 : vector<8x128xf32>
    %70 = arith.mulf %54, %62 : vector<8x128xf32>
    %71 = arith.addf %69, %70 : vector<8x128xf32>
    %72 = math.tanh %71 : vector<8x128xf32>
    %73 = arith.mulf %68, %72 : vector<8x128xf32>
    %74 = arith.index_cast %43 : i32 to index
    %c0_24 = arith.constant 0 : index
    %75 = vector.load %arg11[%74, %c0_24] : memref<64x128xf32, #tpu.memory_space<vmem>>, vector<8x128xf32>
    tpu.vector_store %arg11[%74, %c0_24], %73 {strides = array<i32>} : memref<64x128xf32, #tpu.memory_space<vmem>>, vector<8x128xf32>,
    %c2_i32 = arith.constant 2 : i32
    %c8_i32_25 = arith.constant 8 : i32
    %76 = arith.muli %c2_i32, %c8_i32_25 : i32
    %77 = tpu.assume_multiple %76, 8 : i32
    %78 = arith.index_cast %77 : i32 to index
    %c0_26 = arith.constant 0 : index
    %79 = vector.load %arg10[%78, %c0_26] : memref<64x512xf32, #tpu.memory_space<vmem>>, vector<8x512xf32>
    %c0_27 = arith.constant 0 : index
    %c0_28 = arith.constant 0 : index
    %80 = vector.load %arg2[%c0_27, %c0_28] : memref<128x512xf32, #tpu.memory_space<vmem>>, vector<128x512xf32>
    %cst_29 = arith.constant dense<0.000000e+00> : vector<8x512xf32>
    %81 = tpu.matmul %73, %80, %cst_29 {dimension_numbers = #tpu.dot_dimension_numbers<[1], [0], [0], [1], [0, 0, 1, 1], [], []>} : vector<8x128xf32>, vector<128x512xf32>, vector<8x512xf32> -> vector<8x512xf32>
    %82 = arith.addf %79, %81 : vector<8x512xf32>
    %83 = vector.extract_strided_slice %82 {offsets = [0, 0], sizes = [8, 128], strides = [1, 1]} : vector<8x512xf32> to vector<8x128xf32>
    %84 = arith.negf %83 : vector<8x128xf32>
    %85 = math.exp %84 : vector<8x128xf32>
    %cst_30 = arith.constant 1.000000e+00 : f32
    %86 = vector.broadcast %cst_30 : f32 to vector<8x128xf32>
    %87 = arith.addf %86, %85 : vector<8x128xf32>
    %88 = arith.divf %86, %87 : vector<8x128xf32>
    %89 = vector.extract_strided_slice %82 {offsets = [0, 128], sizes = [8, 128], strides = [1, 1]} : vector<8x512xf32> to vector<8x128xf32>
    %90 = arith.negf %89 : vector<8x128xf32>
    %91 = math.exp %90 : vector<8x128xf32>
    %cst_31 = arith.constant 1.000000e+00 : f32
    %92 = vector.broadcast %cst_31 : f32 to vector<8x128xf32>
    %93 = arith.addf %92, %91 : vector<8x128xf32>
    %94 = arith.divf %92, %93 : vector<8x128xf32>
    %95 = vector.extract_strided_slice %82 {offsets = [0, 256], sizes = [8, 128], strides = [1, 1]} : vector<8x512xf32> to vector<8x128xf32>
    %96 = math.tanh %95 : vector<8x128xf32>
    %97 = vector.extract_strided_slice %82 {offsets = [0, 384], sizes = [8, 128], strides = [1, 1]} : vector<8x512xf32> to vector<8x128xf32>
    %98 = arith.negf %97 : vector<8x128xf32>
    %99 = math.exp %98 : vector<8x128xf32>
    %cst_32 = arith.constant 1.000000e+00 : f32
    %100 = vector.broadcast %cst_32 : f32 to vector<8x128xf32>
    %101 = arith.addf %100, %99 : vector<8x128xf32>
    %102 = arith.divf %100, %101 : vector<8x128xf32>
    %103 = arith.mulf %94, %71 : vector<8x128xf32>
    %104 = arith.mulf %88, %96 : vector<8x128xf32>
    %105 = arith.addf %103, %104 : vector<8x128xf32>
    %106 = math.tanh %105 : vector<8x128xf32>
    %107 = arith.mulf %102, %106 : vector<8x128xf32>
    %108 = arith.index_cast %77 : i32 to index
    %c0_33 = arith.constant 0 : index
    %109 = vector.load %arg11[%108, %c0_33] : memref<64x128xf32, #tpu.memory_space<vmem>>, vector<8x128xf32>
    tpu.vector_store %arg11[%108, %c0_33], %107 {strides = array<i32>} : memref<64x128xf32, #tpu.memory_space<vmem>>, vector<8x128xf32>,
    %c3_i32 = arith.constant 3 : i32
    %c8_i32_34 = arith.constant 8 : i32
    %110 = arith.muli %c3_i32, %c8_i32_34 : i32
    %111 = tpu.assume_multiple %110, 8 : i32
    %112 = arith.index_cast %111 : i32 to index
    %c0_35 = arith.constant 0 : index
    %113 = vector.load %arg10[%112, %c0_35] : memref<64x512xf32, #tpu.memory_space<vmem>>, vector<8x512xf32>
    %c0_36 = arith.constant 0 : index
    %c0_37 = arith.constant 0 : index
    %114 = vector.load %arg2[%c0_36, %c0_37] : memref<128x512xf32, #tpu.memory_space<vmem>>, vector<128x512xf32>
    %cst_38 = arith.constant dense<0.000000e+00> : vector<8x512xf32>
    %115 = tpu.matmul %107, %114, %cst_38 {dimension_numbers = #tpu.dot_dimension_numbers<[1], [0], [0], [1], [0, 0, 1, 1], [], []>} : vector<8x128xf32>, vector<128x512xf32>, vector<8x512xf32> -> vector<8x512xf32>
    %116 = arith.addf %113, %115 : vector<8x512xf32>
    %117 = vector.extract_strided_slice %116 {offsets = [0, 0], sizes = [8, 128], strides = [1, 1]} : vector<8x512xf32> to vector<8x128xf32>
    %118 = arith.negf %117 : vector<8x128xf32>
    %119 = math.exp %118 : vector<8x128xf32>
    %cst_39 = arith.constant 1.000000e+00 : f32
    %120 = vector.broadcast %cst_39 : f32 to vector<8x128xf32>
    %121 = arith.addf %120, %119 : vector<8x128xf32>
    %122 = arith.divf %120, %121 : vector<8x128xf32>
    %123 = vector.extract_strided_slice %116 {offsets = [0, 128], sizes = [8, 128], strides = [1, 1]} : vector<8x512xf32> to vector<8x128xf32>
    %124 = arith.negf %123 : vector<8x128xf32>
    %125 = math.exp %124 : vector<8x128xf32>
    %cst_40 = arith.constant 1.000000e+00 : f32
    %126 = vector.broadcast %cst_40 : f32 to vector<8x128xf32>
    %127 = arith.addf %126, %125 : vector<8x128xf32>
    %128 = arith.divf %126, %127 : vector<8x128xf32>
    %129 = vector.extract_strided_slice %116 {offsets = [0, 256], sizes = [8, 128], strides = [1, 1]} : vector<8x512xf32> to vector<8x128xf32>
    %130 = math.tanh %129 : vector<8x128xf32>
    %131 = vector.extract_strided_slice %116 {offsets = [0, 384], sizes = [8, 128], strides = [1, 1]} : vector<8x512xf32> to vector<8x128xf32>
    %132 = arith.negf %131 : vector<8x128xf32>
    %133 = math.exp %132 : vector<8x128xf32>
    %cst_41 = arith.constant 1.000000e+00 : f32
    %134 = vector.broadcast %cst_41 : f32 to vector<8x128xf32>
    %135 = arith.addf %134, %133 : vector<8x128xf32>
    %136 = arith.divf %134, %135 : vector<8x128xf32>
    %137 = arith.mulf %128, %105 : vector<8x128xf32>
    %138 = arith.mulf %122, %130 : vector<8x128xf32>
    %139 = arith.addf %137, %138 : vector<8x128xf32>
    %140 = math.tanh %139 : vector<8x128xf32>
    %141 = arith.mulf %136, %140 : vector<8x128xf32>
    %142 = arith.index_cast %111 : i32 to index
    %c0_42 = arith.constant 0 : index
    %143 = vector.load %arg11[%142, %c0_42] : memref<64x128xf32, #tpu.memory_space<vmem>>, vector<8x128xf32>
    tpu.vector_store %arg11[%142, %c0_42], %141 {strides = array<i32>} : memref<64x128xf32, #tpu.memory_space<vmem>>, vector<8x128xf32>,
    %c4_i32 = arith.constant 4 : i32
    %c8_i32_43 = arith.constant 8 : i32
    %144 = arith.muli %c4_i32, %c8_i32_43 : i32
    %145 = tpu.assume_multiple %144, 8 : i32
    %146 = arith.index_cast %145 : i32 to index
    %c0_44 = arith.constant 0 : index
    %147 = vector.load %arg10[%146, %c0_44] : memref<64x512xf32, #tpu.memory_space<vmem>>, vector<8x512xf32>
    %c0_45 = arith.constant 0 : index
    %c0_46 = arith.constant 0 : index
    %148 = vector.load %arg2[%c0_45, %c0_46] : memref<128x512xf32, #tpu.memory_space<vmem>>, vector<128x512xf32>
    %cst_47 = arith.constant dense<0.000000e+00> : vector<8x512xf32>
    %149 = tpu.matmul %141, %148, %cst_47 {dimension_numbers = #tpu.dot_dimension_numbers<[1], [0], [0], [1], [0, 0, 1, 1], [], []>} : vector<8x128xf32>, vector<128x512xf32>, vector<8x512xf32> -> vector<8x512xf32>
    %150 = arith.addf %147, %149 : vector<8x512xf32>
    %151 = vector.extract_strided_slice %150 {offsets = [0, 0], sizes = [8, 128], strides = [1, 1]} : vector<8x512xf32> to vector<8x128xf32>
    %152 = arith.negf %151 : vector<8x128xf32>
    %153 = math.exp %152 : vector<8x128xf32>
    %cst_48 = arith.constant 1.000000e+00 : f32
    %154 = vector.broadcast %cst_48 : f32 to vector<8x128xf32>
    %155 = arith.addf %154, %153 : vector<8x128xf32>
    %156 = arith.divf %154, %155 : vector<8x128xf32>
    %157 = vector.extract_strided_slice %150 {offsets = [0, 128], sizes = [8, 128], strides = [1, 1]} : vector<8x512xf32> to vector<8x128xf32>
    %158 = arith.negf %157 : vector<8x128xf32>
    %159 = math.exp %158 : vector<8x128xf32>
    %cst_49 = arith.constant 1.000000e+00 : f32
    %160 = vector.broadcast %cst_49 : f32 to vector<8x128xf32>
    %161 = arith.addf %160, %159 : vector<8x128xf32>
    %162 = arith.divf %160, %161 : vector<8x128xf32>
    %163 = vector.extract_strided_slice %150 {offsets = [0, 256], sizes = [8, 128], strides = [1, 1]} : vector<8x512xf32> to vector<8x128xf32>
    %164 = math.tanh %163 : vector<8x128xf32>
    %165 = vector.extract_strided_slice %150 {offsets = [0, 384], sizes = [8, 128], strides = [1, 1]} : vector<8x512xf32> to vector<8x128xf32>
    %166 = arith.negf %165 : vector<8x128xf32>
    %167 = math.exp %166 : vector<8x128xf32>
    %cst_50 = arith.constant 1.000000e+00 : f32
    %168 = vector.broadcast %cst_50 : f32 to vector<8x128xf32>
    %169 = arith.addf %168, %167 : vector<8x128xf32>
    %170 = arith.divf %168, %169 : vector<8x128xf32>
    %171 = arith.mulf %162, %139 : vector<8x128xf32>
    %172 = arith.mulf %156, %164 : vector<8x128xf32>
    %173 = arith.addf %171, %172 : vector<8x128xf32>
    %174 = math.tanh %173 : vector<8x128xf32>
    %175 = arith.mulf %170, %174 : vector<8x128xf32>
    %176 = arith.index_cast %145 : i32 to index
    %c0_51 = arith.constant 0 : index
    %177 = vector.load %arg11[%176, %c0_51] : memref<64x128xf32, #tpu.memory_space<vmem>>, vector<8x128xf32>
    tpu.vector_store %arg11[%176, %c0_51], %175 {strides = array<i32>} : memref<64x128xf32, #tpu.memory_space<vmem>>, vector<8x128xf32>,
    %c5_i32 = arith.constant 5 : i32
    %c8_i32_52 = arith.constant 8 : i32
    %178 = arith.muli %c5_i32, %c8_i32_52 : i32
    %179 = tpu.assume_multiple %178, 8 : i32
    %180 = arith.index_cast %179 : i32 to index
    %c0_53 = arith.constant 0 : index
    %181 = vector.load %arg10[%180, %c0_53] : memref<64x512xf32, #tpu.memory_space<vmem>>, vector<8x512xf32>
    %c0_54 = arith.constant 0 : index
    %c0_55 = arith.constant 0 : index
    %182 = vector.load %arg2[%c0_54, %c0_55] : memref<128x512xf32, #tpu.memory_space<vmem>>, vector<128x512xf32>
    %cst_56 = arith.constant dense<0.000000e+00> : vector<8x512xf32>
    %183 = tpu.matmul %175, %182, %cst_56 {dimension_numbers = #tpu.dot_dimension_numbers<[1], [0], [0], [1], [0, 0, 1, 1], [], []>} : vector<8x128xf32>, vector<128x512xf32>, vector<8x512xf32> -> vector<8x512xf32>
    %184 = arith.addf %181, %183 : vector<8x512xf32>
    %185 = vector.extract_strided_slice %184 {offsets = [0, 0], sizes = [8, 128], strides = [1, 1]} : vector<8x512xf32> to vector<8x128xf32>
    %186 = arith.negf %185 : vector<8x128xf32>
    %187 = math.exp %186 : vector<8x128xf32>
    %cst_57 = arith.constant 1.000000e+00 : f32
    %188 = vector.broadcast %cst_57 : f32 to vector<8x128xf32>
    %189 = arith.addf %188, %187 : vector<8x128xf32>
    %190 = arith.divf %188, %189 : vector<8x128xf32>
    %191 = vector.extract_strided_slice %184 {offsets = [0, 128], sizes = [8, 128], strides = [1, 1]} : vector<8x512xf32> to vector<8x128xf32>
    %192 = arith.negf %191 : vector<8x128xf32>
    %193 = math.exp %192 : vector<8x128xf32>
    %cst_58 = arith.constant 1.000000e+00 : f32
    %194 = vector.broadcast %cst_58 : f32 to vector<8x128xf32>
    %195 = arith.addf %194, %193 : vector<8x128xf32>
    %196 = arith.divf %194, %195 : vector<8x128xf32>
    %197 = vector.extract_strided_slice %184 {offsets = [0, 256], sizes = [8, 128], strides = [1, 1]} : vector<8x512xf32> to vector<8x128xf32>
    %198 = math.tanh %197 : vector<8x128xf32>
    %199 = vector.extract_strided_slice %184 {offsets = [0, 384], sizes = [8, 128], strides = [1, 1]} : vector<8x512xf32> to vector<8x128xf32>
    %200 = arith.negf %199 : vector<8x128xf32>
    %201 = math.exp %200 : vector<8x128xf32>
    %cst_59 = arith.constant 1.000000e+00 : f32
    %202 = vector.broadcast %cst_59 : f32 to vector<8x128xf32>
    %203 = arith.addf %202, %201 : vector<8x128xf32>
    %204 = arith.divf %202, %203 : vector<8x128xf32>
    %205 = arith.mulf %196, %173 : vector<8x128xf32>
    %206 = arith.mulf %190, %198 : vector<8x128xf32>
    %207 = arith.addf %205, %206 : vector<8x128xf32>
    %208 = math.tanh %207 : vector<8x128xf32>
    %209 = arith.mulf %204, %208 : vector<8x128xf32>
    %210 = arith.index_cast %179 : i32 to index
    %c0_60 = arith.constant 0 : index
    %211 = vector.load %arg11[%210, %c0_60] : memref<64x128xf32, #tpu.memory_space<vmem>>, vector<8x128xf32>
    tpu.vector_store %arg11[%210, %c0_60], %209 {strides = array<i32>} : memref<64x128xf32, #tpu.memory_space<vmem>>, vector<8x128xf32>,
    %c6_i32 = arith.constant 6 : i32
    %c8_i32_61 = arith.constant 8 : i32
    %212 = arith.muli %c6_i32, %c8_i32_61 : i32
    %213 = tpu.assume_multiple %212, 8 : i32
    %214 = arith.index_cast %213 : i32 to index
    %c0_62 = arith.constant 0 : index
    %215 = vector.load %arg10[%214, %c0_62] : memref<64x512xf32, #tpu.memory_space<vmem>>, vector<8x512xf32>
    %c0_63 = arith.constant 0 : index
    %c0_64 = arith.constant 0 : index
    %216 = vector.load %arg2[%c0_63, %c0_64] : memref<128x512xf32, #tpu.memory_space<vmem>>, vector<128x512xf32>
    %cst_65 = arith.constant dense<0.000000e+00> : vector<8x512xf32>
    %217 = tpu.matmul %209, %216, %cst_65 {dimension_numbers = #tpu.dot_dimension_numbers<[1], [0], [0], [1], [0, 0, 1, 1], [], []>} : vector<8x128xf32>, vector<128x512xf32>, vector<8x512xf32> -> vector<8x512xf32>
    %218 = arith.addf %215, %217 : vector<8x512xf32>
    %219 = vector.extract_strided_slice %218 {offsets = [0, 0], sizes = [8, 128], strides = [1, 1]} : vector<8x512xf32> to vector<8x128xf32>
    %220 = arith.negf %219 : vector<8x128xf32>
    %221 = math.exp %220 : vector<8x128xf32>
    %cst_66 = arith.constant 1.000000e+00 : f32
    %222 = vector.broadcast %cst_66 : f32 to vector<8x128xf32>
    %223 = arith.addf %222, %221 : vector<8x128xf32>
    %224 = arith.divf %222, %223 : vector<8x128xf32>
    %225 = vector.extract_strided_slice %218 {offsets = [0, 128], sizes = [8, 128], strides = [1, 1]} : vector<8x512xf32> to vector<8x128xf32>
    %226 = arith.negf %225 : vector<8x128xf32>
    %227 = math.exp %226 : vector<8x128xf32>
    %cst_67 = arith.constant 1.000000e+00 : f32
    %228 = vector.broadcast %cst_67 : f32 to vector<8x128xf32>
    %229 = arith.addf %228, %227 : vector<8x128xf32>
    %230 = arith.divf %228, %229 : vector<8x128xf32>
    %231 = vector.extract_strided_slice %218 {offsets = [0, 256], sizes = [8, 128], strides = [1, 1]} : vector<8x512xf32> to vector<8x128xf32>
    %232 = math.tanh %231 : vector<8x128xf32>
    %233 = vector.extract_strided_slice %218 {offsets = [0, 384], sizes = [8, 128], strides = [1, 1]} : vector<8x512xf32> to vector<8x128xf32>
    %234 = arith.negf %233 : vector<8x128xf32>
    %235 = math.exp %234 : vector<8x128xf32>
    %cst_68 = arith.constant 1.000000e+00 : f32
    %236 = vector.broadcast %cst_68 : f32 to vector<8x128xf32>
    %237 = arith.addf %236, %235 : vector<8x128xf32>
    %238 = arith.divf %236, %237 : vector<8x128xf32>
    %239 = arith.mulf %230, %207 : vector<8x128xf32>
    %240 = arith.mulf %224, %232 : vector<8x128xf32>
    %241 = arith.addf %239, %240 : vector<8x128xf32>
    %242 = math.tanh %241 : vector<8x128xf32>
    %243 = arith.mulf %238, %242 : vector<8x128xf32>
    %244 = arith.index_cast %213 : i32 to index
    %c0_69 = arith.constant 0 : index
    %245 = vector.load %arg11[%244, %c0_69] : memref<64x128xf32, #tpu.memory_space<vmem>>, vector<8x128xf32>
    tpu.vector_store %arg11[%244, %c0_69], %243 {strides = array<i32>} : memref<64x128xf32, #tpu.memory_space<vmem>>, vector<8x128xf32>,
    %c7_i32 = arith.constant 7 : i32
    %c8_i32_70 = arith.constant 8 : i32
    %246 = arith.muli %c7_i32, %c8_i32_70 : i32
    %247 = tpu.assume_multiple %246, 8 : i32
    %248 = arith.index_cast %247 : i32 to index
    %c0_71 = arith.constant 0 : index
    %249 = vector.load %arg10[%248, %c0_71] : memref<64x512xf32, #tpu.memory_space<vmem>>, vector<8x512xf32>
    %c0_72 = arith.constant 0 : index
    %c0_73 = arith.constant 0 : index
    %250 = vector.load %arg2[%c0_72, %c0_73] : memref<128x512xf32, #tpu.memory_space<vmem>>, vector<128x512xf32>
    %cst_74 = arith.constant dense<0.000000e+00> : vector<8x512xf32>
    %251 = tpu.matmul %243, %250, %cst_74 {dimension_numbers = #tpu.dot_dimension_numbers<[1], [0], [0], [1], [0, 0, 1, 1], [], []>} : vector<8x128xf32>, vector<128x512xf32>, vector<8x512xf32> -> vector<8x512xf32>
    %252 = arith.addf %249, %251 : vector<8x512xf32>
    %253 = vector.extract_strided_slice %252 {offsets = [0, 0], sizes = [8, 128], strides = [1, 1]} : vector<8x512xf32> to vector<8x128xf32>
    %254 = arith.negf %253 : vector<8x128xf32>
    %255 = math.exp %254 : vector<8x128xf32>
    %cst_75 = arith.constant 1.000000e+00 : f32
    %256 = vector.broadcast %cst_75 : f32 to vector<8x128xf32>
    %257 = arith.addf %256, %255 : vector<8x128xf32>
    %258 = arith.divf %256, %257 : vector<8x128xf32>
    %259 = vector.extract_strided_slice %252 {offsets = [0, 128], sizes = [8, 128], strides = [1, 1]} : vector<8x512xf32> to vector<8x128xf32>
    %260 = arith.negf %259 : vector<8x128xf32>
    %261 = math.exp %260 : vector<8x128xf32>
    %cst_76 = arith.constant 1.000000e+00 : f32
    %262 = vector.broadcast %cst_76 : f32 to vector<8x128xf32>
    %263 = arith.addf %262, %261 : vector<8x128xf32>
    %264 = arith.divf %262, %263 : vector<8x128xf32>
    %265 = vector.extract_strided_slice %252 {offsets = [0, 256], sizes = [8, 128], strides = [1, 1]} : vector<8x512xf32> to vector<8x128xf32>
    %266 = math.tanh %265 : vector<8x128xf32>
    %267 = vector.extract_strided_slice %252 {offsets = [0, 384], sizes = [8, 128], strides = [1, 1]} : vector<8x512xf32> to vector<8x128xf32>
    %268 = arith.negf %267 : vector<8x128xf32>
    %269 = math.exp %268 : vector<8x128xf32>
    %cst_77 = arith.constant 1.000000e+00 : f32
    %270 = vector.broadcast %cst_77 : f32 to vector<8x128xf32>
    %271 = arith.addf %270, %269 : vector<8x128xf32>
    %272 = arith.divf %270, %271 : vector<8x128xf32>
    %273 = arith.mulf %264, %241 : vector<8x128xf32>
    %274 = arith.mulf %258, %266 : vector<8x128xf32>
    %275 = arith.addf %273, %274 : vector<8x128xf32>
    %276 = math.tanh %275 : vector<8x128xf32>
    %277 = arith.mulf %272, %276 : vector<8x128xf32>
    %278 = arith.index_cast %247 : i32 to index
    %c0_78 = arith.constant 0 : index
    %279 = vector.load %arg11[%278, %c0_78] : memref<64x128xf32, #tpu.memory_space<vmem>>, vector<8x128xf32>
    tpu.vector_store %arg11[%278, %c0_78], %277 {strides = array<i32>} : memref<64x128xf32, #tpu.memory_space<vmem>>, vector<8x128xf32>,
    %c8_i32_79 = arith.constant 8 : i32
    %c0_80 = arith.constant 0 : index
    %c0_81 = arith.constant 0 : index
    %280 = vector.load %arg11[%c0_80, %c0_81] : memref<64x128xf32, #tpu.memory_space<vmem>>, vector<64x128xf32>
    %c0_82 = arith.constant 0 : index
    %c0_83 = arith.constant 0 : index
    %281 = vector.load %arg4[%c0_82, %c0_83] : memref<128x128xf32, #tpu.memory_space<vmem>>, vector<128x128xf32>
    %cst_84 = arith.constant dense<0.000000e+00> : vector<64x128xf32>
    %282 = tpu.matmul %280, %281, %cst_84 {dimension_numbers = #tpu.dot_dimension_numbers<[1], [0], [0], [1], [0, 0, 1, 1], [], []>} : vector<64x128xf32>, vector<128x128xf32>, vector<64x128xf32> -> vector<64x128xf32>
    %c0_85 = arith.constant 0 : index
    %c0_86 = arith.constant 0 : index
    %283 = vector.load %arg5[%c0_85, %c0_86] : memref<1x128xf32, #tpu.memory_space<vmem>>, vector<1x128xf32>
    %284 = vector.broadcast %283 : vector<1x128xf32> to vector<64x128xf32>
    %285 = arith.addf %282, %284 : vector<64x128xf32>
    %286 = math.tanh %285 : vector<64x128xf32>
    %c0_87 = arith.constant 0 : index
    %c0_88 = arith.constant 0 : index
    %287 = vector.load %arg6[%c0_87, %c0_88] : memref<128x1xf32, #tpu.memory_space<vmem>>, vector<128x1xf32>
    %cst_89 = arith.constant dense<0.000000e+00> : vector<64x1xf32>
    %288 = tpu.matmul %286, %287, %cst_89 {dimension_numbers = #tpu.dot_dimension_numbers<[1], [0], [0], [1], [0, 0, 1, 1], [], []>} : vector<64x128xf32>, vector<128x1xf32>, vector<64x1xf32> -> vector<64x1xf32>
    %c0_90 = arith.constant 0 : index
    %c0_91 = arith.constant 0 : index
    %289 = vector.load %arg7[%c0_90, %c0_91] : memref<64x1xf32, #tpu.memory_space<vmem>>, vector<64x1xf32>
    %290 = arith.mulf %288, %289 : vector<64x1xf32>
    %c0_92 = arith.constant 0 : index
    %c0_93 = arith.constant 0 : index
    %291 = vector.load %arg8[%c0_92, %c0_93] : memref<8x64xf32, #tpu.memory_space<vmem>>, vector<8x64xf32>
    %292 = arith.mulf %290, %290 : vector<64x1xf32>
    %cst_94 = arith.constant dense<0.000000e+00> : vector<8x1xf32>
    %293 = tpu.matmul %291, %292, %cst_94 {dimension_numbers = #tpu.dot_dimension_numbers<[1], [0], [0], [1], [0, 0, 1, 1], [], []>} : vector<8x64xf32>, vector<64x1xf32>, vector<8x1xf32> -> vector<8x1xf32>
    %294 = vector.broadcast %290 : vector<64x1xf32> to vector<64x128xf32>
    %295 = arith.mulf %294, %280 : vector<64x128xf32>
    %cst_95 = arith.constant dense<0.000000e+00> : vector<8x128xf32>
    %296 = tpu.matmul %291, %295, %cst_95 {dimension_numbers = #tpu.dot_dimension_numbers<[1], [0], [0], [1], [0, 0, 1, 1], [], []>} : vector<8x64xf32>, vector<64x128xf32>, vector<8x128xf32> -> vector<8x128xf32>
    %cst_96 = arith.constant 1.000000e-24 : f32
    %297 = vector.broadcast %cst_96 : f32 to vector<8x1xf32>
    %298 = arith.maximumf %293, %297 : vector<8x1xf32>
    %299 = math.rsqrt %298 : vector<8x1xf32>
    %300 = vector.broadcast %299 : vector<8x1xf32> to vector<8x128xf32>
    %301 = arith.mulf %296, %300 : vector<8x128xf32>
    %c0_97 = arith.constant 0 : index
    %c0_98 = arith.constant 0 : index
    %302 = vector.load %arg9[%c0_97, %c0_98] : memref<8x128xf32, #tpu.memory_space<vmem>>, vector<8x128xf32>
    tpu.vector_store %arg9[%c0_97, %c0_98], %301 {strides = array<i32>} : memref<8x128xf32, #tpu.memory_space<vmem>>, vector<8x128xf32>,
    return
  }
}

</mosaic_0001>

<llo_original>
// kernel: tpu_custom_call.1
$region0: #{tpu_custom_call.1}
  #allocation0 [shape = 'u32[]', space=smem, size = 0x4, offset = 0x4, fixed_abs, tag = 'smem constant byte address 0x4 - core index']
  #allocation1 [shape = 'u32[144,128]{1,0:T(1,128)}', space=vmem, size = 0x12000, scoped, tag = 'internal scratch']
  #allocation2 [shape = 'f32[64,512]{1,0:T(8,128)}', space=vmem, size = 0x20000, scoped, tag = 'scratch operand']
  #allocation3 [shape = 'f32[64,128]{1,0:T(8,128)}', space=vmem, size = 0x8000, scoped, tag = 'scratch operand']
  %s0 = inlined_call_operand.vmem [shape: f32[64,128], index: 0, kind: input, shape index: {}]
  %s1 = inlined_call_operand.hbm [shape: f32[128,512], index: 1, kind: input, shape index: {}]
  %s2 = inlined_call_operand.hbm [shape: f32[128,512], index: 2, kind: input, shape index: {}]
  %s3 = inlined_call_operand.vmem [shape: f32[1,512], index: 3, kind: input, shape index: {}]
  %s4 = inlined_call_operand.vmem [shape: f32[128,128], index: 4, kind: input, shape index: {}]
  %s5 = inlined_call_operand.vmem [shape: f32[1,128], index: 5, kind: input, shape index: {}]
  %s6 = inlined_call_operand.vmem [shape: f32[128,1], index: 6, kind: input, shape index: {}]
  %s7 = inlined_call_operand.vmem [shape: f32[64,1], index: 7, kind: input, shape index: {}]
  %s8 = inlined_call_operand.vmem [shape: f32[8,64], index: 8, kind: input, shape index: {}]
  %s9 = inlined_call_operand.hbm [shape: f32[8,128], index: 9, kind: output, shape index: {}]
  %s10 = sld [smem:[#allocation0]]
  $region54: #{tpu_custom_call.1} parent=0
    _
  %s12 = ssub.s32 1, %s10
  %s13 = scalar_select 0, %s12, %s10
  $region1: #{tpu_custom_call.1} parent=0
    #allocation4 [shape = 'u8[262144]{0}', space=vmem, size = 0x40000, scoped, tag = 'input window, operand 1, single buffered']
    #allocation5 [shape = 's32[1]{0}', space=sflag, size = 0x4, scoped, tag = 'scoped memory for tpu_custom_call.1']
    #allocation6 [shape = 's32[1]{0}', space=sflag, size = 0x4, scoped, tag = 'scoped memory for tpu_custom_call.1']
    #allocation7 [shape = 'u8[262144]{0}', space=vmem, size = 0x40000, scoped, tag = 'input window, operand 2, single buffered']
    #allocation8 [shape = 's32[1]{0}', space=sflag, size = 0x4, scoped, tag = 'scoped memory for tpu_custom_call.1']
    #allocation9 [shape = 'u8[4096]{0}', space=vmem, size = 0x1000, scoped, tag = 'output window, operand 0, single buffered']
    %14 = vsyncpa [#allocation5], 0
    %15 = vsyncpa [#allocation8], 0
    %16 = vsyncpa [#allocation6], 0
    // Predicated region
    $region2: #{tpu_custom_call.1} parent=1 // pred_check
      _
    $region3: #{tpu_custom_call.1} parent=1 // pred_check_branch
      %18 = sbr.rel (0) target = $region5
    $region4: #{tpu_custom_call.1} parent=1 // pred_region
      _
    $region5: #{tpu_custom_call.1} parent=1 // pred_fallthru
      _
    // Predicated region
    $region6: #{tpu_custom_call.1} parent=1 // pred_check
      _
    $region7: #{tpu_custom_call.1} parent=1 // pred_check_branch
      %20 = sbr.rel (0) target = $region9
    $region8: #{tpu_custom_call.1} parent=1 // pred_region
      %s22 = ssub.s32 8192, 8192
      %23 = vsyncadd [#allocation5], %s22
      %s24 = sshll.u32 [#allocation4], 4
      %s25 = int_to_ptr.vmem [resolvable:$true] %s24
      %30 = dma.hbm_to_vmem [thread:$0]  %s1, 8192, %s25, [#allocation5], 512, 512, 32
    $region9: #{tpu_custom_call.1} parent=1 // pred_fallthru
      _
    // Predicated region
    $region10: #{tpu_custom_call.1} parent=1 // pred_check
      _
    $region11: #{tpu_custom_call.1} parent=1 // pred_check_branch
      %32 = sbr.rel (0) target = $region13
    $region12: #{tpu_custom_call.1} parent=1 // pred_region
      %s34 = ssub.s32 8192, 8192
      %35 = vsyncadd [#allocation8], %s34
      %s36 = sshll.u32 [#allocation7], 4
      %s37 = int_to_ptr.vmem [resolvable:$true] %s36
      %42 = dma.hbm_to_vmem [thread:$0]  %s2, 8192, %s37, [#allocation8], 512, 512, 32
    $region13: #{tpu_custom_call.1} parent=1 // pred_fallthru
      _
    // Predicated region
    $region14: #{tpu_custom_call.1} parent=1 // pred_check
      _
    $region15: #{tpu_custom_call.1} parent=1 // pred_check_branch
      %44 = sbr.rel (0) target = $region17
    $region16: #{tpu_custom_call.1} parent=1 // pred_region
      _
    $region17: #{tpu_custom_call.1} parent=1 // pred_fallthru
      _
    // Predicated region
    $region18: #{tpu_custom_call.1} parent=1 // pred_check
      _
    $region19: #{tpu_custom_call.1} parent=1 // pred_check_branch
      %46 = sbr.rel (0) target = $region21
    $region20: #{tpu_custom_call.1} parent=1 // pred_region
      _
    $region21: #{tpu_custom_call.1} parent=1 // pred_fallthru
      _
    // Predicated region
    $region22: #{tpu_custom_call.1} parent=1 // pred_check
      _
    $region23: #{tpu_custom_call.1} parent=1 // pred_check_branch
      %48 = sbr.rel (0) target = $region25
    $region24: #{tpu_custom_call.1} parent=1 // pred_region
      _
    $region25: #{tpu_custom_call.1} parent=1 // pred_fallthru
      _
    // Predicated region
    $region26: #{tpu_custom_call.1} parent=1 // pred_check
      _
    $region27: #{tpu_custom_call.1} parent=1 // pred_check_branch
      %50 = sbr.rel (0) target = $region29
    $region28: #{tpu_custom_call.1} parent=1 // pred_region
      _
    $region29: #{tpu_custom_call.1} parent=1 // pred_fallthru
      _
    // Predicated region
    $region30: #{tpu_custom_call.1} parent=1 // pred_check
      _
    $region31: #{tpu_custom_call.1} parent=1 // pred_check_branch
      %52 = sbr.rel (0) target = $region33
    $region32: #{tpu_custom_call.1} parent=1 // pred_region
      _
    $region33: #{tpu_custom_call.1} parent=1 // pred_fallthru
      _
    // Predicated region
    $region34: #{tpu_custom_call.1} parent=1 // pred_check
      _
    $region35: #{tpu_custom_call.1} parent=1 // pred_check_branch
      %54 = sbr.rel (0) target = $region37
    $region36: #{tpu_custom_call.1} parent=1 // pred_region
      _
    $region37: #{tpu_custom_call.1} parent=1 // pred_fallthru
      _
    // Predicated region
    $region38: #{tpu_custom_call.1} parent=1 // pred_check
      _
    $region39: #{tpu_custom_call.1} parent=1 // pred_check_branch
      %56 = sbr.rel (0) target = $region41
    $region40: #{tpu_custom_call.1} parent=1 // pred_region
      %57 = dma.done [#allocation5], 8192
    $region41: #{tpu_custom_call.1} parent=1 // pred_fallthru
      _
    // Predicated region
    $region42: #{tpu_custom_call.1} parent=1 // pred_check
      _
    $region43: #{tpu_custom_call.1} parent=1 // pred_check_branch
      %59 = sbr.rel (0) target = $region45
    $region44: #{tpu_custom_call.1} parent=1 // pred_region
      %60 = dma.done [#allocation8], 8192
    $region45: #{tpu_custom_call.1} parent=1 // pred_fallthru
      _
    %v61 = vld [vmem:[%s0] sm:$0xff]
    %v62 = vld [vmem:[%s0 + $0x8] sm:$0xff]
    %v63 = vld [vmem:[%s0 + $0x10] sm:$0xff]
    %v64 = vld [vmem:[%s0 + $0x18] sm:$0xff]
    %v65 = vld [vmem:[%s0 + $0x20] sm:$0xff]
    %v66 = vld [vmem:[%s0 + $0x28] sm:$0xff]
    %v67 = vld [vmem:[%s0 + $0x30] sm:$0xff]
    %v68 = vld [vmem:[%s0 + $0x38] sm:$0xff]
    %v69 = vld [vmem:[#allocation4] sm:$0xff]
    %v70 = vld [vmem:[#allocation4 + $0x8] sm:$0xff]
    %v71 = vld [vmem:[#allocation4 + $0x10] sm:$0xff]
    %v72 = vld [vmem:[#allocation4 + $0x18] sm:$0xff]
    %v73 = vld [vmem:[#allocation4 + $0x20] sm:$0xff]
    %v74 = vld [vmem:[#allocation4 + $0x28] sm:$0xff]
    %v75 = vld [vmem:[#allocation4 + $0x30] sm:$0xff]
    %v76 = vld [vmem:[#allocation4 + $0x38] sm:$0xff]
    %v77 = vld [vmem:[#allocation4 + $0x40] sm:$0xff]
    %v78 = vld [vmem:[#allocation4 + $0x48] sm:$0xff]
    %v79 = vld [vmem:[#allocation4 + $0x50] sm:$0xff]
    %v80 = vld [vmem:[#allocation4 + $0x58] sm:$0xff]
    %v81 = vld [vmem:[#allocation4 + $0x60] sm:$0xff]
    %v82 = vld [vmem:[#allocation4 + $0x68] sm:$0xff]
    %v83 = vld [vmem:[#allocation4 + $0x70] sm:$0xff]
    %v84 = vld [vmem:[#allocation4 + $0x78] sm:$0xff]
    %v85 = vld [vmem:[#allocation4 + $0x80] sm:$0xff]
    %v86 = vld [vmem:[#allocation4 + $0x88] sm:$0xff]
    %v87 = vld [vmem:[#allocation4 + $0x90] sm:$0xff]
    %v88 = vld [vmem:[#allocation4 + $0x98] sm:$0xff]
    %v89 = vld [vmem:[#allocation4 + $0xa0] sm:$0xff]
    %v90 = vld [vmem:[#allocation4 + $0xa8] sm:$0xff]
    %v91 = vld [vmem:[#allocation4 + $0xb0] sm:$0xff]
    %v92 = vld [vmem:[#allocation4 + $0xb8] sm:$0xff]
    %v93 = vld [vmem:[#allocation4 + $0xc0] sm:$0xff]
    %v94 = vld [vmem:[#allocation4 + $0xc8] sm:$0xff]
    %v95 = vld [vmem:[#allocation4 + $0xd0] sm:$0xff]
    %v96 = vld [vmem:[#allocation4 + $0xd8] sm:$0xff]
    %v97 = vld [vmem:[#allocation4 + $0xe0] sm:$0xff]
    %v98 = vld [vmem:[#allocation4 + $0xe8] sm:$0xff]
    %v99 = vld [vmem:[#allocation4 + $0xf0] sm:$0xff]
    %v100 = vld [vmem:[#allocation4 + $0xf8] sm:$0xff]
    %v101 = vld [vmem:[#allocation4 + $0x100] sm:$0xff]
    %v102 = vld [vmem:[#allocation4 + $0x108] sm:$0xff]
    %v103 = vld [vmem:[#allocation4 + $0x110] sm:$0xff]
    %v104 = vld [vmem:[#allocation4 + $0x118] sm:$0xff]
    %v105 = vld [vmem:[#allocation4 + $0x120] sm:$0xff]
    %v106 = vld [vmem:[#allocation4 + $0x128] sm:$0xff]
    %v107 = vld [vmem:[#allocation4 + $0x130] sm:$0xff]
    %v108 = vld [vmem:[#allocation4 + $0x138] sm:$0xff]
    %v109 = vld [vmem:[#allocation4 + $0x140] sm:$0xff]
    %v110 = vld [vmem:[#allocation4 + $0x148] sm:$0xff]
    %v111 = vld [vmem:[#allocation4 + $0x150] sm:$0xff]
    %v112 = vld [vmem:[#allocation4 + $0x158] sm:$0xff]
    %v113 = vld [vmem:[#allocation4 + $0x160] sm:$0xff]
    %v114 = vld [vmem:[#allocation4 + $0x168] sm:$0xff]
    %v115 = vld [vmem:[#allocation4 + $0x170] sm:$0xff]
    %v116 = vld [vmem:[#allocation4 + $0x178] sm:$0xff]
    %v117 = vld [vmem:[#allocation4 + $0x180] sm:$0xff]
    %v118 = vld [vmem:[#allocation4 + $0x188] sm:$0xff]
    %v119 = vld [vmem:[#allocation4 + $0x190] sm:$0xff]
    %v120 = vld [vmem:[#allocation4 + $0x198] sm:$0xff]
    %v121 = vld [vmem:[#allocation4 + $0x1a0] sm:$0xff]
    %v122 = vld [vmem:[#allocation4 + $0x1a8] sm:$0xff]
    %v123 = vld [vmem:[#allocation4 + $0x1b0] sm:$0xff]
    %v124 = vld [vmem:[#allocation4 + $0x1b8] sm:$0xff]
    %v125 = vld [vmem:[#allocation4 + $0x1c0] sm:$0xff]
    %v126 = vld [vmem:[#allocation4 + $0x1c8] sm:$0xff]
    %v127 = vld [vmem:[#allocation4 + $0x1d0] sm:$0xff]
    %v128 = vld [vmem:[#allocation4 + $0x1d8] sm:$0xff]
    %v129 = vld [vmem:[#allocation4 + $0x1e0] sm:$0xff]
    %v130 = vld [vmem:[#allocation4 + $0x1e8] sm:$0xff]
    %v131 = vld [vmem:[#allocation4 + $0x1f0] sm:$0xff]
    %v132 = vld [vmem:[#allocation4 + $0x1f8] sm:$0xff]
    %v133 = vld [vmem:[%s3] sm:$0xf]
    %v135 = vlaneseq
    %v136 = vshrl.u32 %v135, 7
    %v137 = vsub.s32 0, %v136
    %v138 = vrot.slane %v133, %v137
    %v139 = vlaneseq
    %v140 = vshrl.u32 %v139, 7
    %v141 = vsub.s32 1, %v140
    %v142 = vrot.slane %v133, %v141
    %v143 = vlaneseq
    %v144 = vshrl.u32 %v143, 7
    %v145 = vsub.s32 2, %v144
    %v146 = vrot.slane %v133, %v145
    %v147 = vlaneseq
    %v148 = vshrl.u32 %v147, 7
    %v149 = vsub.s32 3, %v148
    %v150 = vrot.slane %v133, %v149
    %155 = vmatprep.subr.mxu0 %v70
    %156 = vmatpush1.msra.mxu0 %v69
    %157 = vmatprep.subr.mxu0 %v74
    %158 = vmatpush1.msra.mxu0 %v73
    %159 = vmatprep.subr.mxu0 %v78
    %160 = vmatpush1.msra.mxu0 %v77
    %161 = vmatprep.subr.mxu0 %v82
    %162 = vmatpush1.msra.mxu0 %v81
    %163 = vmatprep.subr.mxu0 %v86
    %164 = vmatpush1.msra.mxu0 %v85
    %165 = vmatprep.subr.mxu0 %v90
    %166 = vmatpush1.msra.mxu0 %v89
    %167 = vmatprep.subr.mxu0 %v94
    %168 = vmatpush1.msra.mxu0 %v93
    %169 = vmatprep.subr.mxu0 %v98
    %170 = vmatpush1.msra.mxu0 %v97
    %171 = vmatprep.subr.mxu0 %v102
    %172 = vmatpush1.msra.mxu0 %v101
    %173 = vmatprep.subr.mxu0 %v106
    %174 = vmatpush1.msra.mxu0 %v105
    %175 = vmatprep.subr.mxu0 %v110
    %176 = vmatpush1.msra.mxu0 %v109
    %177 = vmatprep.subr.mxu0 %v114
    %178 = vmatpush1.msra.mxu0 %v113
    %179 = vmatprep.subr.mxu0 %v118
    %180 = vmatpush1.msra.mxu0 %v117
    %181 = vmatprep.subr.mxu0 %v122
    %182 = vmatpush1.msra.mxu0 %v121
    %183 = vmatprep.subr.mxu0 %v126
    %184 = vmatpush1.msra.mxu0 %v125
    %185 = vmatprep.subr.mxu0 %v130
    %186 = vmatpush1.msra.mxu0 %v129
    %187 = vmatprep.subr.mxu0 0.0
    %188 = vmatpush1.msra.mxu0 0.0
    %189 = vmatprep.subr.mxu0 0.0
    %190 = vmatpush1.msra.mxu0 0.0
    %191 = vmatprep.subr.mxu0 0.0
    %192 = vmatpush1.msra.mxu0 0.0
    %193 = vmatprep.subr.mxu0 0.0
    %194 = vmatpush1.msra.mxu0 0.0
    %195 = vmatprep.subr.mxu0 0.0
    %196 = vmatpush1.msra.mxu0 0.0
    %197 = vmatprep.subr.mxu0 0.0
    %198 = vmatpush1.msra.mxu0 0.0
    %199 = vmatprep.subr.mxu0 0.0
    %200 = vmatpush1.msra.mxu0 0.0
    %201 = vmatprep.subr.mxu0 0.0
    %202 = vmatpush1.msra.mxu0 0.0
    %203 = vmatprep.subr.mxu0 0.0
    %204 = vmatpush1.msra.mxu0 0.0
    %205 = vmatprep.subr.mxu0 0.0
    %206 = vmatpush1.msra.mxu0 0.0
    %207 = vmatprep.subr.mxu0 0.0
    %208 = vmatpush1.msra.mxu0 0.0
    %209 = vmatprep.subr.mxu0 0.0
    %210 = vmatpush1.msra.mxu0 0.0
    %211 = vmatprep.subr.mxu0 0.0
    %212 = vmatpush1.msra.mxu0 0.0
    %213 = vmatprep.subr.mxu0 0.0
    %214 = vmatpush1.msra.mxu0 0.0
    %215 = vmatprep.subr.mxu0 0.0
    %216 = vmatpush1.msra.mxu0 0.0
    %217 = vmatprep.subr.mxu0 0.0
    %218 = vmatpush1.msra.mxu0 0.0
    %219 = vmatprep.mubr.f32.mxu0 0.0
    %220 = vmatmul.mubr.f32.gmra.mrb[0].mxu0 %v61
    %v221 = vpop.f32.mrb[0].mxu0
    %v222 = vadd.f32 %v138, %v221
    %v223 = vpop.f32.mrb[0].mxu0
    %v224 = vadd.f32 %v142, %v223
    %225 = vmatprep.mubr.f32.mxu0 0.0
    %226 = vmatmul.mubr.f32.gmra.mrb[0].mxu0 %v62
    %v227 = vpop.f32.mrb[0].mxu0
    %v228 = vadd.f32 %v138, %v227
    %v229 = vpop.f32.mrb[0].mxu0
    %v230 = vadd.f32 %v142, %v229
    %231 = vmatprep.mubr.f32.mxu0 0.0
    %232 = vmatmul.mubr.f32.gmra.mrb[0].mxu0 %v63
    %v233 = vpop.f32.mrb[0].mxu0
    %v234 = vadd.f32 %v138, %v233
    %v235 = vpop.f32.mrb[0].mxu0
    %v236 = vadd.f32 %v142, %v235
    %237 = vmatprep.mubr.f32.mxu0 0.0
    %238 = vmatmul.mubr.f32.gmra.mrb[0].mxu0 %v64
    %v239 = vpop.f32.mrb[0].mxu0
    %v240 = vadd.f32 %v138, %v239
    %v241 = vpop.f32.mrb[0].mxu0
    %v242 = vadd.f32 %v142, %v241
    %243 = vmatprep.mubr.f32.mxu0 0.0
    %244 = vmatmul.mubr.f32.gmra.mrb[0].mxu0 %v65
    %v245 = vpop.f32.mrb[0].mxu0
    %v246 = vadd.f32 %v138, %v245
    %v247 = vpop.f32.mrb[0].mxu0
    %v248 = vadd.f32 %v142, %v247
    %249 = vmatprep.mubr.f32.mxu0 0.0
    %250 = vmatmul.mubr.f32.gmra.mrb[0].mxu0 %v66
    %v251 = vpop.f32.mrb[0].mxu0
    %v252 = vadd.f32 %v138, %v251
    %v253 = vpop.f32.mrb[0].mxu0
    %v254 = vadd.f32 %v142, %v253
    %255 = vmatprep.mubr.f32.mxu0 0.0
    %256 = vmatmul.mubr.f32.gmra.mrb[0].mxu0 %v67
    %v257 = vpop.f32.mrb[0].mxu0
    %v258 = vadd.f32 %v138, %v257
    %v259 = vpop.f32.mrb[0].mxu0
    %v260 = vadd.f32 %v142, %v259
    %261 = vmatprep.mubr.f32.mxu0 0.0
    %262 = vmatmul.mubr.f32.gmra.mrb[0].mxu0 %v68
    %v263 = vpop.f32.mrb[0].mxu0
    %v264 = vadd.f32 %v138, %v263
    %v265 = vpop.f32.mrb[0].mxu0
    %v266 = vadd.f32 %v142, %v265
    %267 = vdwg.mxu0
    %268 = vmatprep.subr.mxu0 %v72
    %269 = vmatpush1.msra.mxu0 %v71
    %270 = vmatprep.subr.mxu0 %v76
    %271 = vmatpush1.msra.mxu0 %v75
    %272 = vmatprep.subr.mxu0 %v80
    %273 = vmatpush1.msra.mxu0 %v79
    %274 = vmatprep.subr.mxu0 %v84
    %275 = vmatpush1.msra.mxu0 %v83
    %276 = vmatprep.subr.mxu0 %v88
    %277 = vmatpush1.msra.mxu0 %v87
    %278 = vmatprep.subr.mxu0 %v92
    %279 = vmatpush1.msra.mxu0 %v91
    %280 = vmatprep.subr.mxu0 %v96
    %281 = vmatpush1.msra.mxu0 %v95
    %282 = vmatprep.subr.mxu0 %v100
    %283 = vmatpush1.msra.mxu0 %v99
    %284 = vmatprep.subr.mxu0 %v104
    %285 = vmatpush1.msra.mxu0 %v103
    %286 = vmatprep.subr.mxu0 %v108
    %287 = vmatpush1.msra.mxu0 %v107
    %288 = vmatprep.subr.mxu0 %v112
    %289 = vmatpush1.msra.mxu0 %v111
    %290 = vmatprep.subr.mxu0 %v116
    %291 = vmatpush1.msra.mxu0 %v115
    %292 = vmatprep.subr.mxu0 %v120
    %293 = vmatpush1.msra.mxu0 %v119
    %294 = vmatprep.subr.mxu0 %v124
    %295 = vmatpush1.msra.mxu0 %v123
    %296 = vmatprep.subr.mxu0 %v128
    %297 = vmatpush1.msra.mxu0 %v127
    %298 = vmatprep.subr.mxu0 %v132
    %299 = vmatpush1.msra.mxu0 %v131
    %300 = vmatprep.subr.mxu0 0.0
    %301 = vmatpush1.msra.mxu0 0.0
    %302 = vmatprep.subr.mxu0 0.0
    %303 = vmatpush1.msra.mxu0 0.0
    %304 = vmatprep.subr.mxu0 0.0
    %305 = vmatpush1.msra.mxu0 0.0
    %306 = vmatprep.subr.mxu0 0.0
    %307 = vmatpush1.msra.mxu0 0.0
    %308 = vmatprep.subr.mxu0 0.0
    %309 = vmatpush1.msra.mxu0 0.0
    %310 = vmatprep.subr.mxu0 0.0
    %311 = vmatpush1.msra.mxu0 0.0
    %312 = vmatprep.subr.mxu0 0.0
    %313 = vmatpush1.msra.mxu0 0.0
    %314 = vmatprep.subr.mxu0 0.0
    %315 = vmatpush1.msra.mxu0 0.0
    %316 = vmatprep.subr.mxu0 0.0
    %317 = vmatpush1.msra.mxu0 0.0
    %318 = vmatprep.subr.mxu0 0.0
    %319 = vmatpush1.msra.mxu0 0.0
    %320 = vmatprep.subr.mxu0 0.0
    %321 = vmatpush1.msra.mxu0 0.0
    %322 = vmatprep.subr.mxu0 0.0
    %323 = vmatpush1.msra.mxu0 0.0
    %324 = vmatprep.subr.mxu0 0.0
    %325 = vmatpush1.msra.mxu0 0.0
    %326 = vmatprep.subr.mxu0 0.0
    %327 = vmatpush1.msra.mxu0 0.0
    %328 = vmatprep.subr.mxu0 0.0
    %329 = vmatpush1.msra.mxu0 0.0
    %330 = vmatprep.subr.mxu0 0.0
    %331 = vmatpush1.msra.mxu0 0.0
    %332 = vmatprep.mubr.f32.mxu0 0.0
    %333 = vmatmul.mubr.f32.gmra.mrb[0].mxu0 %v61
    %v334 = vpop.f32.mrb[0].mxu0
    %v335 = vadd.f32 %v146, %v334
    %v336 = vpop.f32.mrb[0].mxu0
    %v337 = vadd.f32 %v150, %v336
    %338 = vmatprep.mubr.f32.mxu0 0.0
    %339 = vmatmul.mubr.f32.gmra.mrb[0].mxu0 %v62
    %v340 = vpop.f32.mrb[0].mxu0
    %v341 = vadd.f32 %v146, %v340
    %v342 = vpop.f32.mrb[0].mxu0
    %v343 = vadd.f32 %v150, %v342
    %344 = vmatprep.mubr.f32.mxu0 0.0
    %345 = vmatmul.mubr.f32.gmra.mrb[0].mxu0 %v63
    %v346 = vpop.f32.mrb[0].mxu0
    %v347 = vadd.f32 %v146, %v346
    %v348 = vpop.f32.mrb[0].mxu0
    %v349 = vadd.f32 %v150, %v348
    %350 = vmatprep.mubr.f32.mxu0 0.0
    %351 = vmatmul.mubr.f32.gmra.mrb[0].mxu0 %v64
    %v352 = vpop.f32.mrb[0].mxu0
    %v353 = vadd.f32 %v146, %v352
    %v354 = vpop.f32.mrb[0].mxu0
    %v355 = vadd.f32 %v150, %v354
    %356 = vmatprep.mubr.f32.mxu0 0.0
    %357 = vmatmul.mubr.f32.gmra.mrb[0].mxu0 %v65
    %v358 = vpop.f32.mrb[0].mxu0
    %v359 = vadd.f32 %v146, %v358
    %v360 = vpop.f32.mrb[0].mxu0
    %v361 = vadd.f32 %v150, %v360
    %362 = vmatprep.mubr.f32.mxu0 0.0
    %363 = vmatmul.mubr.f32.gmra.mrb[0].mxu0 %v66
    %v364 = vpop.f32.mrb[0].mxu0
    %v365 = vadd.f32 %v146, %v364
    %v366 = vpop.f32.mrb[0].mxu0
    %v367 = vadd.f32 %v150, %v366
    %368 = vmatprep.mubr.f32.mxu0 0.0
    %369 = vmatmul.mubr.f32.gmra.mrb[0].mxu0 %v67
    %v370 = vpop.f32.mrb[0].mxu0
    %v371 = vadd.f32 %v146, %v370
    %v372 = vpop.f32.mrb[0].mxu0
    %v373 = vadd.f32 %v150, %v372
    %374 = vmatprep.mubr.f32.mxu0 0.0
    %375 = vmatmul.mubr.f32.gmra.mrb[0].mxu0 %v68
    %v376 = vpop.f32.mrb[0].mxu0
    %v377 = vadd.f32 %v146, %v376
    %v378 = vpop.f32.mrb[0].mxu0
    %v379 = vadd.f32 %v150, %v378
    %380 = vdwg.mxu0
    %381 = vst [vmem:[#allocation2] sm:$0xff] %v222
    %382 = vst [vmem:[#allocation2 + $0x8] sm:$0xff] %v224
    %383 = vst [vmem:[#allocation2 + $0x10] sm:$0xff] %v335
    %384 = vst [vmem:[#allocation2 + $0x18] sm:$0xff] %v337
    %385 = vst [vmem:[#allocation2 + $0x20] sm:$0xff] %v228
    %386 = vst [vmem:[#allocation2 + $0x28] sm:$0xff] %v230
    %387 = vst [vmem:[#allocation2 + $0x30] sm:$0xff] %v341
    %388 = vst [vmem:[#allocation2 + $0x38] sm:$0xff] %v343
    %389 = vst [vmem:[#allocation2 + $0x40] sm:$0xff] %v234
    %390 = vst [vmem:[#allocation2 + $0x48] sm:$0xff] %v236
    %391 = vst [vmem:[#allocation2 + $0x50] sm:$0xff] %v347
    %392 = vst [vmem:[#allocation2 + $0x58] sm:$0xff] %v349
    %393 = vst [vmem:[#allocation2 + $0x60] sm:$0xff] %v240
    %394 = vst [vmem:[#allocation2 + $0x68] sm:$0xff] %v242
    %395 = vst [vmem:[#allocation2 + $0x70] sm:$0xff] %v353
    %396 = vst [vmem:[#allocation2 + $0x78] sm:$0xff] %v355
    %397 = vst [vmem:[#allocation2 + $0x80] sm:$0xff] %v246
    %398 = vst [vmem:[#allocation2 + $0x88] sm:$0xff] %v248
    %399 = vst [vmem:[#allocation2 + $0x90] sm:$0xff] %v359
    %400 = vst [vmem:[#allocation2 + $0x98] sm:$0xff] %v361
    %401 = vst [vmem:[#allocation2 + $0xa0] sm:$0xff] %v252
    %402 = vst [vmem:[#allocation2 + $0xa8] sm:$0xff] %v254
    %403 = vst [vmem:[#allocation2 + $0xb0] sm:$0xff] %v365
    %404 = vst [vmem:[#allocation2 + $0xb8] sm:$0xff] %v367
    %405 = vst [vmem:[#allocation2 + $0xc0] sm:$0xff] %v258
    %406 = vst [vmem:[#allocation2 + $0xc8] sm:$0xff] %v260
    %407 = vst [vmem:[#allocation2 + $0xd0] sm:$0xff] %v371
    %408 = vst [vmem:[#allocation2 + $0xd8] sm:$0xff] %v373
    %409 = vst [vmem:[#allocation2 + $0xe0] sm:$0xff] %v264
    %410 = vst [vmem:[#allocation2 + $0xe8] sm:$0xff] %v266
    %411 = vst [vmem:[#allocation2 + $0xf0] sm:$0xff] %v377
    %412 = vst [vmem:[#allocation2 + $0xf8] sm:$0xff] %v379
    %s413 = smul.u32 0, 4
    %s414 = smul.addr %s413, 8
    %s415 = scalar_lea.vmem [#allocation2], %s414
    %v416 = vld [vmem:[%s415] sm:$0xff]
    %v417 = vld [vmem:[%s415 + $0x8] sm:$0xff]
    %v418 = vld [vmem:[%s415 + $0x10] sm:$0xff]
    %v419 = vld [vmem:[%s415 + $0x18] sm:$0xff]
    %v420 = vld [vmem:[#allocation7] sm:$0xff]
    %v421 = vld [vmem:[#allocation7 + $0x8] sm:$0xff]
    %v422 = vld [vmem:[#allocation7 + $0x10] sm:$0xff]
    %v423 = vld [vmem:[#allocation7 + $0x18] sm:$0xff]
    %v424 = vld [vmem:[#allocation7 + $0x20] sm:$0xff]
    %v425 = vld [vmem:[#allocation7 + $0x28] sm:$0xff]
    %v426 = vld [vmem:[#allocation7 + $0x30] sm:$0xff]
    %v427 = vld [vmem:[#allocation7 + $0x38] sm:$0xff]
    %v428 = vld [vmem:[#allocation7 + $0x40] sm:$0xff]
    %v429 = vld [vmem:[#allocation7 + $0x48] sm:$0xff]
    %v430 = vld [vmem:[#allocation7 + $0x50] sm:$0xff]
    %v431 = vld [vmem:[#allocation7 + $0x58] sm:$0xff]
    %v432 = vld [vmem:[#allocation7 + $0x60] sm:$0xff]
    %v433 = vld [vmem:[#allocation7 + $0x68] sm:$0xff]
    %v434 = vld [vmem:[#allocation7 + $0x70] sm:$0xff]
    %v435 = vld [vmem:[#allocation7 + $0x78] sm:$0xff]
    %v436 = vld [vmem:[#allocation7 + $0x80] sm:$0xff]
    %v437 = vld [vmem:[#allocation7 + $0x88] sm:$0xff]
    %v438 = vld [vmem:[#allocation7 + $0x90] sm:$0xff]
    %v439 = vld [vmem:[#allocation7 + $0x98] sm:$0xff]
    %v440 = vld [vmem:[#allocation7 + $0xa0] sm:$0xff]
    %v441 = vld [vmem:[#allocation7 + $0xa8] sm:$0xff]
    %v442 = vld [vmem:[#allocation7 + $0xb0] sm:$0xff]
    %v443 = vld [vmem:[#allocation7 + $0xb8] sm:$0xff]
    %v444 = vld [vmem:[#allocation7 + $0xc0] sm:$0xff]
    %v445 = vld [vmem:[#allocation7 + $0xc8] sm:$0xff]
    %v446 = vld [vmem:[#allocation7 + $0xd0] sm:$0xff]
    %v447 = vld [vmem:[#allocation7 + $0xd8] sm:$0xff]
    %v448 = vld [vmem:[#allocation7 + $0xe0] sm:$0xff]
    %v449 = vld [vmem:[#allocation7 + $0xe8] sm:$0xff]
    %v450 = vld [vmem:[#allocation7 + $0xf0] sm:$0xff]
    %v451 = vld [vmem:[#allocation7 + $0xf8] sm:$0xff]
    %v452 = vld [vmem:[#allocation7 + $0x100] sm:$0xff]
    %v453 = vld [vmem:[#allocation7 + $0x108] sm:$0xff]
    %v454 = vld [vmem:[#allocation7 + $0x110] sm:$0xff]
    %v455 = vld [vmem:[#allocation7 + $0x118] sm:$0xff]
    %v456 = vld [vmem:[#allocation7 + $0x120] sm:$0xff]
    %v457 = vld [vmem:[#allocation7 + $0x128] sm:$0xff]
    %v458 = vld [vmem:[#allocation7 + $0x130] sm:$0xff]
    %v459 = vld [vmem:[#allocation7 + $0x138] sm:$0xff]
    %v460 = vld [vmem:[#allocation7 + $0x140] sm:$0xff]
    %v461 = vld [vmem:[#allocation7 + $0x148] sm:$0xff]
    %v462 = vld [vmem:[#allocation7 + $0x150] sm:$0xff]
    %v463 = vld [vmem:[#allocation7 + $0x158] sm:$0xff]
    %v464 = vld [vmem:[#allocation7 + $0x160] sm:$0xff]
    %v465 = vld [vmem:[#allocation7 + $0x168] sm:$0xff]
    %v466 = vld [vmem:[#allocation7 + $0x170] sm:$0xff]
    %v467 = vld [vmem:[#allocation7 + $0x178] sm:$0xff]
    %v468 = vld [vmem:[#allocation7 + $0x180] sm:$0xff]
    %v469 = vld [vmem:[#allocation7 + $0x188] sm:$0xff]
    %v470 = vld [vmem:[#allocation7 + $0x190] sm:$0xff]
    %v471 = vld [vmem:[#allocation7 + $0x198] sm:$0xff]
    %v472 = vld [vmem:[#allocation7 + $0x1a0] sm:$0xff]
    %v473 = vld [vmem:[#allocation7 + $0x1a8] sm:$0xff]
    %v474 = vld [vmem:[#allocation7 + $0x1b0] sm:$0xff]
    %v475 = vld [vmem:[#allocation7 + $0x1b8] sm:$0xff]
    %v476 = vld [vmem:[#allocation7 + $0x1c0] sm:$0xff]
    %v477 = vld [vmem:[#allocation7 + $0x1c8] sm:$0xff]
    %v478 = vld [vmem:[#allocation7 + $0x1d0] sm:$0xff]
    %v479 = vld [vmem:[#allocation7 + $0x1d8] sm:$0xff]
    %v480 = vld [vmem:[#allocation7 + $0x1e0] sm:$0xff]
    %v481 = vld [vmem:[#allocation7 + $0x1e8] sm:$0xff]
    %v482 = vld [vmem:[#allocation7 + $0x1f0] sm:$0xff]
    %v483 = vld [vmem:[#allocation7 + $0x1f8] sm:$0xff]
    %484 = vmatprep.subr.mxu0 %v421
    %485 = vmatpush1.msra.mxu0 %v420
    %486 = vmatprep.subr.mxu0 %v425
    %487 = vmatpush1.msra.mxu0 %v424
    %488 = vmatprep.subr.mxu0 %v429
    %489 = vmatpush1.msra.mxu0 %v428
    %490 = vmatprep.subr.mxu0 %v433
    %491 = vmatpush1.msra.mxu0 %v432
    %492 = vmatprep.subr.mxu0 %v437
    %493 = vmatpush1.msra.mxu0 %v436
    %494 = vmatprep.subr.mxu0 %v441
    %495 = vmatpush1.msra.mxu0 %v440
    %496 = vmatprep.subr.mxu0 %v445
    %497 = vmatpush1.msra.mxu0 %v444
    %498 = vmatprep.subr.mxu0 %v449
    %499 = vmatpush1.msra.mxu0 %v448
    %500 = vmatprep.subr.mxu0 %v453
    %501 = vmatpush1.msra.mxu0 %v452
    %502 = vmatprep.subr.mxu0 %v457
    %503 = vmatpush1.msra.mxu0 %v456
    %504 = vmatprep.subr.mxu0 %v461
    %505 = vmatpush1.msra.mxu0 %v460
    %506 = vmatprep.subr.mxu0 %v465
    %507 = vmatpush1.msra.mxu0 %v464
    %508 = vmatprep.subr.mxu0 %v469
    %509 = vmatpush1.msra.mxu0 %v468
    %510 = vmatprep.subr.mxu0 %v473
    %511 = vmatpush1.msra.mxu0 %v472
    %512 = vmatprep.subr.mxu0 %v477
    %513 = vmatpush1.msra.mxu0 %v476
    %514 = vmatprep.subr.mxu0 %v481
    %515 = vmatpush1.msra.mxu0 %v480
    %516 = vmatprep.subr.mxu0 0.0
    %517 = vmatpush1.msra.mxu0 0.0
    %518 = vmatprep.subr.mxu0 0.0
    %519 = vmatpush1.msra.mxu0 0.0
    %520 = vmatprep.subr.mxu0 0.0
    %521 = vmatpush1.msra.mxu0 0.0
    %522 = vmatprep.subr.mxu0 0.0
    %523 = vmatpush1.msra.mxu0 0.0
    %524 = vmatprep.subr.mxu0 0.0
    %525 = vmatpush1.msra.mxu0 0.0
    %526 = vmatprep.subr.mxu0 0.0
    %527 = vmatpush1.msra.mxu0 0.0
    %528 = vmatprep.subr.mxu0 0.0
    %529 = vmatpush1.msra.mxu0 0.0
    %530 = vmatprep.subr.mxu0 0.0
    %531 = vmatpush1.msra.mxu0 0.0
    %532 = vmatprep.subr.mxu0 0.0
    %533 = vmatpush1.msra.mxu0 0.0
    %534 = vmatprep.subr.mxu0 0.0
    %535 = vmatpush1.msra.mxu0 0.0
    %536 = vmatprep.subr.mxu0 0.0
    %537 = vmatpush1.msra.mxu0 0.0
    %538 = vmatprep.subr.mxu0 0.0
    %539 = vmatpush1.msra.mxu0 0.0
    %540 = vmatprep.subr.mxu0 0.0
    %541 = vmatpush1.msra.mxu0 0.0
    %542 = vmatprep.subr.mxu0 0.0
    %543 = vmatpush1.msra.mxu0 0.0
    %544 = vmatprep.subr.mxu0 0.0
    %545 = vmatpush1.msra.mxu0 0.0
    %546 = vmatprep.subr.mxu0 0.0
    %547 = vmatpush1.msra.mxu0 0.0
    %548 = vmatprep.mubr.f32.mxu0 0.0
    %549 = vmatmul.mubr.f32.gmra.mrb[0].mxu0 0.0
    %v550 = vpop.f32.mrb[0].mxu0
    %v551 = vadd.f32 0.0, %v550
    %v552 = vpop.f32.mrb[0].mxu0
    %v553 = vadd.f32 0.0, %v552
    %554 = vdwg.mxu0
    %555 = vmatprep.subr.mxu0 %v423
    %556 = vmatpush1.msra.mxu0 %v422
    %557 = vmatprep.subr.mxu0 %v427
    %558 = vmatpush1.msra.mxu0 %v426
    %559 = vmatprep.subr.mxu0 %v431
    %560 = vmatpush1.msra.mxu0 %v430
    %561 = vmatprep.subr.mxu0 %v435
    %562 = vmatpush1.msra.mxu0 %v434
    %563 = vmatprep.subr.mxu0 %v439
    %564 = vmatpush1.msra.mxu0 %v438
    %565 = vmatprep.subr.mxu0 %v443
    %566 = vmatpush1.msra.mxu0 %v442
    %567 = vmatprep.subr.mxu0 %v447
    %568 = vmatpush1.msra.mxu0 %v446
    %569 = vmatprep.subr.mxu0 %v451
    %570 = vmatpush1.msra.mxu0 %v450
    %571 = vmatprep.subr.mxu0 %v455
    %572 = vmatpush1.msra.mxu0 %v454
    %573 = vmatprep.subr.mxu0 %v459
    %574 = vmatpush1.msra.mxu0 %v458
    %575 = vmatprep.subr.mxu0 %v463
    %576 = vmatpush1.msra.mxu0 %v462
    %577 = vmatprep.subr.mxu0 %v467
    %578 = vmatpush1.msra.mxu0 %v466
    %579 = vmatprep.subr.mxu0 %v471
    %580 = vmatpush1.msra.mxu0 %v470
    %581 = vmatprep.subr.mxu0 %v475
    %582 = vmatpush1.msra.mxu0 %v474
    %583 = vmatprep.subr.mxu0 %v479
    %584 = vmatpush1.msra.mxu0 %v478
    %585 = vmatprep.subr.mxu0 %v483
    %586 = vmatpush1.msra.mxu0 %v482
    %587 = vmatprep.subr.mxu0 0.0
    %588 = vmatpush1.msra.mxu0 0.0
    %589 = vmatprep.subr.mxu0 0.0
    %590 = vmatpush1.msra.mxu0 0.0
    %591 = vmatprep.subr.mxu0 0.0
    %592 = vmatpush1.msra.mxu0 0.0
    %593 = vmatprep.subr.mxu0 0.0
    %594 = vmatpush1.msra.mxu0 0.0
    %595 = vmatprep.subr.mxu0 0.0
    %596 = vmatpush1.msra.mxu0 0.0
    %597 = vmatprep.subr.mxu0 0.0
    %598 = vmatpush1.msra.mxu0 0.0
    %599 = vmatprep.subr.mxu0 0.0
    %600 = vmatpush1.msra.mxu0 0.0
    %601 = vmatprep.subr.mxu0 0.0
    %602 = vmatpush1.msra.mxu0 0.0
    %603 = vmatprep.subr.mxu0 0.0
    %604 = vmatpush1.msra.mxu0 0.0
    %605 = vmatprep.subr.mxu0 0.0
    %606 = vmatpush1.msra.mxu0 0.0
    %607 = vmatprep.subr.mxu0 0.0
    %608 = vmatpush1.msra.mxu0 0.0
    %609 = vmatprep.subr.mxu0 0.0
    %610 = vmatpush1.msra.mxu0 0.0
    %611 = vmatprep.subr.mxu0 0.0
    %612 = vmatpush1.msra.mxu0 0.0
    %613 = vmatprep.subr.mxu0 0.0
    %614 = vmatpush1.msra.mxu0 0.0
    %615 = vmatprep.subr.mxu0 0.0
    %616 = vmatpush1.msra.mxu0 0.0
    %617 = vmatprep.subr.mxu0 0.0
    %618 = vmatpush1.msra.mxu0 0.0
    %619 = vmatprep.mubr.f32.mxu0 0.0
    %620 = vmatmul.mubr.f32.gmra.mrb[0].mxu0 0.0
    %v621 = vpop.f32.mrb[0].mxu0
    %v622 = vadd.f32 0.0, %v621
    %v623 = vpop.f32.mrb[0].mxu0
    %v624 = vadd.f32 0.0, %v623
    %625 = vdwg.mxu0
    %v626 = vadd.f32 %v416, %v551
    %v627 = vadd.f32 %v417, %v553
    %v628 = vadd.f32 %v418, %v622
    %v629 = vadd.f32 %v419, %v624
    %v630 = vxor.u32 %v626, 2147483648
    %v631 = vmul.f32 %v630, 1.442695
    %v632 = vpow.pop %v631
    %v633 = vadd.f32 %v632, 1.0
    %v634 = vrcp.pop %v633
    %v635 = vmul.f32 1.0, %v634
    %v636 = vxor.u32 %v627, 2147483648
    %v637 = vmul.f32 %v636, 1.442695
    %v638 = vpow.pop %v637
    %v639 = vadd.f32 %v638, 1.0
    %v640 = vrcp.pop %v639
    %v641 = vmul.f32 1.0, %v640
    %v642 = vtanh.pop %v628
    %v643 = vxor.u32 %v629, 2147483648
    %v644 = vmul.f32 %v643, 1.442695
    %v645 = vpow.pop %v644
    %v646 = vadd.f32 %v645, 1.0
    %v647 = vrcp.pop %v646
    %v648 = vmul.f32 1.0, %v647
    %v649 = vmul.f32 %v641, 0.0
    %v650 = vmul.f32 %v635, %v642
    %v651 = vadd.f32 %v649, %v650
    %v652 = vtanh.pop %v651
    %v653 = vmul.f32 %v648, %v652
    %654 = vst [vmem:[#allocation3] sm:$0xff] %v653
    %s655 = smul.u32 1, 4
    %s656 = smul.addr %s655, 8
    %s657 = scalar_lea.vmem [#allocation2], %s656
    %v658 = vld [vmem:[%s657] sm:$0xff]
    %v659 = vld [vmem:[%s657 + $0x8] sm:$0xff]
    %v660 = vld [vmem:[%s657 + $0x10] sm:$0xff]
    %v661 = vld [vmem:[%s657 + $0x18] sm:$0xff]
    %v662 = vld [vmem:[#allocation7] sm:$0xff]
    %v663 = vld [vmem:[#allocation7 + $0x8] sm:$0xff]
    %v664 = vld [vmem:[#allocation7 + $0x10] sm:$0xff]
    %v665 = vld [vmem:[#allocation7 + $0x18] sm:$0xff]
    %v666 = vld [vmem:[#allocation7 + $0x20] sm:$0xff]
    %v667 = vld [vmem:[#allocation7 + $0x28] sm:$0xff]
    %v668 = vld [vmem:[#allocation7 + $0x30] sm:$0xff]
    %v669 = vld [vmem:[#allocation7 + $0x38] sm:$0xff]
    %v670 = vld [vmem:[#allocation7 + $0x40] sm:$0xff]
    %v671 = vld [vmem:[#allocation7 + $0x48] sm:$0xff]
    %v672 = vld [vmem:[#allocation7 + $0x50] sm:$0xff]
    %v673 = vld [vmem:[#allocation7 + $0x58] sm:$0xff]
    %v674 = vld [vmem:[#allocation7 + $0x60] sm:$0xff]
    %v675 = vld [vmem:[#allocation7 + $0x68] sm:$0xff]
    %v676 = vld [vmem:[#allocation7 + $0x70] sm:$0xff]
    %v677 = vld [vmem:[#allocation7 + $0x78] sm:$0xff]
    %v678 = vld [vmem:[#allocation7 + $0x80] sm:$0xff]
    %v679 = vld [vmem:[#allocation7 + $0x88] sm:$0xff]
    %v680 = vld [vmem:[#allocation7 + $0x90] sm:$0xff]
    %v681 = vld [vmem:[#allocation7 + $0x98] sm:$0xff]
    %v682 = vld [vmem:[#allocation7 + $0xa0] sm:$0xff]
    %v683 = vld [vmem:[#allocation7 + $0xa8] sm:$0xff]
    %v684 = vld [vmem:[#allocation7 + $0xb0] sm:$0xff]
    %v685 = vld [vmem:[#allocation7 + $0xb8] sm:$0xff]
    %v686 = vld [vmem:[#allocation7 + $0xc0] sm:$0xff]
    %v687 = vld [vmem:[#allocation7 + $0xc8] sm:$0xff]
    %v688 = vld [vmem:[#allocation7 + $0xd0] sm:$0xff]
    %v689 = vld [vmem:[#allocation7 + $0xd8] sm:$0xff]
    %v690 = vld [vmem:[#allocation7 + $0xe0] sm:$0xff]
    %v691 = vld [vmem:[#allocation7 + $0xe8] sm:$0xff]
    %v692 = vld [vmem:[#allocation7 + $0xf0] sm:$0xff]
    %v693 = vld [vmem:[#allocation7 + $0xf8] sm:$0xff]
    %v694 = vld [vmem:[#allocation7 + $0x100] sm:$0xff]
    %v695 = vld [vmem:[#allocation7 + $0x108] sm:$0xff]
    %v696 = vld [vmem:[#allocation7 + $0x110] sm:$0xff]
    %v697 = vld [vmem:[#allocation7 + $0x118] sm:$0xff]
    %v698 = vld [vmem:[#allocation7 + $0x120] sm:$0xff]
    %v699 = vld [vmem:[#allocation7 + $0x128] sm:$0xff]
    %v700 = vld [vmem:[#allocation7 + $0x130] sm:$0xff]
    %v701 = vld [vmem:[#allocation7 + $0x138] sm:$0xff]
    %v702 = vld [vmem:[#allocation7 + $0x140] sm:$0xff]
    %v703 = vld [vmem:[#allocation7 + $0x148] sm:$0xff]
    %v704 = vld [vmem:[#allocation7 + $0x150] sm:$0xff]
    %v705 = vld [vmem:[#allocation7 + $0x158] sm:$0xff]
    %v706 = vld [vmem:[#allocation7 + $0x160] sm:$0xff]
    %v707 = vld [vmem:[#allocation7 + $0x168] sm:$0xff]
    %v708 = vld [vmem:[#allocation7 + $0x170] sm:$0xff]
    %v709 = vld [vmem:[#allocation7 + $0x178] sm:$0xff]
    %v710 = vld [vmem:[#allocation7 + $0x180] sm:$0xff]
    %v711 = vld [vmem:[#allocation7 + $0x188] sm:$0xff]
    %v712 = vld [vmem:[#allocation7 + $0x190] sm:$0xff]
    %v713 = vld [vmem:[#allocation7 + $0x198] sm:$0xff]
    %v714 = vld [vmem:[#allocation7 + $0x1a0] sm:$0xff]
    %v715 = vld [vmem:[#allocation7 + $0x1a8] sm:$0xff]
    %v716 = vld [vmem:[#allocation7 + $0x1b0] sm:$0xff]
    %v717 = vld [vmem:[#allocation7 + $0x1b8] sm:$0xff]
    %v718 = vld [vmem:[#allocation7 + $0x1c0] sm:$0xff]
    %v719 = vld [vmem:[#allocation7 + $0x1c8] sm:$0xff]
    %v720 = vld [vmem:[#allocation7 + $0x1d0] sm:$0xff]
    %v721 = vld [vmem:[#allocation7 + $0x1d8] sm:$0xff]
    %v722 = vld [vmem:[#allocation7 + $0x1e0] sm:$0xff]
    %v723 = vld [vmem:[#allocation7 + $0x1e8] sm:$0xff]
    %v724 = vld [vmem:[#allocation7 + $0x1f0] sm:$0xff]
    %v725 = vld [vmem:[#allocation7 + $0x1f8] sm:$0xff]
    %726 = vmatprep.subr.mxu0 %v663
    %727 = vmatpush1.msra.mxu0 %v662
    %728 = vmatprep.subr.mxu0 %v667
    %729 = vmatpush1.msra.mxu0 %v666
    %730 = vmatprep.subr.mxu0 %v671
    %731 = vmatpush1.msra.mxu0 %v670
    %732 = vmatprep.subr.mxu0 %v675
    %733 = vmatpush1.msra.mxu0 %v674
    %734 = vmatprep.subr.mxu0 %v679
    %735 = vmatpush1.msra.mxu0 %v678
    %736 = vmatprep.subr.mxu0 %v683
    %737 = vmatpush1.msra.mxu0 %v682
    %738 = vmatprep.subr.mxu0 %v687
    %739 = vmatpush1.msra.mxu0 %v686
    %740 = vmatprep.subr.mxu0 %v691
    %741 = vmatpush1.msra.mxu0 %v690
    %742 = vmatprep.subr.mxu0 %v695
    %743 = vmatpush1.msra.mxu0 %v694
    %744 = vmatprep.subr.mxu0 %v699
    %745 = vmatpush1.msra.mxu0 %v698
    %746 = vmatprep.subr.mxu0 %v703
    %747 = vmatpush1.msra.mxu0 %v702
    %748 = vmatprep.subr.mxu0 %v707
    %749 = vmatpush1.msra.mxu0 %v706
    %750 = vmatprep.subr.mxu0 %v711
    %751 = vmatpush1.msra.mxu0 %v710
    %752 = vmatprep.subr.mxu0 %v715
    %753 = vmatpush1.msra.mxu0 %v714
    %754 = vmatprep.subr.mxu0 %v719
    %755 = vmatpush1.msra.mxu0 %v718
    %756 = vmatprep.subr.mxu0 %v723
    %757 = vmatpush1.msra.mxu0 %v722
    %758 = vmatprep.subr.mxu0 0.0
    %759 = vmatpush1.msra.mxu0 0.0
    %760 = vmatprep.subr.mxu0 0.0
    %761 = vmatpush1.msra.mxu0 0.0
    %762 = vmatprep.subr.mxu0 0.0
    %763 = vmatpush1.msra.mxu0 0.0
    %764 = vmatprep.subr.mxu0 0.0
    %765 = vmatpush1.msra.mxu0 0.0
    %766 = vmatprep.subr.mxu0 0.0
    %767 = vmatpush1.msra.mxu0 0.0
    %768 = vmatprep.subr.mxu0 0.0
    %769 = vmatpush1.msra.mxu0 0.0
    %770 = vmatprep.subr.mxu0 0.0
    %771 = vmatpush1.msra.mxu0 0.0
    %772 = vmatprep.subr.mxu0 0.0
    %773 = vmatpush1.msra.mxu0 0.0
    %774 = vmatprep.subr.mxu0 0.0
    %775 = vmatpush1.msra.mxu0 0.0
    %776 = vmatprep.subr.mxu0 0.0
    %777 = vmatpush1.msra.mxu0 0.0
    %778 = vmatprep.subr.mxu0 0.0
    %779 = vmatpush1.msra.mxu0 0.0
    %780 = vmatprep.subr.mxu0 0.0
    %781 = vmatpush1.msra.mxu0 0.0
    %782 = vmatprep.subr.mxu0 0.0
    %783 = vmatpush1.msra.mxu0 0.0
    %784 = vmatprep.subr.mxu0 0.0
    %785 = vmatpush1.msra.mxu0 0.0
    %786 = vmatprep.subr.mxu0 0.0
    %787 = vmatpush1.msra.mxu0 0.0
    %788 = vmatprep.subr.mxu0 0.0
    %789 = vmatpush1.msra.mxu0 0.0
    %790 = vmatprep.mubr.f32.mxu0 0.0
    %791 = vmatmul.mubr.f32.gmra.mrb[0].mxu0 %v653
    %v792 = vpop.f32.mrb[0].mxu0
    %v793 = vadd.f32 0.0, %v792
    %v794 = vpop.f32.mrb[0].mxu0
    %v795 = vadd.f32 0.0, %v794
    %796 = vdwg.mxu0
    %797 = vmatprep.subr.mxu0 %v665
    %798 = vmatpush1.msra.mxu0 %v664
    %799 = vmatprep.subr.mxu0 %v669
    %800 = vmatpush1.msra.mxu0 %v668
    %801 = vmatprep.subr.mxu0 %v673
    %802 = vmatpush1.msra.mxu0 %v672
    %803 = vmatprep.subr.mxu0 %v677
    %804 = vmatpush1.msra.mxu0 %v676
    %805 = vmatprep.subr.mxu0 %v681
    %806 = vmatpush1.msra.mxu0 %v680
    %807 = vmatprep.subr.mxu0 %v685
    %808 = vmatpush1.msra.mxu0 %v684
    %809 = vmatprep.subr.mxu0 %v689
    %810 = vmatpush1.msra.mxu0 %v688
    %811 = vmatprep.subr.mxu0 %v693
    %812 = vmatpush1.msra.mxu0 %v692
    %813 = vmatprep.subr.mxu0 %v697
    %814 = vmatpush1.msra.mxu0 %v696
    %815 = vmatprep.subr.mxu0 %v701
    %816 = vmatpush1.msra.mxu0 %v700
    %817 = vmatprep.subr.mxu0 %v705
    %818 = vmatpush1.msra.mxu0 %v704
    %819 = vmatprep.subr.mxu0 %v709
    %820 = vmatpush1.msra.mxu0 %v708
    %821 = vmatprep.subr.mxu0 %v713
    %822 = vmatpush1.msra.mxu0 %v712
    %823 = vmatprep.subr.mxu0 %v717
    %824 = vmatpush1.msra.mxu0 %v716
    %825 = vmatprep.subr.mxu0 %v721
    %826 = vmatpush1.msra.mxu0 %v720
    %827 = vmatprep.subr.mxu0 %v725
    %828 = vmatpush1.msra.mxu0 %v724
    %829 = vmatprep.subr.mxu0 0.0
    %830 = vmatpush1.msra.mxu0 0.0
    %831 = vmatprep.subr.mxu0 0.0
    %832 = vmatpush1.msra.mxu0 0.0
    %833 = vmatprep.subr.mxu0 0.0
    %834 = vmatpush1.msra.mxu0 0.0
    %835 = vmatprep.subr.mxu0 0.0
    %836 = vmatpush1.msra.mxu0 0.0
    %837 = vmatprep.subr.mxu0 0.0
    %838 = vmatpush1.msra.mxu0 0.0
    %839 = vmatprep.subr.mxu0 0.0
    %840 = vmatpush1.msra.mxu0 0.0
    %841 = vmatprep.subr.mxu0 0.0
    %842 = vmatpush1.msra.mxu0 0.0
    %843 = vmatprep.subr.mxu0 0.0
    %844 = vmatpush1.msra.mxu0 0.0
    %845 = vmatprep.subr.mxu0 0.0
    %846 = vmatpush1.msra.mxu0 0.0
    %847 = vmatprep.subr.mxu0 0.0
    %848 = vmatpush1.msra.mxu0 0.0
    %849 = vmatprep.subr.mxu0 0.0
    %850 = vmatpush1.msra.mxu0 0.0
    %851 = vmatprep.subr.mxu0 0.0
    %852 = vmatpush1.msra.mxu0 0.0
    %853 = vmatprep.subr.mxu0 0.0
    %854 = vmatpush1.msra.mxu0 0.0
    %855 = vmatprep.subr.mxu0 0.0
    %856 = vmatpush1.msra.mxu0 0.0
    %857 = vmatprep.subr.mxu0 0.0
    %858 = vmatpush1.msra.mxu0 0.0
    %859 = vmatprep.subr.mxu0 0.0
    %860 = vmatpush1.msra.mxu0 0.0
    %861 = vmatprep.mubr.f32.mxu0 0.0
    %862 = vmatmul.mubr.f32.gmra.mrb[0].mxu0 %v653
    %v863 = vpop.f32.mrb[0].mxu0
    %v864 = vadd.f32 0.0, %v863
    %v865 = vpop.f32.mrb[0].mxu0
    %v866 = vadd.f32 0.0, %v865
    %867 = vdwg.mxu0
    %v868 = vadd.f32 %v658, %v793
    %v869 = vadd.f32 %v659, %v795
    %v870 = vadd.f32 %v660, %v864
    %v871 = vadd.f32 %v661, %v866
    %v872 = vxor.u32 %v868, 2147483648
    %v873 = vmul.f32 %v872, 1.442695
    %v874 = vpow.pop %v873
    %v875 = vadd.f32 %v874, 1.0
    %v876 = vrcp.pop %v875
    %v877 = vmul.f32 1.0, %v876
    %v878 = vxor.u32 %v869, 2147483648
    %v879 = vmul.f32 %v878, 1.442695
    %v880 = vpow.pop %v879
    %v881 = vadd.f32 %v880, 1.0
    %v882 = vrcp.pop %v881
    %v883 = vmul.f32 1.0, %v882
    %v884 = vtanh.pop %v870
    %v885 = vxor.u32 %v871, 2147483648
    %v886 = vmul.f32 %v885, 1.442695
    %v887 = vpow.pop %v886
    %v888 = vadd.f32 %v887, 1.0
    %v889 = vrcp.pop %v888
    %v890 = vmul.f32 1.0, %v889
    %v891 = vmul.f32 %v883, %v651
    %v892 = vmul.f32 %v877, %v884
    %v893 = vadd.f32 %v891, %v892
    %v894 = vtanh.pop %v893
    %v895 = vmul.f32 %v890, %v894
    %s896 = scalar_lea.vmem [#allocation3], 8
    %897 = vst [vmem:[%s896] sm:$0xff] %v895
    %s898 = smul.u32 2, 4
    %s899 = smul.addr %s898, 8
    %s900 = scalar_lea.vmem [#allocation2], %s899
    %v901 = vld [vmem:[%s900] sm:$0xff]
    %v902 = vld [vmem:[%s900 + $0x8] sm:$0xff]
    %v903 = vld [vmem:[%s900 + $0x10] sm:$0xff]
    %v904 = vld [vmem:[%s900 + $0x18] sm:$0xff]
    %v905 = vld [vmem:[#allocation7] sm:$0xff]
    %v906 = vld [vmem:[#allocation7 + $0x8] sm:$0xff]
    %v907 = vld [vmem:[#allocation7 + $0x10] sm:$0xff]
    %v908 = vld [vmem:[#allocation7 + $0x18] sm:$0xff]
    %v909 = vld [vmem:[#allocation7 + $0x20] sm:$0xff]
    %v910 = vld [vmem:[#allocation7 + $0x28] sm:$0xff]
    %v911 = vld [vmem:[#allocation7 + $0x30] sm:$0xff]
    %v912 = vld [vmem:[#allocation7 + $0x38] sm:$0xff]
    %v913 = vld [vmem:[#allocation7 + $0x40] sm:$0xff]
    %v914 = vld [vmem:[#allocation7 + $0x48] sm:$0xff]
    %v915 = vld [vmem:[#allocation7 + $0x50] sm:$0xff]
    %v916 = vld [vmem:[#allocation7 + $0x58] sm:$0xff]
    %v917 = vld [vmem:[#allocation7 + $0x60] sm:$0xff]
    %v918 = vld [vmem:[#allocation7 + $0x68] sm:$0xff]
    %v919 = vld [vmem:[#allocation7 + $0x70] sm:$0xff]
    %v920 = vld [vmem:[#allocation7 + $0x78] sm:$0xff]
    %v921 = vld [vmem:[#allocation7 + $0x80] sm:$0xff]
    %v922 = vld [vmem:[#allocation7 + $0x88] sm:$0xff]
    %v923 = vld [vmem:[#allocation7 + $0x90] sm:$0xff]
    %v924 = vld [vmem:[#allocation7 + $0x98] sm:$0xff]
    %v925 = vld [vmem:[#allocation7 + $0xa0] sm:$0xff]
    %v926 = vld [vmem:[#allocation7 + $0xa8] sm:$0xff]
    %v927 = vld [vmem:[#allocation7 + $0xb0] sm:$0xff]
    %v928 = vld [vmem:[#allocation7 + $0xb8] sm:$0xff]
    %v929 = vld [vmem:[#allocation7 + $0xc0] sm:$0xff]
    %v930 = vld [vmem:[#allocation7 + $0xc8] sm:$0xff]
    %v931 = vld [vmem:[#allocation7 + $0xd0] sm:$0xff]
    %v932 = vld [vmem:[#allocation7 + $0xd8] sm:$0xff]
    %v933 = vld [vmem:[#allocation7 + $0xe0] sm:$0xff]
    %v934 = vld [vmem:[#allocation7 + $0xe8] sm:$0xff]
    %v935 = vld [vmem:[#allocation7 + $0xf0] sm:$0xff]
    %v936 = vld [vmem:[#allocation7 + $0xf8] sm:$0xff]
    %v937 = vld [vmem:[#allocation7 + $0x100] sm:$0xff]
    %v938 = vld [vmem:[#allocation7 + $0x108] sm:$0xff]
    %v939 = vld [vmem:[#allocation7 + $0x110] sm:$0xff]
    %v940 = vld [vmem:[#allocation7 + $0x118] sm:$0xff]
    %v941 = vld [vmem:[#allocation7 + $0x120] sm:$0xff]
    %v942 = vld [vmem:[#allocation7 + $0x128] sm:$0xff]
    %v943 = vld [vmem:[#allocation7 + $0x130] sm:$0xff]
    %v944 = vld [vmem:[#allocation7 + $0x138] sm:$0xff]
    %v945 = vld [vmem:[#allocation7 + $0x140] sm:$0xff]
    %v946 = vld [vmem:[#allocation7 + $0x148] sm:$0xff]
    %v947 = vld [vmem:[#allocation7 + $0x150] sm:$0xff]
    %v948 = vld [vmem:[#allocation7 + $0x158] sm:$0xff]
    %v949 = vld [vmem:[#allocation7 + $0x160] sm:$0xff]
    %v950 = vld [vmem:[#allocation7 + $0x168] sm:$0xff]
    %v951 = vld [vmem:[#allocation7 + $0x170] sm:$0xff]
    %v952 = vld [vmem:[#allocation7 + $0x178] sm:$0xff]
    %v953 = vld [vmem:[#allocation7 + $0x180] sm:$0xff]
    %v954 = vld [vmem:[#allocation7 + $0x188] sm:$0xff]
    %v955 = vld [vmem:[#allocation7 + $0x190] sm:$0xff]
    %v956 = vld [vmem:[#allocation7 + $0x198] sm:$0xff]
    %v957 = vld [vmem:[#allocation7 + $0x1a0] sm:$0xff]
    %v958 = vld [vmem:[#allocation7 + $0x1a8] sm:$0xff]
    %v959 = vld [vmem:[#allocation7 + $0x1b0] sm:$0xff]
    %v960 = vld [vmem:[#allocation7 + $0x1b8] sm:$0xff]
    %v961 = vld [vmem:[#allocation7 + $0x1c0] sm:$0xff]
    %v962 = vld [vmem:[#allocation7 + $0x1c8] sm:$0xff]
    %v963 = vld [vmem:[#allocation7 + $0x1d0] sm:$0xff]
    %v964 = vld [vmem:[#allocation7 + $0x1d8] sm:$0xff]
    %v965 = vld [vmem:[#allocation7 + $0x1e0] sm:$0xff]
    %v966 = vld [vmem:[#allocation7 + $0x1e8] sm:$0xff]
    %v967 = vld [vmem:[#allocation7 + $0x1f0] sm:$0xff]
    %v968 = vld [vmem:[#allocation7 + $0x1f8] sm:$0xff]
    %969 = vmatprep.subr.mxu0 %v906
    %970 = vmatpush1.msra.mxu0 %v905
    %971 = vmatprep.subr.mxu0 %v910
    %972 = vmatpush1.msra.mxu0 %v909
    %973 = vmatprep.subr.mxu0 %v914
    %974 = vmatpush1.msra.mxu0 %v913
    %975 = vmatprep.subr.mxu0 %v918
    %976 = vmatpush1.msra.mxu0 %v917
    %977 = vmatprep.subr.mxu0 %v922
    %978 = vmatpush1.msra.mxu0 %v921
    %979 = vmatprep.subr.mxu0 %v926
    %980 = vmatpush1.msra.mxu0 %v925
    %981 = vmatprep.subr.mxu0 %v930
    %982 = vmatpush1.msra.mxu0 %v929
    %983 = vmatprep.subr.mxu0 %v934
    %984 = vmatpush1.msra.mxu0 %v933
    %985 = vmatprep.subr.mxu0 %v938
    %986 = vmatpush1.msra.mxu0 %v937
    %987 = vmatprep.subr.mxu0 %v942
    %988 = vmatpush1.msra.mxu0 %v941
    %989 = vmatprep.subr.mxu0 %v946
    %990 = vmatpush1.msra.mxu0 %v945
    %991 = vmatprep.subr.mxu0 %v950
    %992 = vmatpush1.msra.mxu0 %v949
    %993 = vmatprep.subr.mxu0 %v954
    %994 = vmatpush1.msra.mxu0 %v953
    %995 = vmatprep.subr.mxu0 %v958
    %996 = vmatpush1.msra.mxu0 %v957
    %997 = vmatprep.subr.mxu0 %v962
    %998 = vmatpush1.msra.mxu0 %v961
    %999 = vmatprep.subr.mxu0 %v966
    %1000 = vmatpush1.msra.mxu0 %v965
    %1001 = vmatprep.subr.mxu0 0.0
    %1002 = vmatpush1.msra.mxu0 0.0
    %1003 = vmatprep.subr.mxu0 0.0
    %1004 = vmatpush1.msra.mxu0 0.0
    %1005 = vmatprep.subr.mxu0 0.0
    %1006 = vmatpush1.msra.mxu0 0.0
    %1007 = vmatprep.subr.mxu0 0.0
    %1008 = vmatpush1.msra.mxu0 0.0
    %1009 = vmatprep.subr.mxu0 0.0
    %1010 = vmatpush1.msra.mxu0 0.0
    %1011 = vmatprep.subr.mxu0 0.0
    %1012 = vmatpush1.msra.mxu0 0.0
    %1013 = vmatprep.subr.mxu0 0.0
    %1014 = vmatpush1.msra.mxu0 0.0
    %1015 = vmatprep.subr.mxu0 0.0
    %1016 = vmatpush1.msra.mxu0 0.0
    %1017 = vmatprep.subr.mxu0 0.0
    %1018 = vmatpush1.msra.mxu0 0.0
    %1019 = vmatprep.subr.mxu0 0.0
    %1020 = vmatpush1.msra.mxu0 0.0
    %1021 = vmatprep.subr.mxu0 0.0
    %1022 = vmatpush1.msra.mxu0 0.0
    %1023 = vmatprep.subr.mxu0 0.0
    %1024 = vmatpush1.msra.mxu0 0.0
    %1025 = vmatprep.subr.mxu0 0.0
    %1026 = vmatpush1.msra.mxu0 0.0
    %1027 = vmatprep.subr.mxu0 0.0
    %1028 = vmatpush1.msra.mxu0 0.0
    %1029 = vmatprep.subr.mxu0 0.0
    %1030 = vmatpush1.msra.mxu0 0.0
    %1031 = vmatprep.subr.mxu0 0.0
    %1032 = vmatpush1.msra.mxu0 0.0
    %1033 = vmatprep.mubr.f32.mxu0 0.0
    %1034 = vmatmul.mubr.f32.gmra.mrb[0].mxu0 %v895
    %v1035 = vpop.f32.mrb[0].mxu0
    %v1036 = vadd.f32 0.0, %v1035
    %v1037 = vpop.f32.mrb[0].mxu0
    %v1038 = vadd.f32 0.0, %v1037
    %1039 = vdwg.mxu0
    %1040 = vmatprep.subr.mxu0 %v908
    %1041 = vmatpush1.msra.mxu0 %v907
    %1042 = vmatprep.subr.mxu0 %v912
    %1043 = vmatpush1.msra.mxu0 %v911
    %1044 = vmatprep.subr.mxu0 %v916
    %1045 = vmatpush1.msra.mxu0 %v915
    %1046 = vmatprep.subr.mxu0 %v920
    %1047 = vmatpush1.msra.mxu0 %v919
    %1048 = vmatprep.subr.mxu0 %v924
    %1049 = vmatpush1.msra.mxu0 %v923
    %1050 = vmatprep.subr.mxu0 %v928
    %1051 = vmatpush1.msra.mxu0 %v927
    %1052 = vmatprep.subr.mxu0 %v932
    %1053 = vmatpush1.msra.mxu0 %v931
    %1054 = vmatprep.subr.mxu0 %v936
    %1055 = vmatpush1.msra.mxu0 %v935
    %1056 = vmatprep.subr.mxu0 %v940
    %1057 = vmatpush1.msra.mxu0 %v939
    %1058 = vmatprep.subr.mxu0 %v944
    %1059 = vmatpush1.msra.mxu0 %v943
    %1060 = vmatprep.subr.mxu0 %v948
    %1061 = vmatpush1.msra.mxu0 %v947
    %1062 = vmatprep.subr.mxu0 %v952
    %1063 = vmatpush1.msra.mxu0 %v951
    %1064 = vmatprep.subr.mxu0 %v956
    %1065 = vmatpush1.msra.mxu0 %v955
    %1066 = vmatprep.subr.mxu0 %v960
    %1067 = vmatpush1.msra.mxu0 %v959
    %1068 = vmatprep.subr.mxu0 %v964
    %1069 = vmatpush1.msra.mxu0 %v963
    %1070 = vmatprep.subr.mxu0 %v968
    %1071 = vmatpush1.msra.mxu0 %v967
    %1072 = vmatprep.subr.mxu0 0.0
    %1073 = vmatpush1.msra.mxu0 0.0
    %1074 = vmatprep.subr.mxu0 0.0
    %1075 = vmatpush1.msra.mxu0 0.0
    %1076 = vmatprep.subr.mxu0 0.0
    %1077 = vmatpush1.msra.mxu0 0.0
    %1078 = vmatprep.subr.mxu0 0.0
    %1079 = vmatpush1.msra.mxu0 0.0
    %1080 = vmatprep.subr.mxu0 0.0
    %1081 = vmatpush1.msra.mxu0 0.0
    %1082 = vmatprep.subr.mxu0 0.0
    %1083 = vmatpush1.msra.mxu0 0.0
    %1084 = vmatprep.subr.mxu0 0.0
    %1085 = vmatpush1.msra.mxu0 0.0
    %1086 = vmatprep.subr.mxu0 0.0
    %1087 = vmatpush1.msra.mxu0 0.0
    %1088 = vmatprep.subr.mxu0 0.0
    %1089 = vmatpush1.msra.mxu0 0.0
    %1090 = vmatprep.subr.mxu0 0.0
    %1091 = vmatpush1.msra.mxu0 0.0
    %1092 = vmatprep.subr.mxu0 0.0
    %1093 = vmatpush1.msra.mxu0 0.0
    %1094 = vmatprep.subr.mxu0 0.0
    %1095 = vmatpush1.msra.mxu0 0.0
    %1096 = vmatprep.subr.mxu0 0.0
    %1097 = vmatpush1.msra.mxu0 0.0
    %1098 = vmatprep.subr.mxu0 0.0
    %1099 = vmatpush1.msra.mxu0 0.0
    %1100 = vmatprep.subr.mxu0 0.0
    %1101 = vmatpush1.msra.mxu0 0.0
    %1102 = vmatprep.subr.mxu0 0.0
    %1103 = vmatpush1.msra.mxu0 0.0
    %1104 = vmatprep.mubr.f32.mxu0 0.0
    %1105 = vmatmul.mubr.f32.gmra.mrb[0].mxu0 %v895
    %v1106 = vpop.f32.mrb[0].mxu0
    %v1107 = vadd.f32 0.0, %v1106
    %v1108 = vpop.f32.mrb[0].mxu0
    %v1109 = vadd.f32 0.0, %v1108
    %1110 = vdwg.mxu0
    %v1111 = vadd.f32 %v901, %v1036
    %v1112 = vadd.f32 %v902, %v1038
    %v1113 = vadd.f32 %v903, %v1107
    %v1114 = vadd.f32 %v904, %v1109
    %v1115 = vxor.u32 %v1111, 2147483648
    %v1116 = vmul.f32 %v1115, 1.442695
    %v1117 = vpow.pop %v1116
    %v1118 = vadd.f32 %v1117, 1.0
    %v1119 = vrcp.pop %v1118
    %v1120 = vmul.f32 1.0, %v1119
    %v1121 = vxor.u32 %v1112, 2147483648
    %v1122 = vmul.f32 %v1121, 1.442695
    %v1123 = vpow.pop %v1122
    %v1124 = vadd.f32 %v1123, 1.0
    %v1125 = vrcp.pop %v1124
    %v1126 = vmul.f32 1.0, %v1125
    %v1127 = vtanh.pop %v1113
    %v1128 = vxor.u32 %v1114, 2147483648
    %v1129 = vmul.f32 %v1128, 1.442695
    %v1130 = vpow.pop %v1129
    %v1131 = vadd.f32 %v1130, 1.0
    %v1132 = vrcp.pop %v1131
    %v1133 = vmul.f32 1.0, %v1132
    %v1134 = vmul.f32 %v1126, %v893
    %v1135 = vmul.f32 %v1120, %v1127
    %v1136 = vadd.f32 %v1134, %v1135
    %v1137 = vtanh.pop %v1136
    %v1138 = vmul.f32 %v1133, %v1137
    %s1139 = scalar_lea.vmem [#allocation3], 16
    %1140 = vst [vmem:[%s1139] sm:$0xff] %v1138
    %s1141 = smul.u32 3, 4
    %s1142 = smul.addr %s1141, 8
    %s1143 = scalar_lea.vmem [#allocation2], %s1142
    %v1144 = vld [vmem:[%s1143] sm:$0xff]
    %v1145 = vld [vmem:[%s1143 + $0x8] sm:$0xff]
    %v1146 = vld [vmem:[%s1143 + $0x10] sm:$0xff]
    %v1147 = vld [vmem:[%s1143 + $0x18] sm:$0xff]
    %v1148 = vld [vmem:[#allocation7] sm:$0xff]
    %v1149 = vld [vmem:[#allocation7 + $0x8] sm:$0xff]
    %v1150 = vld [vmem:[#allocation7 + $0x10] sm:$0xff]
    %v1151 = vld [vmem:[#allocation7 + $0x18] sm:$0xff]
    %v1152 = vld [vmem:[#allocation7 + $0x20] sm:$0xff]
    %v1153 = vld [vmem:[#allocation7 + $0x28] sm:$0xff]
    %v1154 = vld [vmem:[#allocation7 + $0x30] sm:$0xff]
    %v1155 = vld [vmem:[#allocation7 + $0x38] sm:$0xff]
    %v1156 = vld [vmem:[#allocation7 + $0x40] sm:$0xff]
    %v1157 = vld [vmem:[#allocation7 + $0x48] sm:$0xff]
    %v1158 = vld [vmem:[#allocation7 + $0x50] sm:$0xff]
    %v1159 = vld [vmem:[#allocation7 + $0x58] sm:$0xff]
    %v1160 = vld [vmem:[#allocation7 + $0x60] sm:$0xff]
    %v1161 = vld [vmem:[#allocation7 + $0x68] sm:$0xff]
    %v1162 = vld [vmem:[#allocation7 + $0x70] sm:$0xff]
    %v1163 = vld [vmem:[#allocation7 + $0x78] sm:$0xff]
    %v1164 = vld [vmem:[#allocation7 + $0x80] sm:$0xff]
    %v1165 = vld [vmem:[#allocation7 + $0x88] sm:$0xff]
    %v1166 = vld [vmem:[#allocation7 + $0x90] sm:$0xff]
    %v1167 = vld [vmem:[#allocation7 + $0x98] sm:$0xff]
    %v1168 = vld [vmem:[#allocation7 + $0xa0] sm:$0xff]
    %v1169 = vld [vmem:[#allocation7 + $0xa8] sm:$0xff]
    %v1170 = vld [vmem:[#allocation7 + $0xb0] sm:$0xff]
    %v1171 = vld [vmem:[#allocation7 + $0xb8] sm:$0xff]
    %v1172 = vld [vmem:[#allocation7 + $0xc0] sm:$0xff]
    %v1173 = vld [vmem:[#allocation7 + $0xc8] sm:$0xff]
    %v1174 = vld [vmem:[#allocation7 + $0xd0] sm:$0xff]
    %v1175 = vld [vmem:[#allocation7 + $0xd8] sm:$0xff]
    %v1176 = vld [vmem:[#allocation7 + $0xe0] sm:$0xff]
    %v1177 = vld [vmem:[#allocation7 + $0xe8] sm:$0xff]
    %v1178 = vld [vmem:[#allocation7 + $0xf0] sm:$0xff]
    %v1179 = vld [vmem:[#allocation7 + $0xf8] sm:$0xff]
    %v1180 = vld [vmem:[#allocation7 + $0x100] sm:$0xff]
    %v1181 = vld [vmem:[#allocation7 + $0x108] sm:$0xff]
    %v1182 = vld [vmem:[#allocation7 + $0x110] sm:$0xff]
    %v1183 = vld [vmem:[#allocation7 + $0x118] sm:$0xff]
    %v1184 = vld [vmem:[#allocation7 + $0x120] sm:$0xff]
    %v1185 = vld [vmem:[#allocation7 + $0x128] sm:$0xff]
    %v1186 = vld [vmem:[#allocation7 + $0x130] sm:$0xff]
    %v1187 = vld [vmem:[#allocation7 + $0x138] sm:$0xff]
    %v1188 = vld [vmem:[#allocation7 + $0x140] sm:$0xff]
    %v1189 = vld [vmem:[#allocation7 + $0x148] sm:$0xff]
    %v1190 = vld [vmem:[#allocation7 + $0x150] sm:$0xff]
    %v1191 = vld [vmem:[#allocation7 + $0x158] sm:$0xff]
    %v1192 = vld [vmem:[#allocation7 + $0x160] sm:$0xff]
    %v1193 = vld [vmem:[#allocation7 + $0x168] sm:$0xff]
    %v1194 = vld [vmem:[#allocation7 + $0x170] sm:$0xff]
    %v1195 = vld [vmem:[#allocation7 + $0x178] sm:$0xff]
    %v1196 = vld [vmem:[#allocation7 + $0x180] sm:$0xff]
    %v1197 = vld [vmem:[#allocation7 + $0x188] sm:$0xff]
    %v1198 = vld [vmem:[#allocation7 + $0x190] sm:$0xff]
    %v1199 = vld [vmem:[#allocation7 + $0x198] sm:$0xff]
    %v1200 = vld [vmem:[#allocation7 + $0x1a0] sm:$0xff]
    %v1201 = vld [vmem:[#allocation7 + $0x1a8] sm:$0xff]
    %v1202 = vld [vmem:[#allocation7 + $0x1b0] sm:$0xff]
    %v1203 = vld [vmem:[#allocation7 + $0x1b8] sm:$0xff]
    %v1204 = vld [vmem:[#allocation7 + $0x1c0] sm:$0xff]
    %v1205 = vld [vmem:[#allocation7 + $0x1c8] sm:$0xff]
    %v1206 = vld [vmem:[#allocation7 + $0x1d0] sm:$0xff]
    %v1207 = vld [vmem:[#allocation7 + $0x1d8] sm:$0xff]
    %v1208 = vld [vmem:[#allocation7 + $0x1e0] sm:$0xff]
    %v1209 = vld [vmem:[#allocation7 + $0x1e8] sm:$0xff]
    %v1210 = vld [vmem:[#allocation7 + $0x1f0] sm:$0xff]
    %v1211 = vld [vmem:[#allocation7 + $0x1f8] sm:$0xff]
    %1212 = vmatprep.subr.mxu0 %v1149
    %1213 = vmatpush1.msra.mxu0 %v1148
    %1214 = vmatprep.subr.mxu0 %v1153
    %1215 = vmatpush1.msra.mxu0 %v1152
    %1216 = vmatprep.subr.mxu0 %v1157
    %1217 = vmatpush1.msra.mxu0 %v1156
    %1218 = vmatprep.subr.mxu0 %v1161
    %1219 = vmatpush1.msra.mxu0 %v1160
    %1220 = vmatprep.subr.mxu0 %v1165
    %1221 = vmatpush1.msra.mxu0 %v1164
    %1222 = vmatprep.subr.mxu0 %v1169
    %1223 = vmatpush1.msra.mxu0 %v1168
    %1224 = vmatprep.subr.mxu0 %v1173
    %1225 = vmatpush1.msra.mxu0 %v1172
    %1226 = vmatprep.subr.mxu0 %v1177
    %1227 = vmatpush1.msra.mxu0 %v1176
    %1228 = vmatprep.subr.mxu0 %v1181
    %1229 = vmatpush1.msra.mxu0 %v1180
    %1230 = vmatprep.subr.mxu0 %v1185
    %1231 = vmatpush1.msra.mxu0 %v1184
    %1232 = vmatprep.subr.mxu0 %v1189
    %1233 = vmatpush1.msra.mxu0 %v1188
    %1234 = vmatprep.subr.mxu0 %v1193
    %1235 = vmatpush1.msra.mxu0 %v1192
    %1236 = vmatprep.subr.mxu0 %v1197
    %1237 = vmatpush1.msra.mxu0 %v1196
    %1238 = vmatprep.subr.mxu0 %v1201
    %1239 = vmatpush1.msra.mxu0 %v1200
    %1240 = vmatprep.subr.mxu0 %v1205
    %1241 = vmatpush1.msra.mxu0 %v1204
    %1242 = vmatprep.subr.mxu0 %v1209
    %1243 = vmatpush1.msra.mxu0 %v1208
    %1244 = vmatprep.subr.mxu0 0.0
    %1245 = vmatpush1.msra.mxu0 0.0
    %1246 = vmatprep.subr.mxu0 0.0
    %1247 = vmatpush1.msra.mxu0 0.0
    %1248 = vmatprep.subr.mxu0 0.0
    %1249 = vmatpush1.msra.mxu0 0.0
    %1250 = vmatprep.subr.mxu0 0.0
    %1251 = vmatpush1.msra.mxu0 0.0
    %1252 = vmatprep.subr.mxu0 0.0
    %1253 = vmatpush1.msra.mxu0 0.0
    %1254 = vmatprep.subr.mxu0 0.0
    %1255 = vmatpush1.msra.mxu0 0.0
    %1256 = vmatprep.subr.mxu0 0.0
    %1257 = vmatpush1.msra.mxu0 0.0
    %1258 = vmatprep.subr.mxu0 0.0
    %1259 = vmatpush1.msra.mxu0 0.0
    %1260 = vmatprep.subr.mxu0 0.0
    %1261 = vmatpush1.msra.mxu0 0.0
    %1262 = vmatprep.subr.mxu0 0.0
    %1263 = vmatpush1.msra.mxu0 0.0
    %1264 = vmatprep.subr.mxu0 0.0
    %1265 = vmatpush1.msra.mxu0 0.0
    %1266 = vmatprep.subr.mxu0 0.0
    %1267 = vmatpush1.msra.mxu0 0.0
    %1268 = vmatprep.subr.mxu0 0.0
    %1269 = vmatpush1.msra.mxu0 0.0
    %1270 = vmatprep.subr.mxu0 0.0
    %1271 = vmatpush1.msra.mxu0 0.0
    %1272 = vmatprep.subr.mxu0 0.0
    %1273 = vmatpush1.msra.mxu0 0.0
    %1274 = vmatprep.subr.mxu0 0.0
    %1275 = vmatpush1.msra.mxu0 0.0
    %1276 = vmatprep.mubr.f32.mxu0 0.0
    %1277 = vmatmul.mubr.f32.gmra.mrb[0].mxu0 %v1138
    %v1278 = vpop.f32.mrb[0].mxu0
    %v1279 = vadd.f32 0.0, %v1278
    %v1280 = vpop.f32.mrb[0].mxu0
    %v1281 = vadd.f32 0.0, %v1280
    %1282 = vdwg.mxu0
    %1283 = vmatprep.subr.mxu0 %v1151
    %1284 = vmatpush1.msra.mxu0 %v1150
    %1285 = vmatprep.subr.mxu0 %v1155
    %1286 = vmatpush1.msra.mxu0 %v1154
    %1287 = vmatprep.subr.mxu0 %v1159
    %1288 = vmatpush1.msra.mxu0 %v1158
    %1289 = vmatprep.subr.mxu0 %v1163
    %1290 = vmatpush1.msra.mxu0 %v1162
    %1291 = vmatprep.subr.mxu0 %v1167
    %1292 = vmatpush1.msra.mxu0 %v1166
    %1293 = vmatprep.subr.mxu0 %v1171
    %1294 = vmatpush1.msra.mxu0 %v1170
    %1295 = vmatprep.subr.mxu0 %v1175
    %1296 = vmatpush1.msra.mxu0 %v1174
    %1297 = vmatprep.subr.mxu0 %v1179
    %1298 = vmatpush1.msra.mxu0 %v1178
    %1299 = vmatprep.subr.mxu0 %v1183
    %1300 = vmatpush1.msra.mxu0 %v1182
    %1301 = vmatprep.subr.mxu0 %v1187
    %1302 = vmatpush1.msra.mxu0 %v1186
    %1303 = vmatprep.subr.mxu0 %v1191
    %1304 = vmatpush1.msra.mxu0 %v1190
    %1305 = vmatprep.subr.mxu0 %v1195
    %1306 = vmatpush1.msra.mxu0 %v1194
    %1307 = vmatprep.subr.mxu0 %v1199
    %1308 = vmatpush1.msra.mxu0 %v1198
    %1309 = vmatprep.subr.mxu0 %v1203
    %1310 = vmatpush1.msra.mxu0 %v1202
    %1311 = vmatprep.subr.mxu0 %v1207
    %1312 = vmatpush1.msra.mxu0 %v1206
    %1313 = vmatprep.subr.mxu0 %v1211
    %1314 = vmatpush1.msra.mxu0 %v1210
    %1315 = vmatprep.subr.mxu0 0.0
    %1316 = vmatpush1.msra.mxu0 0.0
    %1317 = vmatprep.subr.mxu0 0.0
    %1318 = vmatpush1.msra.mxu0 0.0
    %1319 = vmatprep.subr.mxu0 0.0
    %1320 = vmatpush1.msra.mxu0 0.0
    %1321 = vmatprep.subr.mxu0 0.0
    %1322 = vmatpush1.msra.mxu0 0.0
    %1323 = vmatprep.subr.mxu0 0.0
    %1324 = vmatpush1.msra.mxu0 0.0
    %1325 = vmatprep.subr.mxu0 0.0
    %1326 = vmatpush1.msra.mxu0 0.0
    %1327 = vmatprep.subr.mxu0 0.0
    %1328 = vmatpush1.msra.mxu0 0.0
    %1329 = vmatprep.subr.mxu0 0.0
    %1330 = vmatpush1.msra.mxu0 0.0
    %1331 = vmatprep.subr.mxu0 0.0
    %1332 = vmatpush1.msra.mxu0 0.0
    %1333 = vmatprep.subr.mxu0 0.0
    %1334 = vmatpush1.msra.mxu0 0.0
    %1335 = vmatprep.subr.mxu0 0.0
    %1336 = vmatpush1.msra.mxu0 0.0
    %1337 = vmatprep.subr.mxu0 0.0
    %1338 = vmatpush1.msra.mxu0 0.0
    %1339 = vmatprep.subr.mxu0 0.0
    %1340 = vmatpush1.msra.mxu0 0.0
    %1341 = vmatprep.subr.mxu0 0.0
    %1342 = vmatpush1.msra.mxu0 0.0
    %1343 = vmatprep.subr.mxu0 0.0
    %1344 = vmatpush1.msra.mxu0 0.0
    %1345 = vmatprep.subr.mxu0 0.0
    %1346 = vmatpush1.msra.mxu0 0.0
    %1347 = vmatprep.mubr.f32.mxu0 0.0
    %1348 = vmatmul.mubr.f32.gmra.mrb[0].mxu0 %v1138
    %v1349 = vpop.f32.mrb[0].mxu0
    %v1350 = vadd.f32 0.0, %v1349
    %v1351 = vpop.f32.mrb[0].mxu0
    %v1352 = vadd.f32 0.0, %v1351
    %1353 = vdwg.mxu0
    %v1354 = vadd.f32 %v1144, %v1279
    %v1355 = vadd.f32 %v1145, %v1281
    %v1356 = vadd.f32 %v1146, %v1350
    %v1357 = vadd.f32 %v1147, %v1352
    %v1358 = vxor.u32 %v1354, 2147483648
    %v1359 = vmul.f32 %v1358, 1.442695
    %v1360 = vpow.pop %v1359
    %v1361 = vadd.f32 %v1360, 1.0
    %v1362 = vrcp.pop %v1361
    %v1363 = vmul.f32 1.0, %v1362
    %v1364 = vxor.u32 %v1355, 2147483648
    %v1365 = vmul.f32 %v1364, 1.442695
    %v1366 = vpow.pop %v1365
    %v1367 = vadd.f32 %v1366, 1.0
    %v1368 = vrcp.pop %v1367
    %v1369 = vmul.f32 1.0, %v1368
    %v1370 = vtanh.pop %v1356
    %v1371 = vxor.u32 %v1357, 2147483648
    %v1372 = vmul.f32 %v1371, 1.442695
    %v1373 = vpow.pop %v1372
    %v1374 = vadd.f32 %v1373, 1.0
    %v1375 = vrcp.pop %v1374
    %v1376 = vmul.f32 1.0, %v1375
    %v1377 = vmul.f32 %v1369, %v1136
    %v1378 = vmul.f32 %v1363, %v1370
    %v1379 = vadd.f32 %v1377, %v1378
    %v1380 = vtanh.pop %v1379
    %v1381 = vmul.f32 %v1376, %v1380
    %s1382 = scalar_lea.vmem [#allocation3], 24
    %1383 = vst [vmem:[%s1382] sm:$0xff] %v1381
    %s1384 = smul.u32 4, 4
    %s1385 = smul.addr %s1384, 8
    %s1386 = scalar_lea.vmem [#allocation2], %s1385
    %v1387 = vld [vmem:[%s1386] sm:$0xff]
    %v1388 = vld [vmem:[%s1386 + $0x8] sm:$0xff]
    %v1389 = vld [vmem:[%s1386 + $0x10] sm:$0xff]
    %v1390 = vld [vmem:[%s1386 + $0x18] sm:$0xff]
    %v1391 = vld [vmem:[#allocation7] sm:$0xff]
    %v1392 = vld [vmem:[#allocation7 + $0x8] sm:$0xff]
    %v1393 = vld [vmem:[#allocation7 + $0x10] sm:$0xff]
    %v1394 = vld [vmem:[#allocation7 + $0x18] sm:$0xff]
    %v1395 = vld [vmem:[#allocation7 + $0x20] sm:$0xff]
    %v1396 = vld [vmem:[#allocation7 + $0x28] sm:$0xff]
    %v1397 = vld [vmem:[#allocation7 + $0x30] sm:$0xff]
    %v1398 = vld [vmem:[#allocation7 + $0x38] sm:$0xff]
    %v1399 = vld [vmem:[#allocation7 + $0x40] sm:$0xff]
    %v1400 = vld [vmem:[#allocation7 + $0x48] sm:$0xff]
    %v1401 = vld [vmem:[#allocation7 + $0x50] sm:$0xff]
    %v1402 = vld [vmem:[#allocation7 + $0x58] sm:$0xff]
    %v1403 = vld [vmem:[#allocation7 + $0x60] sm:$0xff]
    %v1404 = vld [vmem:[#allocation7 + $0x68] sm:$0xff]
    %v1405 = vld [vmem:[#allocation7 + $0x70] sm:$0xff]
    %v1406 = vld [vmem:[#allocation7 + $0x78] sm:$0xff]
    %v1407 = vld [vmem:[#allocation7 + $0x80] sm:$0xff]
    %v1408 = vld [vmem:[#allocation7 + $0x88] sm:$0xff]
    %v1409 = vld [vmem:[#allocation7 + $0x90] sm:$0xff]
    %v1410 = vld [vmem:[#allocation7 + $0x98] sm:$0xff]
    %v1411 = vld [vmem:[#allocation7 + $0xa0] sm:$0xff]
    %v1412 = vld [vmem:[#allocation7 + $0xa8] sm:$0xff]
    %v1413 = vld [vmem:[#allocation7 + $0xb0] sm:$0xff]
    %v1414 = vld [vmem:[#allocation7 + $0xb8] sm:$0xff]
    %v1415 = vld [vmem:[#allocation7 + $0xc0] sm:$0xff]
    %v1416 = vld [vmem:[#allocation7 + $0xc8] sm:$0xff]
    %v1417 = vld [vmem:[#allocation7 + $0xd0] sm:$0xff]
    %v1418 = vld [vmem:[#allocation7 + $0xd8] sm:$0xff]
    %v1419 = vld [vmem:[#allocation7 + $0xe0] sm:$0xff]
    %v1420 = vld [vmem:[#allocation7 + $0xe8] sm:$0xff]
    %v1421 = vld [vmem:[#allocation7 + $0xf0] sm:$0xff]
    %v1422 = vld [vmem:[#allocation7 + $0xf8] sm:$0xff]
    %v1423 = vld [vmem:[#allocation7 + $0x100] sm:$0xff]
    %v1424 = vld [vmem:[#allocation7 + $0x108] sm:$0xff]
    %v1425 = vld [vmem:[#allocation7 + $0x110] sm:$0xff]
    %v1426 = vld [vmem:[#allocation7 + $0x118] sm:$0xff]
    %v1427 = vld [vmem:[#allocation7 + $0x120] sm:$0xff]
    %v1428 = vld [vmem:[#allocation7 + $0x128] sm:$0xff]
    %v1429 = vld [vmem:[#allocation7 + $0x130] sm:$0xff]
    %v1430 = vld [vmem:[#allocation7 + $0x138] sm:$0xff]
    %v1431 = vld [vmem:[#allocation7 + $0x140] sm:$0xff]
    %v1432 = vld [vmem:[#allocation7 + $0x148] sm:$0xff]
    %v1433 = vld [vmem:[#allocation7 + $0x150] sm:$0xff]
    %v1434 = vld [vmem:[#allocation7 + $0x158] sm:$0xff]
    %v1435 = vld [vmem:[#allocation7 + $0x160] sm:$0xff]
    %v1436 = vld [vmem:[#allocation7 + $0x168] sm:$0xff]
    %v1437 = vld [vmem:[#allocation7 + $0x170] sm:$0xff]
    %v1438 = vld [vmem:[#allocation7 + $0x178] sm:$0xff]
    %v1439 = vld [vmem:[#allocation7 + $0x180] sm:$0xff]
    %v1440 = vld [vmem:[#allocation7 + $0x188] sm:$0xff]
    %v1441 = vld [vmem:[#allocation7 + $0x190] sm:$0xff]
    %v1442 = vld [vmem:[#allocation7 + $0x198] sm:$0xff]
    %v1443 = vld [vmem:[#allocation7 + $0x1a0] sm:$0xff]
    %v1444 = vld [vmem:[#allocation7 + $0x1a8] sm:$0xff]
    %v1445 = vld [vmem:[#allocation7 + $0x1b0] sm:$0xff]
    %v1446 = vld [vmem:[#allocation7 + $0x1b8] sm:$0xff]
    %v1447 = vld [vmem:[#allocation7 + $0x1c0] sm:$0xff]
    %v1448 = vld [vmem:[#allocation7 + $0x1c8] sm:$0xff]
    %v1449 = vld [vmem:[#allocation7 + $0x1d0] sm:$0xff]
    %v1450 = vld [vmem:[#allocation7 + $0x1d8] sm:$0xff]
    %v1451 = vld [vmem:[#allocation7 + $0x1e0] sm:$0xff]
    %v1452 = vld [vmem:[#allocation7 + $0x1e8] sm:$0xff]
    %v1453 = vld [vmem:[#allocation7 + $0x1f0] sm:$0xff]
    %v1454 = vld [vmem:[#allocation7 + $0x1f8] sm:$0xff]
    %1455 = vmatprep.subr.mxu0 %v1392
    %1456 = vmatpush1.msra.mxu0 %v1391
    %1457 = vmatprep.subr.mxu0 %v1396
    %1458 = vmatpush1.msra.mxu0 %v1395
    %1459 = vmatprep.subr.mxu0 %v1400
    %1460 = vmatpush1.msra.mxu0 %v1399
    %1461 = vmatprep.subr.mxu0 %v1404
    %1462 = vmatpush1.msra.mxu0 %v1403
    %1463 = vmatprep.subr.mxu0 %v1408
    %1464 = vmatpush1.msra.mxu0 %v1407
    %1465 = vmatprep.subr.mxu0 %v1412
    %1466 = vmatpush1.msra.mxu0 %v1411
    %1467 = vmatprep.subr.mxu0 %v1416
    %1468 = vmatpush1.msra.mxu0 %v1415
    %1469 = vmatprep.subr.mxu0 %v1420
    %1470 = vmatpush1.msra.mxu0 %v1419
    %1471 = vmatprep.subr.mxu0 %v1424
    %1472 = vmatpush1.msra.mxu0 %v1423
    %1473 = vmatprep.subr.mxu0 %v1428
    %1474 = vmatpush1.msra.mxu0 %v1427
    %1475 = vmatprep.subr.mxu0 %v1432
    %1476 = vmatpush1.msra.mxu0 %v1431
    %1477 = vmatprep.subr.mxu0 %v1436
    %1478 = vmatpush1.msra.mxu0 %v1435
    %1479 = vmatprep.subr.mxu0 %v1440
    %1480 = vmatpush1.msra.mxu0 %v1439
    %1481 = vmatprep.subr.mxu0 %v1444
    %1482 = vmatpush1.msra.mxu0 %v1443
    %1483 = vmatprep.subr.mxu0 %v1448
    %1484 = vmatpush1.msra.mxu0 %v1447
    %1485 = vmatprep.subr.mxu0 %v1452
    %1486 = vmatpush1.msra.mxu0 %v1451
    %1487 = vmatprep.subr.mxu0 0.0
    %1488 = vmatpush1.msra.mxu0 0.0
    %1489 = vmatprep.subr.mxu0 0.0
    %1490 = vmatpush1.msra.mxu0 0.0
    %1491 = vmatprep.subr.mxu0 0.0
    %1492 = vmatpush1.msra.mxu0 0.0
    %1493 = vmatprep.subr.mxu0 0.0
    %1494 = vmatpush1.msra.mxu0 0.0
    %1495 = vmatprep.subr.mxu0 0.0
    %1496 = vmatpush1.msra.mxu0 0.0
    %1497 = vmatprep.subr.mxu0 0.0
    %1498 = vmatpush1.msra.mxu0 0.0
    %1499 = vmatprep.subr.mxu0 0.0
    %1500 = vmatpush1.msra.mxu0 0.0
    %1501 = vmatprep.subr.mxu0 0.0
    %1502 = vmatpush1.msra.mxu0 0.0
    %1503 = vmatprep.subr.mxu0 0.0
    %1504 = vmatpush1.msra.mxu0 0.0
    %1505 = vmatprep.subr.mxu0 0.0
    %1506 = vmatpush1.msra.mxu0 0.0
    %1507 = vmatprep.subr.mxu0 0.0
    %1508 = vmatpush1.msra.mxu0 0.0
    %1509 = vmatprep.subr.mxu0 0.0
    %1510 = vmatpush1.msra.mxu0 0.0
    %1511 = vmatprep.subr.mxu0 0.0
    %1512 = vmatpush1.msra.mxu0 0.0
    %1513 = vmatprep.subr.mxu0 0.0
    %1514 = vmatpush1.msra.mxu0 0.0
    %1515 = vmatprep.subr.mxu0 0.0
    %1516 = vmatpush1.msra.mxu0 0.0
    %1517 = vmatprep.subr.mxu0 0.0
    %1518 = vmatpush1.msra.mxu0 0.0
    %1519 = vmatprep.mubr.f32.mxu0 0.0
    %1520 = vmatmul.mubr.f32.gmra.mrb[0].mxu0 %v1381
    %v1521 = vpop.f32.mrb[0].mxu0
    %v1522 = vadd.f32 0.0, %v1521
    %v1523 = vpop.f32.mrb[0].mxu0
    %v1524 = vadd.f32 0.0, %v1523
    %1525 = vdwg.mxu0
    %1526 = vmatprep.subr.mxu0 %v1394
    %1527 = vmatpush1.msra.mxu0 %v1393
    %1528 = vmatprep.subr.mxu0 %v1398
    %1529 = vmatpush1.msra.mxu0 %v1397
    %1530 = vmatprep.subr.mxu0 %v1402
    %1531 = vmatpush1.msra.mxu0 %v1401
    %1532 = vmatprep.subr.mxu0 %v1406
    %1533 = vmatpush1.msra.mxu0 %v1405
    %1534 = vmatprep.subr.mxu0 %v1410
    %1535 = vmatpush1.msra.mxu0 %v1409
    %1536 = vmatprep.subr.mxu0 %v1414
    %1537 = vmatpush1.msra.mxu0 %v1413
    %1538 = vmatprep.subr.mxu0 %v1418
    %1539 = vmatpush1.msra.mxu0 %v1417
    %1540 = vmatprep.subr.mxu0 %v1422
    %1541 = vmatpush1.msra.mxu0 %v1421
    %1542 = vmatprep.subr.mxu0 %v1426
    %1543 = vmatpush1.msra.mxu0 %v1425
    %1544 = vmatprep.subr.mxu0 %v1430
    %1545 = vmatpush1.msra.mxu0 %v1429
    %1546 = vmatprep.subr.mxu0 %v1434
    %1547 = vmatpush1.msra.mxu0 %v1433
    %1548 = vmatprep.subr.mxu0 %v1438
    %1549 = vmatpush1.msra.mxu0 %v1437
    %1550 = vmatprep.subr.mxu0 %v1442
    %1551 = vmatpush1.msra.mxu0 %v1441
    %1552 = vmatprep.subr.mxu0 %v1446
    %1553 = vmatpush1.msra.mxu0 %v1445
    %1554 = vmatprep.subr.mxu0 %v1450
    %1555 = vmatpush1.msra.mxu0 %v1449
    %1556 = vmatprep.subr.mxu0 %v1454
    %1557 = vmatpush1.msra.mxu0 %v1453
    %1558 = vmatprep.subr.mxu0 0.0
    %1559 = vmatpush1.msra.mxu0 0.0
    %1560 = vmatprep.subr.mxu0 0.0
    %1561 = vmatpush1.msra.mxu0 0.0
    %1562 = vmatprep.subr.mxu0 0.0
    %1563 = vmatpush1.msra.mxu0 0.0
    %1564 = vmatprep.subr.mxu0 0.0
    %1565 = vmatpush1.msra.mxu0 0.0
    %1566 = vmatprep.subr.mxu0 0.0
    %1567 = vmatpush1.msra.mxu0 0.0
    %1568 = vmatprep.subr.mxu0 0.0
    %1569 = vmatpush1.msra.mxu0 0.0
    %1570 = vmatprep.subr.mxu0 0.0
    %1571 = vmatpush1.msra.mxu0 0.0
    %1572 = vmatprep.subr.mxu0 0.0
    %1573 = vmatpush1.msra.mxu0 0.0
    %1574 = vmatprep.subr.mxu0 0.0
    %1575 = vmatpush1.msra.mxu0 0.0
    %1576 = vmatprep.subr.mxu0 0.0
    %1577 = vmatpush1.msra.mxu0 0.0
    %1578 = vmatprep.subr.mxu0 0.0
    %1579 = vmatpush1.msra.mxu0 0.0
    %1580 = vmatprep.subr.mxu0 0.0
    %1581 = vmatpush1.msra.mxu0 0.0
    %1582 = vmatprep.subr.mxu0 0.0
    %1583 = vmatpush1.msra.mxu0 0.0
    %1584 = vmatprep.subr.mxu0 0.0
    %1585 = vmatpush1.msra.mxu0 0.0
    %1586 = vmatprep.subr.mxu0 0.0
    %1587 = vmatpush1.msra.mxu0 0.0
    %1588 = vmatprep.subr.mxu0 0.0
    %1589 = vmatpush1.msra.mxu0 0.0
    %1590 = vmatprep.mubr.f32.mxu0 0.0
    %1591 = vmatmul.mubr.f32.gmra.mrb[0].mxu0 %v1381
    %v1592 = vpop.f32.mrb[0].mxu0
    %v1593 = vadd.f32 0.0, %v1592
    %v1594 = vpop.f32.mrb[0].mxu0
    %v1595 = vadd.f32 0.0, %v1594
    %1596 = vdwg.mxu0
    %v1597 = vadd.f32 %v1387, %v1522
    %v1598 = vadd.f32 %v1388, %v1524
    %v1599 = vadd.f32 %v1389, %v1593
    %v1600 = vadd.f32 %v1390, %v1595
    %v1601 = vxor.u32 %v1597, 2147483648
    %v1602 = vmul.f32 %v1601, 1.442695
    %v1603 = vpow.pop %v1602
    %v1604 = vadd.f32 %v1603, 1.0
    %v1605 = vrcp.pop %v1604
    %v1606 = vmul.f32 1.0, %v1605
    %v1607 = vxor.u32 %v1598, 2147483648
    %v1608 = vmul.f32 %v1607, 1.442695
    %v1609 = vpow.pop %v1608
    %v1610 = vadd.f32 %v1609, 1.0
    %v1611 = vrcp.pop %v1610
    %v1612 = vmul.f32 1.0, %v1611
    %v1613 = vtanh.pop %v1599
    %v1614 = vxor.u32 %v1600, 2147483648
    %v1615 = vmul.f32 %v1614, 1.442695
    %v1616 = vpow.pop %v1615
    %v1617 = vadd.f32 %v1616, 1.0
    %v1618 = vrcp.pop %v1617
    %v1619 = vmul.f32 1.0, %v1618
    %v1620 = vmul.f32 %v1612, %v1379
    %v1621 = vmul.f32 %v1606, %v1613
    %v1622 = vadd.f32 %v1620, %v1621
    %v1623 = vtanh.pop %v1622
    %v1624 = vmul.f32 %v1619, %v1623
    %s1625 = scalar_lea.vmem [#allocation3], 32
    %1626 = vst [vmem:[%s1625] sm:$0xff] %v1624
    %s1627 = smul.u32 5, 4
    %s1628 = smul.addr %s1627, 8
    %s1629 = scalar_lea.vmem [#allocation2], %s1628
    %v1630 = vld [vmem:[%s1629] sm:$0xff]
    %v1631 = vld [vmem:[%s1629 + $0x8] sm:$0xff]
    %v1632 = vld [vmem:[%s1629 + $0x10] sm:$0xff]
    %v1633 = vld [vmem:[%s1629 + $0x18] sm:$0xff]
    %v1634 = vld [vmem:[#allocation7] sm:$0xff]
    %v1635 = vld [vmem:[#allocation7 + $0x8] sm:$0xff]
    %v1636 = vld [vmem:[#allocation7 + $0x10] sm:$0xff]
    %v1637 = vld [vmem:[#allocation7 + $0x18] sm:$0xff]
    %v1638 = vld [vmem:[#allocation7 + $0x20] sm:$0xff]
    %v1639 = vld [vmem:[#allocation7 + $0x28] sm:$0xff]
    %v1640 = vld [vmem:[#allocation7 + $0x30] sm:$0xff]
    %v1641 = vld [vmem:[#allocation7 + $0x38] sm:$0xff]
    %v1642 = vld [vmem:[#allocation7 + $0x40] sm:$0xff]
    %v1643 = vld [vmem:[#allocation7 + $0x48] sm:$0xff]
    %v1644 = vld [vmem:[#allocation7 + $0x50] sm:$0xff]
    %v1645 = vld [vmem:[#allocation7 + $0x58] sm:$0xff]
    %v1646 = vld [vmem:[#allocation7 + $0x60] sm:$0xff]
    %v1647 = vld [vmem:[#allocation7 + $0x68] sm:$0xff]
    %v1648 = vld [vmem:[#allocation7 + $0x70] sm:$0xff]
    %v1649 = vld [vmem:[#allocation7 + $0x78] sm:$0xff]
    %v1650 = vld [vmem:[#allocation7 + $0x80] sm:$0xff]
    %v1651 = vld [vmem:[#allocation7 + $0x88] sm:$0xff]
    %v1652 = vld [vmem:[#allocation7 + $0x90] sm:$0xff]
    %v1653 = vld [vmem:[#allocation7 + $0x98] sm:$0xff]
    %v1654 = vld [vmem:[#allocation7 + $0xa0] sm:$0xff]
    %v1655 = vld [vmem:[#allocation7 + $0xa8] sm:$0xff]
    %v1656 = vld [vmem:[#allocation7 + $0xb0] sm:$0xff]
    %v1657 = vld [vmem:[#allocation7 + $0xb8] sm:$0xff]
    %v1658 = vld [vmem:[#allocation7 + $0xc0] sm:$0xff]
    %v1659 = vld [vmem:[#allocation7 + $0xc8] sm:$0xff]
    %v1660 = vld [vmem:[#allocation7 + $0xd0] sm:$0xff]
    %v1661 = vld [vmem:[#allocation7 + $0xd8] sm:$0xff]
    %v1662 = vld [vmem:[#allocation7 + $0xe0] sm:$0xff]
    %v1663 = vld [vmem:[#allocation7 + $0xe8] sm:$0xff]
    %v1664 = vld [vmem:[#allocation7 + $0xf0] sm:$0xff]
    %v1665 = vld [vmem:[#allocation7 + $0xf8] sm:$0xff]
    %v1666 = vld [vmem:[#allocation7 + $0x100] sm:$0xff]
    %v1667 = vld [vmem:[#allocation7 + $0x108] sm:$0xff]
    %v1668 = vld [vmem:[#allocation7 + $0x110] sm:$0xff]
    %v1669 = vld [vmem:[#allocation7 + $0x118] sm:$0xff]
    %v1670 = vld [vmem:[#allocation7 + $0x120] sm:$0xff]
    %v1671 = vld [vmem:[#allocation7 + $0x128] sm:$0xff]
    %v1672 = vld [vmem:[#allocation7 + $0x130] sm:$0xff]
    %v1673 = vld [vmem:[#allocation7 + $0x138] sm:$0xff]
    %v1674 = vld [vmem:[#allocation7 + $0x140] sm:$0xff]
    %v1675 = vld [vmem:[#allocation7 + $0x148] sm:$0xff]
    %v1676 = vld [vmem:[#allocation7 + $0x150] sm:$0xff]
    %v1677 = vld [vmem:[#allocation7 + $0x158] sm:$0xff]
    %v1678 = vld [vmem:[#allocation7 + $0x160] sm:$0xff]
    %v1679 = vld [vmem:[#allocation7 + $0x168] sm:$0xff]
    %v1680 = vld [vmem:[#allocation7 + $0x170] sm:$0xff]
    %v1681 = vld [vmem:[#allocation7 + $0x178] sm:$0xff]
    %v1682 = vld [vmem:[#allocation7 + $0x180] sm:$0xff]
    %v1683 = vld [vmem:[#allocation7 + $0x188] sm:$0xff]
    %v1684 = vld [vmem:[#allocation7 + $0x190] sm:$0xff]
    %v1685 = vld [vmem:[#allocation7 + $0x198] sm:$0xff]
    %v1686 = vld [vmem:[#allocation7 + $0x1a0] sm:$0xff]
    %v1687 = vld [vmem:[#allocation7 + $0x1a8] sm:$0xff]
    %v1688 = vld [vmem:[#allocation7 + $0x1b0] sm:$0xff]
    %v1689 = vld [vmem:[#allocation7 + $0x1b8] sm:$0xff]
    %v1690 = vld [vmem:[#allocation7 + $0x1c0] sm:$0xff]
    %v1691 = vld [vmem:[#allocation7 + $0x1c8] sm:$0xff]
    %v1692 = vld [vmem:[#allocation7 + $0x1d0] sm:$0xff]
    %v1693 = vld [vmem:[#allocation7 + $0x1d8] sm:$0xff]
    %v1694 = vld [vmem:[#allocation7 + $0x1e0] sm:$0xff]
    %v1695 = vld [vmem:[#allocation7 + $0x1e8] sm:$0xff]
    %v1696 = vld [vmem:[#allocation7 + $0x1f0] sm:$0xff]
    %v1697 = vld [vmem:[#allocation7 + $0x1f8] sm:$0xff]
    %1698 = vmatprep.subr.mxu0 %v1635
    %1699 = vmatpush1.msra.mxu0 %v1634
    %1700 = vmatprep.subr.mxu0 %v1639
    %1701 = vmatpush1.msra.mxu0 %v1638
    %1702 = vmatprep.subr.mxu0 %v1643
    %1703 = vmatpush1.msra.mxu0 %v1642
    %1704 = vmatprep.subr.mxu0 %v1647
    %1705 = vmatpush1.msra.mxu0 %v1646
    %1706 = vmatprep.subr.mxu0 %v1651
    %1707 = vmatpush1.msra.mxu0 %v1650
    %1708 = vmatprep.subr.mxu0 %v1655
    %1709 = vmatpush1.msra.mxu0 %v1654
    %1710 = vmatprep.subr.mxu0 %v1659
    %1711 = vmatpush1.msra.mxu0 %v1658
    %1712 = vmatprep.subr.mxu0 %v1663
    %1713 = vmatpush1.msra.mxu0 %v1662
    %1714 = vmatprep.subr.mxu0 %v1667
    %1715 = vmatpush1.msra.mxu0 %v1666
    %1716 = vmatprep.subr.mxu0 %v1671
    %1717 = vmatpush1.msra.mxu0 %v1670
    %1718 = vmatprep.subr.mxu0 %v1675
    %1719 = vmatpush1.msra.mxu0 %v1674
    %1720 = vmatprep.subr.mxu0 %v1679
    %1721 = vmatpush1.msra.mxu0 %v1678
    %1722 = vmatprep.subr.mxu0 %v1683
    %1723 = vmatpush1.msra.mxu0 %v1682
    %1724 = vmatprep.subr.mxu0 %v1687
    %1725 = vmatpush1.msra.mxu0 %v1686
    %1726 = vmatprep.subr.mxu0 %v1691
    %1727 = vmatpush1.msra.mxu0 %v1690
    %1728 = vmatprep.subr.mxu0 %v1695
    %1729 = vmatpush1.msra.mxu0 %v1694
    %1730 = vmatprep.subr.mxu0 0.0
    %1731 = vmatpush1.msra.mxu0 0.0
    %1732 = vmatprep.subr.mxu0 0.0
    %1733 = vmatpush1.msra.mxu0 0.0
    %1734 = vmatprep.subr.mxu0 0.0
    %1735 = vmatpush1.msra.mxu0 0.0
    %1736 = vmatprep.subr.mxu0 0.0
    %1737 = vmatpush1.msra.mxu0 0.0
    %1738 = vmatprep.subr.mxu0 0.0
    %1739 = vmatpush1.msra.mxu0 0.0
    %1740 = vmatprep.subr.mxu0 0.0
    %1741 = vmatpush1.msra.mxu0 0.0
    %1742 = vmatprep.subr.mxu0 0.0
    %1743 = vmatpush1.msra.mxu0 0.0
    %1744 = vmatprep.subr.mxu0 0.0
    %1745 = vmatpush1.msra.mxu0 0.0
    %1746 = vmatprep.subr.mxu0 0.0
    %1747 = vmatpush1.msra.mxu0 0.0
    %1748 = vmatprep.subr.mxu0 0.0
    %1749 = vmatpush1.msra.mxu0 0.0
    %1750 = vmatprep.subr.mxu0 0.0
    %1751 = vmatpush1.msra.mxu0 0.0
    %1752 = vmatprep.subr.mxu0 0.0
    %1753 = vmatpush1.msra.mxu0 0.0
    %1754 = vmatprep.subr.mxu0 0.0
    %1755 = vmatpush1.msra.mxu0 0.0
    %1756 = vmatprep.subr.mxu0 0.0
    %1757 = vmatpush1.msra.mxu0 0.0
    %1758 = vmatprep.subr.mxu0 0.0
    %1759 = vmatpush1.msra.mxu0 0.0
    %1760 = vmatprep.subr.mxu0 0.0
    %1761 = vmatpush1.msra.mxu0 0.0
    %1762 = vmatprep.mubr.f32.mxu0 0.0
    %1763 = vmatmul.mubr.f32.gmra.mrb[0].mxu0 %v1624
    %v1764 = vpop.f32.mrb[0].mxu0
    %v1765 = vadd.f32 0.0, %v1764
    %v1766 = vpop.f32.mrb[0].mxu0
    %v1767 = vadd.f32 0.0, %v1766
    %1768 = vdwg.mxu0
    %1769 = vmatprep.subr.mxu0 %v1637
    %1770 = vmatpush1.msra.mxu0 %v1636
    %1771 = vmatprep.subr.mxu0 %v1641
    %1772 = vmatpush1.msra.mxu0 %v1640
    %1773 = vmatprep.subr.mxu0 %v1645
    %1774 = vmatpush1.msra.mxu0 %v1644
    %1775 = vmatprep.subr.mxu0 %v1649
    %1776 = vmatpush1.msra.mxu0 %v1648
    %1777 = vmatprep.subr.mxu0 %v1653
    %1778 = vmatpush1.msra.mxu0 %v1652
    %1779 = vmatprep.subr.mxu0 %v1657
    %1780 = vmatpush1.msra.mxu0 %v1656
    %1781 = vmatprep.subr.mxu0 %v1661
    %1782 = vmatpush1.msra.mxu0 %v1660
    %1783 = vmatprep.subr.mxu0 %v1665
    %1784 = vmatpush1.msra.mxu0 %v1664
    %1785 = vmatprep.subr.mxu0 %v1669
    %1786 = vmatpush1.msra.mxu0 %v1668
    %1787 = vmatprep.subr.mxu0 %v1673
    %1788 = vmatpush1.msra.mxu0 %v1672
    %1789 = vmatprep.subr.mxu0 %v1677
    %1790 = vmatpush1.msra.mxu0 %v1676
    %1791 = vmatprep.subr.mxu0 %v1681
    %1792 = vmatpush1.msra.mxu0 %v1680
    %1793 = vmatprep.subr.mxu0 %v1685
    %1794 = vmatpush1.msra.mxu0 %v1684
    %1795 = vmatprep.subr.mxu0 %v1689
    %1796 = vmatpush1.msra.mxu0 %v1688
    %1797 = vmatprep.subr.mxu0 %v1693
    %1798 = vmatpush1.msra.mxu0 %v1692
    %1799 = vmatprep.subr.mxu0 %v1697
    %1800 = vmatpush1.msra.mxu0 %v1696
    %1801 = vmatprep.subr.mxu0 0.0
    %1802 = vmatpush1.msra.mxu0 0.0
    %1803 = vmatprep.subr.mxu0 0.0
    %1804 = vmatpush1.msra.mxu0 0.0
    %1805 = vmatprep.subr.mxu0 0.0
    %1806 = vmatpush1.msra.mxu0 0.0
    %1807 = vmatprep.subr.mxu0 0.0
    %1808 = vmatpush1.msra.mxu0 0.0
    %1809 = vmatprep.subr.mxu0 0.0
    %1810 = vmatpush1.msra.mxu0 0.0
    %1811 = vmatprep.subr.mxu0 0.0
    %1812 = vmatpush1.msra.mxu0 0.0
    %1813 = vmatprep.subr.mxu0 0.0
    %1814 = vmatpush1.msra.mxu0 0.0
    %1815 = vmatprep.subr.mxu0 0.0
    %1816 = vmatpush1.msra.mxu0 0.0
    %1817 = vmatprep.subr.mxu0 0.0
    %1818 = vmatpush1.msra.mxu0 0.0
    %1819 = vmatprep.subr.mxu0 0.0
    %1820 = vmatpush1.msra.mxu0 0.0
    %1821 = vmatprep.subr.mxu0 0.0
    %1822 = vmatpush1.msra.mxu0 0.0
    %1823 = vmatprep.subr.mxu0 0.0
    %1824 = vmatpush1.msra.mxu0 0.0
    %1825 = vmatprep.subr.mxu0 0.0
    %1826 = vmatpush1.msra.mxu0 0.0
    %1827 = vmatprep.subr.mxu0 0.0
    %1828 = vmatpush1.msra.mxu0 0.0
    %1829 = vmatprep.subr.mxu0 0.0
    %1830 = vmatpush1.msra.mxu0 0.0
    %1831 = vmatprep.subr.mxu0 0.0
    %1832 = vmatpush1.msra.mxu0 0.0
    %1833 = vmatprep.mubr.f32.mxu0 0.0
    %1834 = vmatmul.mubr.f32.gmra.mrb[0].mxu0 %v1624
    %v1835 = vpop.f32.mrb[0].mxu0
    %v1836 = vadd.f32 0.0, %v1835
    %v1837 = vpop.f32.mrb[0].mxu0
    %v1838 = vadd.f32 0.0, %v1837
    %1839 = vdwg.mxu0
    %v1840 = vadd.f32 %v1630, %v1765
    %v1841 = vadd.f32 %v1631, %v1767
    %v1842 = vadd.f32 %v1632, %v1836
    %v1843 = vadd.f32 %v1633, %v1838
    %v1844 = vxor.u32 %v1840, 2147483648
    %v1845 = vmul.f32 %v1844, 1.442695
    %v1846 = vpow.pop %v1845
    %v1847 = vadd.f32 %v1846, 1.0
    %v1848 = vrcp.pop %v1847
    %v1849 = vmul.f32 1.0, %v1848
    %v1850 = vxor.u32 %v1841, 2147483648
    %v1851 = vmul.f32 %v1850, 1.442695
    %v1852 = vpow.pop %v1851
    %v1853 = vadd.f32 %v1852, 1.0
    %v1854 = vrcp.pop %v1853
    %v1855 = vmul.f32 1.0, %v1854
    %v1856 = vtanh.pop %v1842
    %v1857 = vxor.u32 %v1843, 2147483648
    %v1858 = vmul.f32 %v1857, 1.442695
    %v1859 = vpow.pop %v1858
    %v1860 = vadd.f32 %v1859, 1.0
    %v1861 = vrcp.pop %v1860
    %v1862 = vmul.f32 1.0, %v1861
    %v1863 = vmul.f32 %v1855, %v1622
    %v1864 = vmul.f32 %v1849, %v1856
    %v1865 = vadd.f32 %v1863, %v1864
    %v1866 = vtanh.pop %v1865
    %v1867 = vmul.f32 %v1862, %v1866
    %s1868 = scalar_lea.vmem [#allocation3], 40
    %1869 = vst [vmem:[%s1868] sm:$0xff] %v1867
    %s1870 = smul.u32 6, 4
    %s1871 = smul.addr %s1870, 8
    %s1872 = scalar_lea.vmem [#allocation2], %s1871
    %v1873 = vld [vmem:[%s1872] sm:$0xff]
    %v1874 = vld [vmem:[%s1872 + $0x8] sm:$0xff]
    %v1875 = vld [vmem:[%s1872 + $0x10] sm:$0xff]
    %v1876 = vld [vmem:[%s1872 + $0x18] sm:$0xff]
    %v1877 = vld [vmem:[#allocation7] sm:$0xff]
    %v1878 = vld [vmem:[#allocation7 + $0x8] sm:$0xff]
    %v1879 = vld [vmem:[#allocation7 + $0x10] sm:$0xff]
    %v1880 = vld [vmem:[#allocation7 + $0x18] sm:$0xff]
    %v1881 = vld [vmem:[#allocation7 + $0x20] sm:$0xff]
    %v1882 = vld [vmem:[#allocation7 + $0x28] sm:$0xff]
    %v1883 = vld [vmem:[#allocation7 + $0x30] sm:$0xff]
    %v1884 = vld [vmem:[#allocation7 + $0x38] sm:$0xff]
    %v1885 = vld [vmem:[#allocation7 + $0x40] sm:$0xff]
    %v1886 = vld [vmem:[#allocation7 + $0x48] sm:$0xff]
    %v1887 = vld [vmem:[#allocation7 + $0x50] sm:$0xff]
    %v1888 = vld [vmem:[#allocation7 + $0x58] sm:$0xff]
    %v1889 = vld [vmem:[#allocation7 + $0x60] sm:$0xff]
    %v1890 = vld [vmem:[#allocation7 + $0x68] sm:$0xff]
    %v1891 = vld [vmem:[#allocation7 + $0x70] sm:$0xff]
    %v1892 = vld [vmem:[#allocation7 + $0x78] sm:$0xff]
    %v1893 = vld [vmem:[#allocation7 + $0x80] sm:$0xff]
    %v1894 = vld [vmem:[#allocation7 + $0x88] sm:$0xff]
    %v1895 = vld [vmem:[#allocation7 + $0x90] sm:$0xff]
    %v1896 = vld [vmem:[#allocation7 + $0x98] sm:$0xff]
    %v1897 = vld [vmem:[#allocation7 + $0xa0] sm:$0xff]
    %v1898 = vld [vmem:[#allocation7 + $0xa8] sm:$0xff]
    %v1899 = vld [vmem:[#allocation7 + $0xb0] sm:$0xff]
    %v1900 = vld [vmem:[#allocation7 + $0xb8] sm:$0xff]
    %v1901 = vld [vmem:[#allocation7 + $0xc0] sm:$0xff]
    %v1902 = vld [vmem:[#allocation7 + $0xc8] sm:$0xff]
    %v1903 = vld [vmem:[#allocation7 + $0xd0] sm:$0xff]
    %v1904 = vld [vmem:[#allocation7 + $0xd8] sm:$0xff]
    %v1905 = vld [vmem:[#allocation7 + $0xe0] sm:$0xff]
    %v1906 = vld [vmem:[#allocation7 + $0xe8] sm:$0xff]
    %v1907 = vld [vmem:[#allocation7 + $0xf0] sm:$0xff]
    %v1908 = vld [vmem:[#allocation7 + $0xf8] sm:$0xff]
    %v1909 = vld [vmem:[#allocation7 + $0x100] sm:$0xff]
    %v1910 = vld [vmem:[#allocation7 + $0x108] sm:$0xff]
    %v1911 = vld [vmem:[#allocation7 + $0x110] sm:$0xff]
    %v1912 = vld [vmem:[#allocation7 + $0x118] sm:$0xff]
    %v1913 = vld [vmem:[#allocation7 + $0x120] sm:$0xff]
    %v1914 = vld [vmem:[#allocation7 + $0x128] sm:$0xff]
    %v1915 = vld [vmem:[#allocation7 + $0x130] sm:$0xff]
    %v1916 = vld [vmem:[#allocation7 + $0x138] sm:$0xff]
    %v1917 = vld [vmem:[#allocation7 + $0x140] sm:$0xff]
    %v1918 = vld [vmem:[#allocation7 + $0x148] sm:$0xff]
    %v1919 = vld [vmem:[#allocation7 + $0x150] sm:$0xff]
    %v1920 = vld [vmem:[#allocation7 + $0x158] sm:$0xff]
    %v1921 = vld [vmem:[#allocation7 + $0x160] sm:$0xff]
    %v1922 = vld [vmem:[#allocation7 + $0x168] sm:$0xff]
    %v1923 = vld [vmem:[#allocation7 + $0x170] sm:$0xff]
    %v1924 = vld [vmem:[#allocation7 + $0x178] sm:$0xff]
    %v1925 = vld [vmem:[#allocation7 + $0x180] sm:$0xff]
    %v1926 = vld [vmem:[#allocation7 + $0x188] sm:$0xff]
    %v1927 = vld [vmem:[#allocation7 + $0x190] sm:$0xff]
    %v1928 = vld [vmem:[#allocation7 + $0x198] sm:$0xff]
    %v1929 = vld [vmem:[#allocation7 + $0x1a0] sm:$0xff]
    %v1930 = vld [vmem:[#allocation7 + $0x1a8] sm:$0xff]
    %v1931 = vld [vmem:[#allocation7 + $0x1b0] sm:$0xff]
    %v1932 = vld [vmem:[#allocation7 + $0x1b8] sm:$0xff]
    %v1933 = vld [vmem:[#allocation7 + $0x1c0] sm:$0xff]
    %v1934 = vld [vmem:[#allocation7 + $0x1c8] sm:$0xff]
    %v1935 = vld [vmem:[#allocation7 + $0x1d0] sm:$0xff]
    %v1936 = vld [vmem:[#allocation7 + $0x1d8] sm:$0xff]
    %v1937 = vld [vmem:[#allocation7 + $0x1e0] sm:$0xff]
    %v1938 = vld [vmem:[#allocation7 + $0x1e8] sm:$0xff]
    %v1939 = vld [vmem:[#allocation7 + $0x1f0] sm:$0xff]
    %v1940 = vld [vmem:[#allocation7 + $0x1f8] sm:$0xff]
    %1941 = vmatprep.subr.mxu0 %v1878
    %1942 = vmatpush1.msra.mxu0 %v1877
    %1943 = vmatprep.subr.mxu0 %v1882
    %1944 = vmatpush1.msra.mxu0 %v1881
    %1945 = vmatprep.subr.mxu0 %v1886
    %1946 = vmatpush1.msra.mxu0 %v1885
    %1947 = vmatprep.subr.mxu0 %v1890
    %1948 = vmatpush1.msra.mxu0 %v1889
    %1949 = vmatprep.subr.mxu0 %v1894
    %1950 = vmatpush1.msra.mxu0 %v1893
    %1951 = vmatprep.subr.mxu0 %v1898
    %1952 = vmatpush1.msra.mxu0 %v1897
    %1953 = vmatprep.subr.mxu0 %v1902
    %1954 = vmatpush1.msra.mxu0 %v1901
    %1955 = vmatprep.subr.mxu0 %v1906
    %1956 = vmatpush1.msra.mxu0 %v1905
    %1957 = vmatprep.subr.mxu0 %v1910
    %1958 = vmatpush1.msra.mxu0 %v1909
    %1959 = vmatprep.subr.mxu0 %v1914
    %1960 = vmatpush1.msra.mxu0 %v1913
    %1961 = vmatprep.subr.mxu0 %v1918
    %1962 = vmatpush1.msra.mxu0 %v1917
    %1963 = vmatprep.subr.mxu0 %v1922
    %1964 = vmatpush1.msra.mxu0 %v1921
    %1965 = vmatprep.subr.mxu0 %v1926
    %1966 = vmatpush1.msra.mxu0 %v1925
    %1967 = vmatprep.subr.mxu0 %v1930
    %1968 = vmatpush1.msra.mxu0 %v1929
    %1969 = vmatprep.subr.mxu0 %v1934
    %1970 = vmatpush1.msra.mxu0 %v1933
    %1971 = vmatprep.subr.mxu0 %v1938
    %1972 = vmatpush1.msra.mxu0 %v1937
    %1973 = vmatprep.subr.mxu0 0.0
    %1974 = vmatpush1.msra.mxu0 0.0
    %1975 = vmatprep.subr.mxu0 0.0
    %1976 = vmatpush1.msra.mxu0 0.0
    %1977 = vmatprep.subr.mxu0 0.0
    %1978 = vmatpush1.msra.mxu0 0.0
    %1979 = vmatprep.subr.mxu0 0.0
    %1980 = vmatpush1.msra.mxu0 0.0
    %1981 = vmatprep.subr.mxu0 0.0
    %1982 = vmatpush1.msra.mxu0 0.0
    %1983 = vmatprep.subr.mxu0 0.0
    %1984 = vmatpush1.msra.mxu0 0.0
    %1985 = vmatprep.subr.mxu0 0.0
    %1986 = vmatpush1.msra.mxu0 0.0
    %1987 = vmatprep.subr.mxu0 0.0
    %1988 = vmatpush1.msra.mxu0 0.0
    %1989 = vmatprep.subr.mxu0 0.0
    %1990 = vmatpush1.msra.mxu0 0.0
    %1991 = vmatprep.subr.mxu0 0.0
    %1992 = vmatpush1.msra.mxu0 0.0
    %1993 = vmatprep.subr.mxu0 0.0
    %1994 = vmatpush1.msra.mxu0 0.0
    %1995 = vmatprep.subr.mxu0 0.0
    %1996 = vmatpush1.msra.mxu0 0.0
    %1997 = vmatprep.subr.mxu0 0.0
    %1998 = vmatpush1.msra.mxu0 0.0
    %1999 = vmatprep.subr.mxu0 0.0
    %2000 = vmatpush1.msra.mxu0 0.0
    %2001 = vmatprep.subr.mxu0 0.0
    %2002 = vmatpush1.msra.mxu0 0.0
    %2003 = vmatprep.subr.mxu0 0.0
    %2004 = vmatpush1.msra.mxu0 0.0
    %2005 = vmatprep.mubr.f32.mxu0 0.0
    %2006 = vmatmul.mubr.f32.gmra.mrb[0].mxu0 %v1867
    %v2007 = vpop.f32.mrb[0].mxu0
    %v2008 = vadd.f32 0.0, %v2007
    %v2009 = vpop.f32.mrb[0].mxu0
    %v2010 = vadd.f32 0.0, %v2009
    %2011 = vdwg.mxu0
    %2012 = vmatprep.subr.mxu0 %v1880
    %2013 = vmatpush1.msra.mxu0 %v1879
    %2014 = vmatprep.subr.mxu0 %v1884
    %2015 = vmatpush1.msra.mxu0 %v1883
    %2016 = vmatprep.subr.mxu0 %v1888
    %2017 = vmatpush1.msra.mxu0 %v1887
    %2018 = vmatprep.subr.mxu0 %v1892
    %2019 = vmatpush1.msra.mxu0 %v1891
    %2020 = vmatprep.subr.mxu0 %v1896
    %2021 = vmatpush1.msra.mxu0 %v1895
    %2022 = vmatprep.subr.mxu0 %v1900
    %2023 = vmatpush1.msra.mxu0 %v1899
    %2024 = vmatprep.subr.mxu0 %v1904
    %2025 = vmatpush1.msra.mxu0 %v1903
    %2026 = vmatprep.subr.mxu0 %v1908
    %2027 = vmatpush1.msra.mxu0 %v1907
    %2028 = vmatprep.subr.mxu0 %v1912
    %2029 = vmatpush1.msra.mxu0 %v1911
    %2030 = vmatprep.subr.mxu0 %v1916
    %2031 = vmatpush1.msra.mxu0 %v1915
    %2032 = vmatprep.subr.mxu0 %v1920
    %2033 = vmatpush1.msra.mxu0 %v1919
    %2034 = vmatprep.subr.mxu0 %v1924
    %2035 = vmatpush1.msra.mxu0 %v1923
    %2036 = vmatprep.subr.mxu0 %v1928
    %2037 = vmatpush1.msra.mxu0 %v1927
    %2038 = vmatprep.subr.mxu0 %v1932
    %2039 = vmatpush1.msra.mxu0 %v1931
    %2040 = vmatprep.subr.mxu0 %v1936
    %2041 = vmatpush1.msra.mxu0 %v1935
    %2042 = vmatprep.subr.mxu0 %v1940
    %2043 = vmatpush1.msra.mxu0 %v1939
    %2044 = vmatprep.subr.mxu0 0.0
    %2045 = vmatpush1.msra.mxu0 0.0
    %2046 = vmatprep.subr.mxu0 0.0
    %2047 = vmatpush1.msra.mxu0 0.0
    %2048 = vmatprep.subr.mxu0 0.0
    %2049 = vmatpush1.msra.mxu0 0.0
    %2050 = vmatprep.subr.mxu0 0.0
    %2051 = vmatpush1.msra.mxu0 0.0
    %2052 = vmatprep.subr.mxu0 0.0
    %2053 = vmatpush1.msra.mxu0 0.0
    %2054 = vmatprep.subr.mxu0 0.0
    %2055 = vmatpush1.msra.mxu0 0.0
    %2056 = vmatprep.subr.mxu0 0.0
    %2057 = vmatpush1.msra.mxu0 0.0
    %2058 = vmatprep.subr.mxu0 0.0
    %2059 = vmatpush1.msra.mxu0 0.0
    %2060 = vmatprep.subr.mxu0 0.0
    %2061 = vmatpush1.msra.mxu0 0.0
    %2062 = vmatprep.subr.mxu0 0.0
    %2063 = vmatpush1.msra.mxu0 0.0
    %2064 = vmatprep.subr.mxu0 0.0
    %2065 = vmatpush1.msra.mxu0 0.0
    %2066 = vmatprep.subr.mxu0 0.0
    %2067 = vmatpush1.msra.mxu0 0.0
    %2068 = vmatprep.subr.mxu0 0.0
    %2069 = vmatpush1.msra.mxu0 0.0
    %2070 = vmatprep.subr.mxu0 0.0
    %2071 = vmatpush1.msra.mxu0 0.0
    %2072 = vmatprep.subr.mxu0 0.0
    %2073 = vmatpush1.msra.mxu0 0.0
    %2074 = vmatprep.subr.mxu0 0.0
    %2075 = vmatpush1.msra.mxu0 0.0
    %2076 = vmatprep.mubr.f32.mxu0 0.0
    %2077 = vmatmul.mubr.f32.gmra.mrb[0].mxu0 %v1867
    %v2078 = vpop.f32.mrb[0].mxu0
    %v2079 = vadd.f32 0.0, %v2078
    %v2080 = vpop.f32.mrb[0].mxu0
    %v2081 = vadd.f32 0.0, %v2080
    %2082 = vdwg.mxu0
    %v2083 = vadd.f32 %v1873, %v2008
    %v2084 = vadd.f32 %v1874, %v2010
    %v2085 = vadd.f32 %v1875, %v2079
    %v2086 = vadd.f32 %v1876, %v2081
    %v2087 = vxor.u32 %v2083, 2147483648
    %v2088 = vmul.f32 %v2087, 1.442695
    %v2089 = vpow.pop %v2088
    %v2090 = vadd.f32 %v2089, 1.0
    %v2091 = vrcp.pop %v2090
    %v2092 = vmul.f32 1.0, %v2091
    %v2093 = vxor.u32 %v2084, 2147483648
    %v2094 = vmul.f32 %v2093, 1.442695
    %v2095 = vpow.pop %v2094
    %v2096 = vadd.f32 %v2095, 1.0
    %v2097 = vrcp.pop %v2096
    %v2098 = vmul.f32 1.0, %v2097
    %v2099 = vtanh.pop %v2085
    %v2100 = vxor.u32 %v2086, 2147483648
    %v2101 = vmul.f32 %v2100, 1.442695
    %v2102 = vpow.pop %v2101
    %v2103 = vadd.f32 %v2102, 1.0
    %v2104 = vrcp.pop %v2103
    %v2105 = vmul.f32 1.0, %v2104
    %v2106 = vmul.f32 %v2098, %v1865
    %v2107 = vmul.f32 %v2092, %v2099
    %v2108 = vadd.f32 %v2106, %v2107
    %v2109 = vtanh.pop %v2108
    %v2110 = vmul.f32 %v2105, %v2109
    %s2111 = scalar_lea.vmem [#allocation3], 48
    %2112 = vst [vmem:[%s2111] sm:$0xff] %v2110
    %s2113 = smul.u32 7, 4
    %s2114 = smul.addr %s2113, 8
    %s2115 = scalar_lea.vmem [#allocation2], %s2114
    %v2116 = vld [vmem:[%s2115] sm:$0xff]
    %v2117 = vld [vmem:[%s2115 + $0x8] sm:$0xff]
    %v2118 = vld [vmem:[%s2115 + $0x10] sm:$0xff]
    %v2119 = vld [vmem:[%s2115 + $0x18] sm:$0xff]
    %v2120 = vld [vmem:[#allocation7] sm:$0xff]
    %v2121 = vld [vmem:[#allocation7 + $0x8] sm:$0xff]
    %v2122 = vld [vmem:[#allocation7 + $0x10] sm:$0xff]
    %v2123 = vld [vmem:[#allocation7 + $0x18] sm:$0xff]
    %v2124 = vld [vmem:[#allocation7 + $0x20] sm:$0xff]
    %v2125 = vld [vmem:[#allocation7 + $0x28] sm:$0xff]
    %v2126 = vld [vmem:[#allocation7 + $0x30] sm:$0xff]
    %v2127 = vld [vmem:[#allocation7 + $0x38] sm:$0xff]
    %v2128 = vld [vmem:[#allocation7 + $0x40] sm:$0xff]
    %v2129 = vld [vmem:[#allocation7 + $0x48] sm:$0xff]
    %v2130 = vld [vmem:[#allocation7 + $0x50] sm:$0xff]
    %v2131 = vld [vmem:[#allocation7 + $0x58] sm:$0xff]
    %v2132 = vld [vmem:[#allocation7 + $0x60] sm:$0xff]
    %v2133 = vld [vmem:[#allocation7 + $0x68] sm:$0xff]
    %v2134 = vld [vmem:[#allocation7 + $0x70] sm:$0xff]
    %v2135 = vld [vmem:[#allocation7 + $0x78] sm:$0xff]
    %v2136 = vld [vmem:[#allocation7 + $0x80] sm:$0xff]
    %v2137 = vld [vmem:[#allocation7 + $0x88] sm:$0xff]
    %v2138 = vld [vmem:[#allocation7 + $0x90] sm:$0xff]
    %v2139 = vld [vmem:[#allocation7 + $0x98] sm:$0xff]
    %v2140 = vld [vmem:[#allocation7 + $0xa0] sm:$0xff]
    %v2141 = vld [vmem:[#allocation7 + $0xa8] sm:$0xff]
    %v2142 = vld [vmem:[#allocation7 + $0xb0] sm:$0xff]
    %v2143 = vld [vmem:[#allocation7 + $0xb8] sm:$0xff]
    %v2144 = vld [vmem:[#allocation7 + $0xc0] sm:$0xff]
    %v2145 = vld [vmem:[#allocation7 + $0xc8] sm:$0xff]
    %v2146 = vld [vmem:[#allocation7 + $0xd0] sm:$0xff]
    %v2147 = vld [vmem:[#allocation7 + $0xd8] sm:$0xff]
    %v2148 = vld [vmem:[#allocation7 + $0xe0] sm:$0xff]
    %v2149 = vld [vmem:[#allocation7 + $0xe8] sm:$0xff]
    %v2150 = vld [vmem:[#allocation7 + $0xf0] sm:$0xff]
    %v2151 = vld [vmem:[#allocation7 + $0xf8] sm:$0xff]
    %v2152 = vld [vmem:[#allocation7 + $0x100] sm:$0xff]
    %v2153 = vld [vmem:[#allocation7 + $0x108] sm:$0xff]
    %v2154 = vld [vmem:[#allocation7 + $0x110] sm:$0xff]
    %v2155 = vld [vmem:[#allocation7 + $0x118] sm:$0xff]
    %v2156 = vld [vmem:[#allocation7 + $0x120] sm:$0xff]
    %v2157 = vld [vmem:[#allocation7 + $0x128] sm:$0xff]
    %v2158 = vld [vmem:[#allocation7 + $0x130] sm:$0xff]
    %v2159 = vld [vmem:[#allocation7 + $0x138] sm:$0xff]
    %v2160 = vld [vmem:[#allocation7 + $0x140] sm:$0xff]
    %v2161 = vld [vmem:[#allocation7 + $0x148] sm:$0xff]
    %v2162 = vld [vmem:[#allocation7 + $0x150] sm:$0xff]
    %v2163 = vld [vmem:[#allocation7 + $0x158] sm:$0xff]
    %v2164 = vld [vmem:[#allocation7 + $0x160] sm:$0xff]
    %v2165 = vld [vmem:[#allocation7 + $0x168] sm:$0xff]
    %v2166 = vld [vmem:[#allocation7 + $0x170] sm:$0xff]
    %v2167 = vld [vmem:[#allocation7 + $0x178] sm:$0xff]
    %v2168 = vld [vmem:[#allocation7 + $0x180] sm:$0xff]
    %v2169 = vld [vmem:[#allocation7 + $0x188] sm:$0xff]
    %v2170 = vld [vmem:[#allocation7 + $0x190] sm:$0xff]
    %v2171 = vld [vmem:[#allocation7 + $0x198] sm:$0xff]
    %v2172 = vld [vmem:[#allocation7 + $0x1a0] sm:$0xff]
    %v2173 = vld [vmem:[#allocation7 + $0x1a8] sm:$0xff]
    %v2174 = vld [vmem:[#allocation7 + $0x1b0] sm:$0xff]
    %v2175 = vld [vmem:[#allocation7 + $0x1b8] sm:$0xff]
    %v2176 = vld [vmem:[#allocation7 + $0x1c0] sm:$0xff]
    %v2177 = vld [vmem:[#allocation7 + $0x1c8] sm:$0xff]
    %v2178 = vld [vmem:[#allocation7 + $0x1d0] sm:$0xff]
    %v2179 = vld [vmem:[#allocation7 + $0x1d8] sm:$0xff]
    %v2180 = vld [vmem:[#allocation7 + $0x1e0] sm:$0xff]
    %v2181 = vld [vmem:[#allocation7 + $0x1e8] sm:$0xff]
    %v2182 = vld [vmem:[#allocation7 + $0x1f0] sm:$0xff]
    %v2183 = vld [vmem:[#allocation7 + $0x1f8] sm:$0xff]
    %2184 = vmatprep.subr.mxu0 %v2121
    %2185 = vmatpush1.msra.mxu0 %v2120
    %2186 = vmatprep.subr.mxu0 %v2125
    %2187 = vmatpush1.msra.mxu0 %v2124
    %2188 = vmatprep.subr.mxu0 %v2129
    %2189 = vmatpush1.msra.mxu0 %v2128
    %2190 = vmatprep.subr.mxu0 %v2133
    %2191 = vmatpush1.msra.mxu0 %v2132
    %2192 = vmatprep.subr.mxu0 %v2137
    %2193 = vmatpush1.msra.mxu0 %v2136
    %2194 = vmatprep.subr.mxu0 %v2141
    %2195 = vmatpush1.msra.mxu0 %v2140
    %2196 = vmatprep.subr.mxu0 %v2145
    %2197 = vmatpush1.msra.mxu0 %v2144
    %2198 = vmatprep.subr.mxu0 %v2149
    %2199 = vmatpush1.msra.mxu0 %v2148
    %2200 = vmatprep.subr.mxu0 %v2153
    %2201 = vmatpush1.msra.mxu0 %v2152
    %2202 = vmatprep.subr.mxu0 %v2157
    %2203 = vmatpush1.msra.mxu0 %v2156
    %2204 = vmatprep.subr.mxu0 %v2161
    %2205 = vmatpush1.msra.mxu0 %v2160
    %2206 = vmatprep.subr.mxu0 %v2165
    %2207 = vmatpush1.msra.mxu0 %v2164
    %2208 = vmatprep.subr.mxu0 %v2169
    %2209 = vmatpush1.msra.mxu0 %v2168
    %2210 = vmatprep.subr.mxu0 %v2173
    %2211 = vmatpush1.msra.mxu0 %v2172
    %2212 = vmatprep.subr.mxu0 %v2177
    %2213 = vmatpush1.msra.mxu0 %v2176
    %2214 = vmatprep.subr.mxu0 %v2181
    %2215 = vmatpush1.msra.mxu0 %v2180
    %2216 = vmatprep.subr.mxu0 0.0
    %2217 = vmatpush1.msra.mxu0 0.0
    %2218 = vmatprep.subr.mxu0 0.0
    %2219 = vmatpush1.msra.mxu0 0.0
    %2220 = vmatprep.subr.mxu0 0.0
    %2221 = vmatpush1.msra.mxu0 0.0
    %2222 = vmatprep.subr.mxu0 0.0
    %2223 = vmatpush1.msra.mxu0 0.0
    %2224 = vmatprep.subr.mxu0 0.0
    %2225 = vmatpush1.msra.mxu0 0.0
    %2226 = vmatprep.subr.mxu0 0.0
    %2227 = vmatpush1.msra.mxu0 0.0
    %2228 = vmatprep.subr.mxu0 0.0
    %2229 = vmatpush1.msra.mxu0 0.0
    %2230 = vmatprep.subr.mxu0 0.0
    %2231 = vmatpush1.msra.mxu0 0.0
    %2232 = vmatprep.subr.mxu0 0.0
    %2233 = vmatpush1.msra.mxu0 0.0
    %2234 = vmatprep.subr.mxu0 0.0
    %2235 = vmatpush1.msra.mxu0 0.0
    %2236 = vmatprep.subr.mxu0 0.0
    %2237 = vmatpush1.msra.mxu0 0.0
    %2238 = vmatprep.subr.mxu0 0.0
    %2239 = vmatpush1.msra.mxu0 0.0
    %2240 = vmatprep.subr.mxu0 0.0
    %2241 = vmatpush1.msra.mxu0 0.0
    %2242 = vmatprep.subr.mxu0 0.0
    %2243 = vmatpush1.msra.mxu0 0.0
    %2244 = vmatprep.subr.mxu0 0.0
    %2245 = vmatpush1.msra.mxu0 0.0
    %2246 = vmatprep.subr.mxu0 0.0
    %2247 = vmatpush1.msra.mxu0 0.0
    %2248 = vmatprep.mubr.f32.mxu0 0.0
    %2249 = vmatmul.mubr.f32.gmra.mrb[0].mxu0 %v2110
    %v2250 = vpop.f32.mrb[0].mxu0
    %v2251 = vadd.f32 0.0, %v2250
    %v2252 = vpop.f32.mrb[0].mxu0
    %v2253 = vadd.f32 0.0, %v2252
    %2254 = vdwg.mxu0
    %2255 = vmatprep.subr.mxu0 %v2123
    %2256 = vmatpush1.msra.mxu0 %v2122
    %2257 = vmatprep.subr.mxu0 %v2127
    %2258 = vmatpush1.msra.mxu0 %v2126
    %2259 = vmatprep.subr.mxu0 %v2131
    %2260 = vmatpush1.msra.mxu0 %v2130
    %2261 = vmatprep.subr.mxu0 %v2135
    %2262 = vmatpush1.msra.mxu0 %v2134
    %2263 = vmatprep.subr.mxu0 %v2139
    %2264 = vmatpush1.msra.mxu0 %v2138
    %2265 = vmatprep.subr.mxu0 %v2143
    %2266 = vmatpush1.msra.mxu0 %v2142
    %2267 = vmatprep.subr.mxu0 %v2147
    %2268 = vmatpush1.msra.mxu0 %v2146
    %2269 = vmatprep.subr.mxu0 %v2151
    %2270 = vmatpush1.msra.mxu0 %v2150
    %2271 = vmatprep.subr.mxu0 %v2155
    %2272 = vmatpush1.msra.mxu0 %v2154
    %2273 = vmatprep.subr.mxu0 %v2159
    %2274 = vmatpush1.msra.mxu0 %v2158
    %2275 = vmatprep.subr.mxu0 %v2163
    %2276 = vmatpush1.msra.mxu0 %v2162
    %2277 = vmatprep.subr.mxu0 %v2167
    %2278 = vmatpush1.msra.mxu0 %v2166
    %2279 = vmatprep.subr.mxu0 %v2171
    %2280 = vmatpush1.msra.mxu0 %v2170
    %2281 = vmatprep.subr.mxu0 %v2175
    %2282 = vmatpush1.msra.mxu0 %v2174
    %2283 = vmatprep.subr.mxu0 %v2179
    %2284 = vmatpush1.msra.mxu0 %v2178
    %2285 = vmatprep.subr.mxu0 %v2183
    %2286 = vmatpush1.msra.mxu0 %v2182
    %2287 = vmatprep.subr.mxu0 0.0
    %2288 = vmatpush1.msra.mxu0 0.0
    %2289 = vmatprep.subr.mxu0 0.0
    %2290 = vmatpush1.msra.mxu0 0.0
    %2291 = vmatprep.subr.mxu0 0.0
    %2292 = vmatpush1.msra.mxu0 0.0
    %2293 = vmatprep.subr.mxu0 0.0
    %2294 = vmatpush1.msra.mxu0 0.0
    %2295 = vmatprep.subr.mxu0 0.0
    %2296 = vmatpush1.msra.mxu0 0.0
    %2297 = vmatprep.subr.mxu0 0.0
    %2298 = vmatpush1.msra.mxu0 0.0
    %2299 = vmatprep.subr.mxu0 0.0
    %2300 = vmatpush1.msra.mxu0 0.0
    %2301 = vmatprep.subr.mxu0 0.0
    %2302 = vmatpush1.msra.mxu0 0.0
    %2303 = vmatprep.subr.mxu0 0.0
    %2304 = vmatpush1.msra.mxu0 0.0
    %2305 = vmatprep.subr.mxu0 0.0
    %2306 = vmatpush1.msra.mxu0 0.0
    %2307 = vmatprep.subr.mxu0 0.0
    %2308 = vmatpush1.msra.mxu0 0.0
    %2309 = vmatprep.subr.mxu0 0.0
    %2310 = vmatpush1.msra.mxu0 0.0
    %2311 = vmatprep.subr.mxu0 0.0
    %2312 = vmatpush1.msra.mxu0 0.0
    %2313 = vmatprep.subr.mxu0 0.0
    %2314 = vmatpush1.msra.mxu0 0.0
    %2315 = vmatprep.subr.mxu0 0.0
    %2316 = vmatpush1.msra.mxu0 0.0
    %2317 = vmatprep.subr.mxu0 0.0
    %2318 = vmatpush1.msra.mxu0 0.0
    %2319 = vmatprep.mubr.f32.mxu0 0.0
    %2320 = vmatmul.mubr.f32.gmra.mrb[0].mxu0 %v2110
    %v2321 = vpop.f32.mrb[0].mxu0
    %v2322 = vadd.f32 0.0, %v2321
    %v2323 = vpop.f32.mrb[0].mxu0
    %v2324 = vadd.f32 0.0, %v2323
    %2325 = vdwg.mxu0
    %v2326 = vadd.f32 %v2116, %v2251
    %v2327 = vadd.f32 %v2117, %v2253
    %v2328 = vadd.f32 %v2118, %v2322
    %v2329 = vadd.f32 %v2119, %v2324
    %v2330 = vxor.u32 %v2326, 2147483648
    %v2331 = vmul.f32 %v2330, 1.442695
    %v2332 = vpow.pop %v2331
    %v2333 = vadd.f32 %v2332, 1.0
    %v2334 = vrcp.pop %v2333
    %v2335 = vmul.f32 1.0, %v2334
    %v2336 = vxor.u32 %v2327, 2147483648
    %v2337 = vmul.f32 %v2336, 1.442695
    %v2338 = vpow.pop %v2337
    %v2339 = vadd.f32 %v2338, 1.0
    %v2340 = vrcp.pop %v2339
    %v2341 = vmul.f32 1.0, %v2340
    %v2342 = vtanh.pop %v2328
    %v2343 = vxor.u32 %v2329, 2147483648
    %v2344 = vmul.f32 %v2343, 1.442695
    %v2345 = vpow.pop %v2344
    %v2346 = vadd.f32 %v2345, 1.0
    %v2347 = vrcp.pop %v2346
    %v2348 = vmul.f32 1.0, %v2347
    %v2349 = vmul.f32 %v2341, %v2108
    %v2350 = vmul.f32 %v2335, %v2342
    %v2351 = vadd.f32 %v2349, %v2350
    %v2352 = vtanh.pop %v2351
    %v2353 = vmul.f32 %v2348, %v2352
    %s2354 = scalar_lea.vmem [#allocation3], 56
    %2355 = vst [vmem:[%s2354] sm:$0xff] %v2353
    %v2356 = vld [vmem:[#allocation3] sm:$0xff]
    %v2357 = vld [vmem:[#allocation3 + $0x8] sm:$0xff]
    %v2358 = vld [vmem:[#allocation3 + $0x10] sm:$0xff]
    %v2359 = vld [vmem:[#allocation3 + $0x18] sm:$0xff]
    %v2360 = vld [vmem:[#allocation3 + $0x20] sm:$0xff]
    %v2361 = vld [vmem:[#allocation3 + $0x28] sm:$0xff]
    %v2362 = vld [vmem:[#allocation3 + $0x30] sm:$0xff]
    %v2363 = vld [vmem:[#allocation3 + $0x38] sm:$0xff]
    %v2364 = vld [vmem:[%s4] sm:$0xff]
    %v2365 = vld [vmem:[%s4 + $0x8] sm:$0xff]
    %v2366 = vld [vmem:[%s4 + $0x10] sm:$0xff]
    %v2367 = vld [vmem:[%s4 + $0x18] sm:$0xff]
    %v2368 = vld [vmem:[%s4 + $0x20] sm:$0xff]
    %v2369 = vld [vmem:[%s4 + $0x28] sm:$0xff]
    %v2370 = vld [vmem:[%s4 + $0x30] sm:$0xff]
    %v2371 = vld [vmem:[%s4 + $0x38] sm:$0xff]
    %v2372 = vld [vmem:[%s4 + $0x40] sm:$0xff]
    %v2373 = vld [vmem:[%s4 + $0x48] sm:$0xff]
    %v2374 = vld [vmem:[%s4 + $0x50] sm:$0xff]
    %v2375 = vld [vmem:[%s4 + $0x58] sm:$0xff]
    %v2376 = vld [vmem:[%s4 + $0x60] sm:$0xff]
    %v2377 = vld [vmem:[%s4 + $0x68] sm:$0xff]
    %v2378 = vld [vmem:[%s4 + $0x70] sm:$0xff]
    %v2379 = vld [vmem:[%s4 + $0x78] sm:$0xff]
    %v2380 = vld [vmem:[%s5] sm:$0x1]
    %v2382 = vlaneseq
    %v2383 = vshrl.u32 %v2382, 7
    %v2384 = vsub.s32 0, %v2383
    %v2385 = vrot.slane %v2380, %v2384
    %2387 = vmatprep.subr.mxu0 0.0
    %2388 = vmatpush1.msra.mxu0 %v2364
    %2389 = vmatprep.subr.mxu0 0.0
    %2390 = vmatpush1.msra.mxu0 %v2365
    %2391 = vmatprep.subr.mxu0 0.0
    %2392 = vmatpush1.msra.mxu0 %v2366
    %2393 = vmatprep.subr.mxu0 0.0
    %2394 = vmatpush1.msra.mxu0 %v2367
    %2395 = vmatprep.subr.mxu0 0.0
    %2396 = vmatpush1.msra.mxu0 %v2368
    %2397 = vmatprep.subr.mxu0 0.0
    %2398 = vmatpush1.msra.mxu0 %v2369
    %2399 = vmatprep.subr.mxu0 0.0
    %2400 = vmatpush1.msra.mxu0 %v2370
    %2401 = vmatprep.subr.mxu0 0.0
    %2402 = vmatpush1.msra.mxu0 %v2371
    %2403 = vmatprep.subr.mxu0 0.0
    %2404 = vmatpush1.msra.mxu0 %v2372
    %2405 = vmatprep.subr.mxu0 0.0
    %2406 = vmatpush1.msra.mxu0 %v2373
    %2407 = vmatprep.subr.mxu0 0.0
    %2408 = vmatpush1.msra.mxu0 %v2374
    %2409 = vmatprep.subr.mxu0 0.0
    %2410 = vmatpush1.msra.mxu0 %v2375
    %2411 = vmatprep.subr.mxu0 0.0
    %2412 = vmatpush1.msra.mxu0 %v2376
    %2413 = vmatprep.subr.mxu0 0.0
    %2414 = vmatpush1.msra.mxu0 %v2377
    %2415 = vmatprep.subr.mxu0 0.0
    %2416 = vmatpush1.msra.mxu0 %v2378
    %2417 = vmatprep.subr.mxu0 0.0
    %2418 = vmatpush1.msra.mxu0 %v2379
    %2419 = vmatprep.subr.mxu0 0.0
    %2420 = vmatpush1.msra.mxu0 0.0
    %2421 = vmatprep.subr.mxu0 0.0
    %2422 = vmatpush1.msra.mxu0 0.0
    %2423 = vmatprep.subr.mxu0 0.0
    %2424 = vmatpush1.msra.mxu0 0.0
    %2425 = vmatprep.subr.mxu0 0.0
    %2426 = vmatpush1.msra.mxu0 0.0
    %2427 = vmatprep.subr.mxu0 0.0
    %2428 = vmatpush1.msra.mxu0 0.0
    %2429 = vmatprep.subr.mxu0 0.0
    %2430 = vmatpush1.msra.mxu0 0.0
    %2431 = vmatprep.subr.mxu0 0.0
    %2432 = vmatpush1.msra.mxu0 0.0
    %2433 = vmatprep.subr.mxu0 0.0
    %2434 = vmatpush1.msra.mxu0 0.0
    %2435 = vmatprep.subr.mxu0 0.0
    %2436 = vmatpush1.msra.mxu0 0.0
    %2437 = vmatprep.subr.mxu0 0.0
    %2438 = vmatpush1.msra.mxu0 0.0
    %2439 = vmatprep.subr.mxu0 0.0
    %2440 = vmatpush1.msra.mxu0 0.0
    %2441 = vmatprep.subr.mxu0 0.0
    %2442 = vmatpush1.msra.mxu0 0.0
    %2443 = vmatprep.subr.mxu0 0.0
    %2444 = vmatpush1.msra.mxu0 0.0
    %2445 = vmatprep.subr.mxu0 0.0
    %2446 = vmatpush1.msra.mxu0 0.0
    %2447 = vmatprep.subr.mxu0 0.0
    %2448 = vmatpush1.msra.mxu0 0.0
    %2449 = vmatprep.subr.mxu0 0.0
    %2450 = vmatpush1.msra.mxu0 0.0
    %2451 = vmatprep.mubr.f32.mxu0 0.0
    %2452 = vmatmul.mubr.f32.gmra.mrb[0].mxu0 %v2356
    %v2453 = vpop.f32.mrb[0].mxu0
    %v2454 = vadd.f32 %v2385, %v2453
    %v2455 = vpop.f32.mrb[0].mxu0
    %2456 = vmatprep.mubr.f32.mxu0 0.0
    %2457 = vmatmul.mubr.f32.gmra.mrb[0].mxu0 %v2357
    %v2458 = vpop.f32.mrb[0].mxu0
    %v2459 = vadd.f32 %v2385, %v2458
    %v2460 = vpop.f32.mrb[0].mxu0
    %2461 = vmatprep.mubr.f32.mxu0 0.0
    %2462 = vmatmul.mubr.f32.gmra.mrb[0].mxu0 %v2358
    %v2463 = vpop.f32.mrb[0].mxu0
    %v2464 = vadd.f32 %v2385, %v2463
    %v2465 = vpop.f32.mrb[0].mxu0
    %2466 = vmatprep.mubr.f32.mxu0 0.0
    %2467 = vmatmul.mubr.f32.gmra.mrb[0].mxu0 %v2359
    %v2468 = vpop.f32.mrb[0].mxu0
    %v2469 = vadd.f32 %v2385, %v2468
    %v2470 = vpop.f32.mrb[0].mxu0
    %2471 = vmatprep.mubr.f32.mxu0 0.0
    %2472 = vmatmul.mubr.f32.gmra.mrb[0].mxu0 %v2360
    %v2473 = vpop.f32.mrb[0].mxu0
    %v2474 = vadd.f32 %v2385, %v2473
    %v2475 = vpop.f32.mrb[0].mxu0
    %2476 = vmatprep.mubr.f32.mxu0 0.0
    %2477 = vmatmul.mubr.f32.gmra.mrb[0].mxu0 %v2361
    %v2478 = vpop.f32.mrb[0].mxu0
    %v2479 = vadd.f32 %v2385, %v2478
    %v2480 = vpop.f32.mrb[0].mxu0
    %2481 = vmatprep.mubr.f32.mxu0 0.0
    %2482 = vmatmul.mubr.f32.gmra.mrb[0].mxu0 %v2362
    %v2483 = vpop.f32.mrb[0].mxu0
    %v2484 = vadd.f32 %v2385, %v2483
    %v2485 = vpop.f32.mrb[0].mxu0
    %2486 = vmatprep.mubr.f32.mxu0 0.0
    %2487 = vmatmul.mubr.f32.gmra.mrb[0].mxu0 %v2363
    %v2488 = vpop.f32.mrb[0].mxu0
    %v2489 = vadd.f32 %v2385, %v2488
    %v2490 = vpop.f32.mrb[0].mxu0
    %2491 = vdwg.mxu0
    %v2492 = vtanh.pop %v2454
    %v2493 = vtanh.pop %v2459
    %v2494 = vtanh.pop %v2464
    %v2495 = vtanh.pop %v2469
    %v2496 = vtanh.pop %v2474
    %v2497 = vtanh.pop %v2479
    %v2498 = vtanh.pop %v2484
    %v2499 = vtanh.pop %v2489
    %v2500 = vld [vmem:[%s6] sm:$0xff]
    %v2501 = vld [vmem:[%s6 + $0x8] sm:$0xff]
    %v2502 = vld [vmem:[%s6 + $0x10] sm:$0xff]
    %v2503 = vld [vmem:[%s6 + $0x18] sm:$0xff]
    %v2504 = vld [vmem:[%s6 + $0x20] sm:$0xff]
    %v2505 = vld [vmem:[%s6 + $0x28] sm:$0xff]
    %v2506 = vld [vmem:[%s6 + $0x30] sm:$0xff]
    %v2507 = vld [vmem:[%s6 + $0x38] sm:$0xff]
    %v2508 = vld [vmem:[%s6 + $0x40] sm:$0xff]
    %v2509 = vld [vmem:[%s6 + $0x48] sm:$0xff]
    %v2510 = vld [vmem:[%s6 + $0x50] sm:$0xff]
    %v2511 = vld [vmem:[%s6 + $0x58] sm:$0xff]
    %v2512 = vld [vmem:[%s6 + $0x60] sm:$0xff]
    %v2513 = vld [vmem:[%s6 + $0x68] sm:$0xff]
    %v2514 = vld [vmem:[%s6 + $0x70] sm:$0xff]
    %v2515 = vld [vmem:[%s6 + $0x78] sm:$0xff]
    %2516 = vmatprep.subr.mxu0 0.0
    %2517 = vmatpush1.msra.mxu0 %v2500
    %2518 = vmatprep.subr.mxu0 0.0
    %2519 = vmatpush1.msra.mxu0 %v2501
    %2520 = vmatprep.subr.mxu0 0.0
    %2521 = vmatpush1.msra.mxu0 %v2502
    %2522 = vmatprep.subr.mxu0 0.0
    %2523 = vmatpush1.msra.mxu0 %v2503
    %2524 = vmatprep.subr.mxu0 0.0
    %2525 = vmatpush1.msra.mxu0 %v2504
    %2526 = vmatprep.subr.mxu0 0.0
    %2527 = vmatpush1.msra.mxu0 %v2505
    %2528 = vmatprep.subr.mxu0 0.0
    %2529 = vmatpush1.msra.mxu0 %v2506
    %2530 = vmatprep.subr.mxu0 0.0
    %2531 = vmatpush1.msra.mxu0 %v2507
    %2532 = vmatprep.subr.mxu0 0.0
    %2533 = vmatpush1.msra.mxu0 %v2508
    %2534 = vmatprep.subr.mxu0 0.0
    %2535 = vmatpush1.msra.mxu0 %v2509
    %2536 = vmatprep.subr.mxu0 0.0
    %2537 = vmatpush1.msra.mxu0 %v2510
    %2538 = vmatprep.subr.mxu0 0.0
    %2539 = vmatpush1.msra.mxu0 %v2511
    %2540 = vmatprep.subr.mxu0 0.0
    %2541 = vmatpush1.msra.mxu0 %v2512
    %2542 = vmatprep.subr.mxu0 0.0
    %2543 = vmatpush1.msra.mxu0 %v2513
    %2544 = vmatprep.subr.mxu0 0.0
    %2545 = vmatpush1.msra.mxu0 %v2514
    %2546 = vmatprep.subr.mxu0 0.0
    %2547 = vmatpush1.msra.mxu0 %v2515
    %2548 = vmatprep.subr.mxu0 0.0
    %2549 = vmatpush1.msra.mxu0 0.0
    %2550 = vmatprep.subr.mxu0 0.0
    %2551 = vmatpush1.msra.mxu0 0.0
    %2552 = vmatprep.subr.mxu0 0.0
    %2553 = vmatpush1.msra.mxu0 0.0
    %2554 = vmatprep.subr.mxu0 0.0
    %2555 = vmatpush1.msra.mxu0 0.0
    %2556 = vmatprep.subr.mxu0 0.0
    %2557 = vmatpush1.msra.mxu0 0.0
    %2558 = vmatprep.subr.mxu0 0.0
    %2559 = vmatpush1.msra.mxu0 0.0
    %2560 = vmatprep.subr.mxu0 0.0
    %2561 = vmatpush1.msra.mxu0 0.0
    %2562 = vmatprep.subr.mxu0 0.0
    %2563 = vmatpush1.msra.mxu0 0.0
    %2564 = vmatprep.subr.mxu0 0.0
    %2565 = vmatpush1.msra.mxu0 0.0
    %2566 = vmatprep.subr.mxu0 0.0
    %2567 = vmatpush1.msra.mxu0 0.0
    %2568 = vmatprep.subr.mxu0 0.0
    %2569 = vmatpush1.msra.mxu0 0.0
    %2570 = vmatprep.subr.mxu0 0.0
    %2571 = vmatpush1.msra.mxu0 0.0
    %2572 = vmatprep.subr.mxu0 0.0
    %2573 = vmatpush1.msra.mxu0 0.0
    %2574 = vmatprep.subr.mxu0 0.0
    %2575 = vmatpush1.msra.mxu0 0.0
    %2576 = vmatprep.subr.mxu0 0.0
    %2577 = vmatpush1.msra.mxu0 0.0
    %2578 = vmatprep.subr.mxu0 0.0
    %2579 = vmatpush1.msra.mxu0 0.0
    %2580 = vmatprep.mubr.f32.mxu0 0.0
    %2581 = vmatmul.mubr.f32.gmra.mrb[0].mxu0 %v2492
    %v2582 = vpop.f32.mrb[0].mxu0
    %v2583 = vadd.f32 0.0, %v2582
    %v2584 = vpop.f32.mrb[0].mxu0
    %2585 = vmatprep.mubr.f32.mxu0 0.0
    %2586 = vmatmul.mubr.f32.gmra.mrb[0].mxu0 %v2493
    %v2587 = vpop.f32.mrb[0].mxu0
    %v2588 = vadd.f32 0.0, %v2587
    %v2589 = vpop.f32.mrb[0].mxu0
    %2590 = vmatprep.mubr.f32.mxu0 0.0
    %2591 = vmatmul.mubr.f32.gmra.mrb[0].mxu0 %v2494
    %v2592 = vpop.f32.mrb[0].mxu0
    %v2593 = vadd.f32 0.0, %v2592
    %v2594 = vpop.f32.mrb[0].mxu0
    %2595 = vmatprep.mubr.f32.mxu0 0.0
    %2596 = vmatmul.mubr.f32.gmra.mrb[0].mxu0 %v2495
    %v2597 = vpop.f32.mrb[0].mxu0
    %v2598 = vadd.f32 0.0, %v2597
    %v2599 = vpop.f32.mrb[0].mxu0
    %2600 = vmatprep.mubr.f32.mxu0 0.0
    %2601 = vmatmul.mubr.f32.gmra.mrb[0].mxu0 %v2496
    %v2602 = vpop.f32.mrb[0].mxu0
    %v2603 = vadd.f32 0.0, %v2602
    %v2604 = vpop.f32.mrb[0].mxu0
    %2605 = vmatprep.mubr.f32.mxu0 0.0
    %2606 = vmatmul.mubr.f32.gmra.mrb[0].mxu0 %v2497
    %v2607 = vpop.f32.mrb[0].mxu0
    %v2608 = vadd.f32 0.0, %v2607
    %v2609 = vpop.f32.mrb[0].mxu0
    %2610 = vmatprep.mubr.f32.mxu0 0.0
    %2611 = vmatmul.mubr.f32.gmra.mrb[0].mxu0 %v2498
    %v2612 = vpop.f32.mrb[0].mxu0
    %v2613 = vadd.f32 0.0, %v2612
    %v2614 = vpop.f32.mrb[0].mxu0
    %2615 = vmatprep.mubr.f32.mxu0 0.0
    %2616 = vmatmul.mubr.f32.gmra.mrb[0].mxu0 %v2499
    %v2617 = vpop.f32.mrb[0].mxu0
    %v2618 = vadd.f32 0.0, %v2617
    %v2619 = vpop.f32.mrb[0].mxu0
    %2620 = vdwg.mxu0
    %v2621 = vld [vmem:[%s7] sm:$0xff]
    %v2622 = vld [vmem:[%s7 + $0x8] sm:$0xff]
    %v2623 = vld [vmem:[%s7 + $0x10] sm:$0xff]
    %v2624 = vld [vmem:[%s7 + $0x18] sm:$0xff]
    %v2625 = vld [vmem:[%s7 + $0x20] sm:$0xff]
    %v2626 = vld [vmem:[%s7 + $0x28] sm:$0xff]
    %v2627 = vld [vmem:[%s7 + $0x30] sm:$0xff]
    %v2628 = vld [vmem:[%s7 + $0x38] sm:$0xff]
    %v2629 = vmul.f32 %v2583, %v2621
    %v2630 = vmul.f32 %v2588, %v2622
    %v2631 = vmul.f32 %v2593, %v2623
    %v2632 = vmul.f32 %v2598, %v2624
    %v2633 = vmul.f32 %v2603, %v2625
    %v2634 = vmul.f32 %v2608, %v2626
    %v2635 = vmul.f32 %v2613, %v2627
    %v2636 = vmul.f32 %v2618, %v2628
    %v2637 = vld [vmem:[%s8] sm:$0xff]
    %v2638 = vmul.f32 %v2629, %v2629
    %v2639 = vmul.f32 %v2630, %v2630
    %v2640 = vmul.f32 %v2631, %v2631
    %v2641 = vmul.f32 %v2632, %v2632
    %v2642 = vmul.f32 %v2633, %v2633
    %v2643 = vmul.f32 %v2634, %v2634
    %v2644 = vmul.f32 %v2635, %v2635
    %v2645 = vmul.f32 %v2636, %v2636
    %vm2646 = vcmask 523264
    %v2648 = vsel %vm2646, %v2637, 0
    %2650 = vmatprep.subr.mxu0 0.0
    %2651 = vmatpush1.msra.mxu0 %v2638
    %2652 = vmatprep.subr.mxu0 0.0
    %2653 = vmatpush1.msra.mxu0 %v2639
    %2654 = vmatprep.subr.mxu0 0.0
    %2655 = vmatpush1.msra.mxu0 %v2640
    %2656 = vmatprep.subr.mxu0 0.0
    %2657 = vmatpush1.msra.mxu0 %v2641
    %2658 = vmatprep.subr.mxu0 0.0
    %2659 = vmatpush1.msra.mxu0 %v2642
    %2660 = vmatprep.subr.mxu0 0.0
    %2661 = vmatpush1.msra.mxu0 %v2643
    %2662 = vmatprep.subr.mxu0 0.0
    %2663 = vmatpush1.msra.mxu0 %v2644
    %2664 = vmatprep.subr.mxu0 0.0
    %2665 = vmatpush1.msra.mxu0 %v2645
    %2666 = vmatprep.subr.mxu0 0.0
    %2667 = vmatpush1.msra.mxu0 0.0
    %2668 = vmatprep.subr.mxu0 0.0
    %2669 = vmatpush1.msra.mxu0 0.0
    %2670 = vmatprep.subr.mxu0 0.0
    %2671 = vmatpush1.msra.mxu0 0.0
    %2672 = vmatprep.subr.mxu0 0.0
    %2673 = vmatpush1.msra.mxu0 0.0
    %2674 = vmatprep.subr.mxu0 0.0
    %2675 = vmatpush1.msra.mxu0 0.0
    %2676 = vmatprep.subr.mxu0 0.0
    %2677 = vmatpush1.msra.mxu0 0.0
    %2678 = vmatprep.subr.mxu0 0.0
    %2679 = vmatpush1.msra.mxu0 0.0
    %2680 = vmatprep.subr.mxu0 0.0
    %2681 = vmatpush1.msra.mxu0 0.0
    %2682 = vmatprep.subr.mxu0 0.0
    %2683 = vmatpush1.msra.mxu0 0.0
    %2684 = vmatprep.subr.mxu0 0.0
    %2685 = vmatpush1.msra.mxu0 0.0
    %2686 = vmatprep.subr.mxu0 0.0
    %2687 = vmatpush1.msra.mxu0 0.0
    %2688 = vmatprep.subr.mxu0 0.0
    %2689 = vmatpush1.msra.mxu0 0.0
    %2690 = vmatprep.subr.mxu0 0.0
    %2691 = vmatpush1.msra.mxu0 0.0
    %2692 = vmatprep.subr.mxu0 0.0
    %2693 = vmatpush1.msra.mxu0 0.0
    %2694 = vmatprep.subr.mxu0 0.0
    %2695 = vmatpush1.msra.mxu0 0.0
    %2696 = vmatprep.subr.mxu0 0.0
    %2697 = vmatpush1.msra.mxu0 0.0
    %2698 = vmatprep.subr.mxu0 0.0
    %2699 = vmatpush1.msra.mxu0 0.0
    %2700 = vmatprep.subr.mxu0 0.0
    %2701 = vmatpush1.msra.mxu0 0.0
    %2702 = vmatprep.subr.mxu0 0.0
    %2703 = vmatpush1.msra.mxu0 0.0
    %2704 = vmatprep.subr.mxu0 0.0
    %2705 = vmatpush1.msra.mxu0 0.0
    %2706 = vmatprep.subr.mxu0 0.0
    %2707 = vmatpush1.msra.mxu0 0.0
    %2708 = vmatprep.subr.mxu0 0.0
    %2709 = vmatpush1.msra.mxu0 0.0
    %2710 = vmatprep.subr.mxu0 0.0
    %2711 = vmatpush1.msra.mxu0 0.0
    %2712 = vmatprep.subr.mxu0 0.0
    %2713 = vmatpush1.msra.mxu0 0.0
    %2714 = vmatprep.mubr.f32.mxu0 0.0
    %2715 = vmatmul.mubr.f32.gmra.mrb[0].mxu0 %v2648
    %v2716 = vpop.f32.mrb[0].mxu0
    %v2717 = vadd.f32 0.0, %v2716
    %v2718 = vpop.f32.mrb[0].mxu0
    %2719 = vdwg.mxu0
    %2721 = vset.pattern.permute.xlu0 0
    %2722 = vperm.xlu0 %2721, %v2629
    %v2723 = vpop.permute.xlu0 %2722
    %2726 = vset.pattern.permute.xlu0 0
    %2727 = vperm.xlu0 %2726, %v2630
    %v2728 = vpop.permute.xlu0 %2727
    %2731 = vset.pattern.permute.xlu0 0
    %2732 = vperm.xlu0 %2731, %v2631
    %v2733 = vpop.permute.xlu0 %2732
    %2736 = vset.pattern.permute.xlu0 0
    %2737 = vperm.xlu0 %2736, %v2632
    %v2738 = vpop.permute.xlu0 %2737
    %2741 = vset.pattern.permute.xlu0 0
    %2742 = vperm.xlu0 %2741, %v2633
    %v2743 = vpop.permute.xlu0 %2742
    %2746 = vset.pattern.permute.xlu0 0
    %2747 = vperm.xlu0 %2746, %v2634
    %v2748 = vpop.permute.xlu0 %2747
    %2751 = vset.pattern.permute.xlu0 0
    %2752 = vperm.xlu0 %2751, %v2635
    %v2753 = vpop.permute.xlu0 %2752
    %2756 = vset.pattern.permute.xlu0 0
    %2757 = vperm.xlu0 %2756, %v2636
    %v2758 = vpop.permute.xlu0 %2757
    %v2760 = vmul.f32 %v2723, %v2356
    %v2761 = vmul.f32 %v2728, %v2357
    %v2762 = vmul.f32 %v2733, %v2358
    %v2763 = vmul.f32 %v2738, %v2359
    %v2764 = vmul.f32 %v2743, %v2360
    %v2765 = vmul.f32 %v2748, %v2361
    %v2766 = vmul.f32 %v2753, %v2362
    %v2767 = vmul.f32 %v2758, %v2363
    %2768 = vmatprep.subr.mxu0 0.0
    %2769 = vmatpush1.msra.mxu0 %v2760
    %2770 = vmatprep.subr.mxu0 0.0
    %2771 = vmatpush1.msra.mxu0 %v2761
    %2772 = vmatprep.subr.mxu0 0.0
    %2773 = vmatpush1.msra.mxu0 %v2762
    %2774 = vmatprep.subr.mxu0 0.0
    %2775 = vmatpush1.msra.mxu0 %v2763
    %2776 = vmatprep.subr.mxu0 0.0
    %2777 = vmatpush1.msra.mxu0 %v2764
    %2778 = vmatprep.subr.mxu0 0.0
    %2779 = vmatpush1.msra.mxu0 %v2765
    %2780 = vmatprep.subr.mxu0 0.0
    %2781 = vmatpush1.msra.mxu0 %v2766
    %2782 = vmatprep.subr.mxu0 0.0
    %2783 = vmatpush1.msra.mxu0 %v2767
    %2784 = vmatprep.subr.mxu0 0.0
    %2785 = vmatpush1.msra.mxu0 0.0
    %2786 = vmatprep.subr.mxu0 0.0
    %2787 = vmatpush1.msra.mxu0 0.0
    %2788 = vmatprep.subr.mxu0 0.0
    %2789 = vmatpush1.msra.mxu0 0.0
    %2790 = vmatprep.subr.mxu0 0.0
    %2791 = vmatpush1.msra.mxu0 0.0
    %2792 = vmatprep.subr.mxu0 0.0
    %2793 = vmatpush1.msra.mxu0 0.0
    %2794 = vmatprep.subr.mxu0 0.0
    %2795 = vmatpush1.msra.mxu0 0.0
    %2796 = vmatprep.subr.mxu0 0.0
    %2797 = vmatpush1.msra.mxu0 0.0
    %2798 = vmatprep.subr.mxu0 0.0
    %2799 = vmatpush1.msra.mxu0 0.0
    %2800 = vmatprep.subr.mxu0 0.0
    %2801 = vmatpush1.msra.mxu0 0.0
    %2802 = vmatprep.subr.mxu0 0.0
    %2803 = vmatpush1.msra.mxu0 0.0
    %2804 = vmatprep.subr.mxu0 0.0
    %2805 = vmatpush1.msra.mxu0 0.0
    %2806 = vmatprep.subr.mxu0 0.0
    %2807 = vmatpush1.msra.mxu0 0.0
    %2808 = vmatprep.subr.mxu0 0.0
    %2809 = vmatpush1.msra.mxu0 0.0
    %2810 = vmatprep.subr.mxu0 0.0
    %2811 = vmatpush1.msra.mxu0 0.0
    %2812 = vmatprep.subr.mxu0 0.0
    %2813 = vmatpush1.msra.mxu0 0.0
    %2814 = vmatprep.subr.mxu0 0.0
    %2815 = vmatpush1.msra.mxu0 0.0
    %2816 = vmatprep.subr.mxu0 0.0
    %2817 = vmatpush1.msra.mxu0 0.0
    %2818 = vmatprep.subr.mxu0 0.0
    %2819 = vmatpush1.msra.mxu0 0.0
    %2820 = vmatprep.subr.mxu0 0.0
    %2821 = vmatpush1.msra.mxu0 0.0
    %2822 = vmatprep.subr.mxu0 0.0
    %2823 = vmatpush1.msra.mxu0 0.0
    %2824 = vmatprep.subr.mxu0 0.0
    %2825 = vmatpush1.msra.mxu0 0.0
    %2826 = vmatprep.subr.mxu0 0.0
    %2827 = vmatpush1.msra.mxu0 0.0
    %2828 = vmatprep.subr.mxu0 0.0
    %2829 = vmatpush1.msra.mxu0 0.0
    %2830 = vmatprep.subr.mxu0 0.0
    %2831 = vmatpush1.msra.mxu0 0.0
    %2832 = vmatprep.mubr.f32.mxu0 0.0
    %2833 = vmatmul.mubr.f32.gmra.mrb[0].mxu0 %v2648
    %v2834 = vpop.f32.mrb[0].mxu0
    %v2835 = vadd.f32 0.0, %v2834
    %v2836 = vpop.f32.mrb[0].mxu0
    %2837 = vdwg.mxu0
    %v2838 = vmax.f32 %v2717, 1e-24
    %v2839 = vrsqrt.pop %v2838
    %2841 = vset.pattern.permute.xlu0 0
    %2842 = vperm.xlu0 %2841, %v2839
    %v2843 = vpop.permute.xlu0 %2842
    %v2845 = vmul.f32 %v2835, %v2843
    %2846 = vst [vmem:[#allocation9] sm:$0xff] %v2845
    // Predicated region
    $region46: #{tpu_custom_call.1} parent=1 // pred_check
      _
    $region47: #{tpu_custom_call.1} parent=1 // pred_check_branch
      %2848 = sbr.rel (0) target = $region49
    $region48: #{tpu_custom_call.1} parent=1 // pred_region
      %s2850 = ssub.s32 128, 128
      %2851 = vsyncadd [#allocation6], %s2850
      %s2853 = sshll.u32 [#allocation9], 4
      %s2854 = int_to_ptr.vmem [resolvable:$true] %s2853
      %2856 = dma.vmem_to_hbm [thread:$0]  %s2854, 128, %s9, [#allocation6]
    $region49: #{tpu_custom_call.1} parent=1 // pred_fallthru
      _
    // Predicated region
    $region50: #{tpu_custom_call.1} parent=1 // pred_check
      _
    $region51: #{tpu_custom_call.1} parent=1 // pred_check_branch
      %2858 = sbr.rel (0) target = $region53
    $region52: #{tpu_custom_call.1} parent=1 // pred_region
      %2859 = dma.done [#allocation6], 128
    $region53: #{tpu_custom_call.1} parent=1 // pred_fallthru
      _
    %2860 = vsyncpa [#allocation5], 1
    %2861 = vsyncpa [#allocation8], 1
    %2862 = vsyncpa [#allocation6], 1

</llo_original>
